<compile_context>
chip_gen: v7x
topology: tpu7x:2x2x1
jax: 0.10.0
libtpu: 0.0.40
codegen_flags: <defaults>
</compile_context>

<pallas_src>
import functools

import jax
import jax.numpy as jnp
from jax import lax
from jax.experimental import pallas as pl
from jax.experimental.pallas import tpu as pltpu


# ----------------------------- tiling helper -------------------------------

def _pick_tile(dim, preferred):
    """Largest divisor of `dim` that is <= preferred (keeps blocks exact)."""
    t = min(dim, preferred)
    while dim % t:
        t -= 1
    return t


# ------------------- fused LayerNorm + matmul (+GELU) ----------------------

def _ln_matmul_kernel(x_ref, g_ref, bln_ref, w_ref, b_ref, o_ref, *,
                      eps, activation):
    x = x_ref[...]                                        # (tm, K) f32
    mu = jnp.mean(x, axis=-1, keepdims=True)
    var = jnp.mean((x - mu) ** 2, axis=-1, keepdims=True)
    h = (x - mu) * lax.rsqrt(var + eps) * g_ref[...] + bln_ref[...]
    y = jnp.dot(h.astype(jnp.bfloat16), w_ref[...].astype(jnp.bfloat16),
                preferred_element_type=jnp.float32) + b_ref[...]
    if activation == "gelu":
        y = jax.nn.gelu(y)                                # f32 elementwise (v5e-safe)
    o_ref[...] = y


def ln_matmul(x, gamma, beta, w, b, activation=None, *, eps=1e-5,
              tm_pref=256, tn_pref=512):
    """LayerNorm(x) @ w + b [+ gelu].  x:(M,K) f32, w:(K,N) bf16, b:(N,) f32."""
    M, K = x.shape
    _, N = w.shape
    tm = _pick_tile(M, tm_pref)
    tn = _pick_tile(N, tn_pref)
    return pl.pallas_call(
        functools.partial(_ln_matmul_kernel, eps=eps, activation=activation),
        out_shape=jax.ShapeDtypeStruct((M, N), jnp.float32),
        grid=(M // tm, N // tn),
        in_specs=[
            pl.BlockSpec((tm, K), lambda i, j: (i, 0)),
            pl.BlockSpec((1, K), lambda i, j: (0, 0)),
            pl.BlockSpec((1, K), lambda i, j: (0, 0)),
            pl.BlockSpec((K, tn), lambda i, j: (0, j)),
            pl.BlockSpec((1, tn), lambda i, j: (0, j)),
        ],
        out_specs=pl.BlockSpec((tm, tn), lambda i, j: (i, j)),
        compiler_params=pltpu.CompilerParams(
            dimension_semantics=("parallel", "parallel")),
    )(x, gamma.reshape(1, K), beta.reshape(1, K), w, b.reshape(1, N))


# -------------- tiled matmul + bias + residual (K accumulation) ------------

def _matmul_res_kernel(x_ref, w_ref, b_ref, r_ref, o_ref, acc_ref):
    @pl.when(pl.program_id(2) == 0)
    def _():
        acc_ref[...] = jnp.zeros_like(acc_ref)
    acc_ref[...] += jnp.dot(x_ref[...].astype(jnp.bfloat16),
                            w_ref[...].astype(jnp.bfloat16),
                            preferred_element_type=jnp.float32)
    @pl.when(pl.program_id(2) == pl.num_programs(2) - 1)
    def _():
        o_ref[...] = acc_ref[...] + b_ref[...] + r_ref[...]


def matmul_residual(x, w, b, residual, *, tm_pref=256, tn_pref=512,
                    tk_pref=512):
    """x @ w + b + residual with (M,N,K) tiling and a VMEM f32 accumulator."""
    M, K = x.shape
    _, N = w.shape
    tm = _pick_tile(M, tm_pref)
    tn = _pick_tile(N, tn_pref)
    tk = _pick_tile(K, tk_pref)
    return pl.pallas_call(
        _matmul_res_kernel,
        out_shape=jax.ShapeDtypeStruct((M, N), jnp.float32),
        grid=(M // tm, N // tn, K // tk),
        in_specs=[
            pl.BlockSpec((tm, tk), lambda i, j, k: (i, k)),
            pl.BlockSpec((tk, tn), lambda i, j, k: (k, j)),
            pl.BlockSpec((1, tn), lambda i, j, k: (0, j)),
            pl.BlockSpec((tm, tn), lambda i, j, k: (i, j)),
        ],
        out_specs=pl.BlockSpec((tm, tn), lambda i, j, k: (i, j)),
        scratch_shapes=[pltpu.VMEM((tm, tn), jnp.float32)],
        compiler_params=pltpu.CompilerParams(
            dimension_semantics=("parallel", "parallel", "arbitrary")),
    )(x, w, b.reshape(1, N), residual)


# ------------------------- multi-head attention ----------------------------

def _attention_kernel(qkv_ref, kb_ref, o_ref, *, n_heads, scale):
    qkv = qkv_ref[0]                                      # (T, 3D) f32
    T, three_d = qkv.shape
    D = three_d // 3
    dh = D // n_heads
    # Split heads in VMEM (no HBM relayout in glue).
    q = qkv[:, 0:D].reshape(T, n_heads, dh).transpose(1, 0, 2)      # (H,T,dh)
    k = qkv[:, D:2 * D].reshape(T, n_heads, dh).transpose(1, 0, 2)
    v = qkv[:, 2 * D:3 * D].reshape(T, n_heads, dh).transpose(1, 0, 2)
    # Scores: batched contraction over dh (no in-kernel K transpose).
    s = jnp.einsum('hqd,hkd->hqk',
                   q.astype(jnp.bfloat16), k.astype(jnp.bfloat16),
                   preferred_element_type=jnp.float32) * scale      # (H,T,T)
    # Causal + key-padding bias built in-kernel.
    row = lax.broadcasted_iota(jnp.int32, (T, T), 0)
    col = lax.broadcasted_iota(jnp.int32, (T, T), 1)
    bias = jnp.where(col <= row, 0.0, -1e9) + kb_ref[0]             # (T,T)
    s = s + bias[None, :, :]
    m = jnp.max(s, axis=-1, keepdims=True)
    p = jnp.exp(s - m)
    p = p * pl.reciprocal(jnp.sum(p, axis=-1, keepdims=True), approx=True)
    o = jnp.einsum('hqk,hkd->hqd',
                   p.astype(jnp.bfloat16), v.astype(jnp.bfloat16),
                   preferred_element_type=jnp.float32)              # (H,T,dh)
    o_ref[0] = o.transpose(1, 0, 2).reshape(T, D).astype(o_ref.dtype)


def attention(qkv, key_bias, n_heads):
    """qkv: (B, T, 3D) f32, key_bias: (B, 1, T) additive f32 -> (B, T, D)."""
    B, T, three_d = qkv.shape
    D = three_d // 3
    dh = D // n_heads
    # TODO(synk): for long sequences, tile keys flash-style with an online
    # softmax instead of loading the full (T, 3D) block per batch element.
    return pl.pallas_call(
        functools.partial(_attention_kernel, n_heads=n_heads,
                          scale=1.0 / (dh ** 0.5)),
        out_shape=jax.ShapeDtypeStruct((B, T, D), jnp.float32),
        grid=(B,),
        in_specs=[
            pl.BlockSpec((1, T, three_d), lambda b: (b, 0, 0)),
            pl.BlockSpec((1, 1, T), lambda b: (b, 0, 0)),
        ],
        out_specs=pl.BlockSpec((1, T, D), lambda b: (b, 0, 0)),
        compiler_params=pltpu.CompilerParams(
            dimension_semantics=("parallel",)),
    )(qkv, key_bias)


# -------------- fused final-LN + LM head + cross-entropy -------------------

def _lm_head_ce_kernel(x_ref, g_ref, bln_ref, w_ref, b_ref, lab_ref,
                       logits_ref, nll_ref, m_sc, l_sc, lbl_sc, *, eps):
    j = pl.program_id(1)

    @pl.when(j == 0)
    def _():
        m_sc[...] = jnp.full_like(m_sc, -jnp.inf)
        l_sc[...] = jnp.zeros_like(l_sc)
        lbl_sc[...] = jnp.zeros_like(lbl_sc)

    x = x_ref[...]                                        # (tm, D) f32
    mu = jnp.mean(x, axis=-1, keepdims=True)
    var = jnp.mean((x - mu) ** 2, axis=-1, keepdims=True)
    h = (x - mu) * lax.rsqrt(var + eps) * g_ref[...] + bln_ref[...]
    logits = jnp.dot(h.astype(jnp.bfloat16), w_ref[...].astype(jnp.bfloat16),
                     preferred_element_type=jnp.float32) + b_ref[...]
    logits_ref[...] = logits                              # returned tile

    # Online logsumexp over the vocab-tile axis.
    m_new = jnp.maximum(m_sc[...], jnp.max(logits, axis=-1, keepdims=True))
    alpha = jnp.exp(m_sc[...] - m_new)
    l_sc[...] = alpha * l_sc[...] + jnp.sum(jnp.exp(logits - m_new),
                                            axis=-1, keepdims=True)
    m_sc[...] = m_new
    # Gather the label logit (the matching column lives in exactly one tile).
    tv = logits.shape[1]
    col = lax.broadcasted_iota(jnp.int32, logits.shape, 1) + j * tv
    lbl_sc[...] += jnp.sum(jnp.where(col == lab_ref[...], logits, 0.0),
                           axis=-1, keepdims=True)

    @pl.when(j == pl.num_programs(1) - 1)
    def _():
        nll_ref[...] = m_sc[...] + jnp.log(l_sc[...]) - lbl_sc[...]


def lm_head_ce(x, gamma, beta, w, b, labels, *, eps=1e-5,
               tm_pref=256, tv_pref=512):
    """Returns (logits (M,V) f32, per-token NLL (M,1) f32)."""
    M, D = x.shape
    _, V = w.shape
    tm = _pick_tile(M, tm_pref)
    tv = _pick_tile(V, tv_pref)
    return pl.pallas_call(
        functools.partial(_lm_head_ce_kernel, eps=eps),
        out_shape=(jax.ShapeDtypeStruct((M, V), jnp.float32),
                   jax.ShapeDtypeStruct((M, 1), jnp.float32)),
        grid=(M // tm, V // tv),
        in_specs=[
            pl.BlockSpec((tm, D), lambda i, j: (i, 0)),
            pl.BlockSpec((1, D), lambda i, j: (0, 0)),
            pl.BlockSpec((1, D), lambda i, j: (0, 0)),
            pl.BlockSpec((D, tv), lambda i, j: (0, j)),
            pl.BlockSpec((1, tv), lambda i, j: (0, j)),
            pl.BlockSpec((tm, 1), lambda i, j: (i, 0)),
        ],
        out_specs=(pl.BlockSpec((tm, tv), lambda i, j: (i, j)),
                   pl.BlockSpec((tm, 1), lambda i, j: (i, 0))),
        scratch_shapes=[pltpu.VMEM((tm, 1), jnp.float32),
                        pltpu.VMEM((tm, 1), jnp.float32),
                        pltpu.VMEM((tm, 1), jnp.float32)],
        compiler_params=pltpu.CompilerParams(
            dimension_semantics=("parallel", "arbitrary")),
    )(x, gamma.reshape(1, D), beta.reshape(1, D), w, b.reshape(1, V), labels)


# ------------------------------ Model (glue) -------------------------------

def init_params(key, *, vocab, d_model, n_heads, n_layers, d_mlp, max_seq):
    keys = jax.random.split(key, 4 + n_layers)
    scale = 0.02

    def norm(k, shape, dtype=jnp.float32):
        return (scale * jax.random.normal(k, shape)).astype(dtype)

    params = {
        "wte": norm(keys[0], (vocab, d_model)),
        "wpe": norm(keys[1], (max_seq, d_model)),
        "lnf_g": jnp.ones((d_model,), jnp.float32),
        "lnf_b": jnp.zeros((d_model,), jnp.float32),
        "lm_head_w": norm(keys[2], (d_model, vocab), jnp.bfloat16),
        "lm_head_b": jnp.zeros((vocab,), jnp.float32),
        "layers": [],
    }
    for l in range(n_layers):
        lk = jax.random.split(keys[4 + l], 4)
        params["layers"].append({
            "ln1_g": jnp.ones((d_model,), jnp.float32),
            "ln1_b": jnp.zeros((d_model,), jnp.float32),
            "qkv_w": norm(lk[0], (d_model, 3 * d_model), jnp.bfloat16),
            "qkv_b": jnp.zeros((3 * d_model,), jnp.float32),
            "proj_w": norm(lk[1], (d_model, d_model), jnp.bfloat16),
            "proj_b": jnp.zeros((d_model,), jnp.float32),
            "ln2_g": jnp.ones((d_model,), jnp.float32),
            "ln2_b": jnp.zeros((d_model,), jnp.float32),
            "fc1_w": norm(lk[2], (d_model, d_mlp), jnp.bfloat16),
            "fc1_b": jnp.zeros((d_mlp,), jnp.float32),
            "fc2_w": norm(lk[3], (d_mlp, d_model), jnp.bfloat16),
            "fc2_b": jnp.zeros((d_model,), jnp.float32),
        })
    return params


def transformer_block(x2, layer, key_bias, *, B, T, n_heads):
    D = x2.shape[-1]
    # fused LN1 + QKV projection
    qkv = ln_matmul(x2, layer["ln1_g"], layer["ln1_b"],
                    layer["qkv_w"], layer["qkv_b"])            # (B*T, 3D)
    # multi-head attention (all heads per grid step, mask built in-kernel)
    attn = attention(qkv.reshape(B, T, 3 * D), key_bias, n_heads)  # (B,T,D)
    # output projection fused with residual add
    x2 = matmul_residual(attn.reshape(B * T, D),
                         layer["proj_w"], layer["proj_b"], x2)
    # fused LN2 + FC1 + GELU, then FC2 fused with residual add
    h = ln_matmul(x2, layer["ln2_g"], layer["ln2_b"],
                  layer["fc1_w"], layer["fc1_b"], activation="gelu")
    x2 = matmul_residual(h, layer["fc2_w"], layer["fc2_b"], x2)
    return x2


def sft_forward(params, input_ids, attention_mask, *, n_heads):
    """Equivalent of SFTModel.forward -> (loss, logits)."""
    B, T = input_ids.shape
    D = params["wte"].shape[1]
    V = params["lm_head_w"].shape[1]

    # Embedding gather stays in XLA glue.
    x = params["wte"][input_ids] + params["wpe"][:T][None, :, :]    # (B,T,D)
    x2 = x.reshape(B * T, D).astype(jnp.float32)

    # Tiny additive key-padding bias (B,1,T); causal part is built in-kernel.
    key_bias = jnp.where(attention_mask > 0, 0.0, -1e9).astype(
        jnp.float32).reshape(B, 1, T)

    for layer in params["layers"]:
        x2 = transformer_block(x2, layer, key_bias, B=B, T=T, n_heads=n_heads)

    # Shifted labels (HF: labels=input_ids, shift inside the model).
    labels = jnp.concatenate(
        [input_ids[:, 1:], jnp.zeros((B, 1), input_ids.dtype)], axis=1)
    labels = labels.reshape(B * T, 1).astype(jnp.int32)

    # Fused final LN + LM head + per-token cross entropy.
    logits_flat, nll = lm_head_ce(x2, params["lnf_g"], params["lnf_b"],
                                  params["lm_head_w"], params["lm_head_b"],
                                  labels)
    logits = logits_flat.reshape(B, T, V)

    # HF mean over the B*(T-1) shifted positions (padding is NOT masked in the
    # loss unless labels == -100, which never happens with labels=input_ids).
    valid = jnp.concatenate(
        [jnp.ones((B, T - 1), jnp.float32), jnp.zeros((B, 1), jnp.float32)],
        axis=1).reshape(B * T, 1)
    loss = jnp.sum(nll * valid) / (B * (T - 1))
    return loss, logits


# --------------------------------- Main ------------------------------------

if __name__ == "__main__":
    VOCAB = 256
    D_MODEL = 128
    N_HEADS = 4
    N_LAYERS = 2
    D_MLP = 256
    B, T = 2, 16

    key = jax.random.PRNGKey(0)
    pkey, ikey = jax.random.split(key)
    params = init_params(pkey, vocab=VOCAB, d_model=D_MODEL, n_heads=N_HEADS,
                         n_layers=N_LAYERS, d_mlp=D_MLP, max_seq=T)

    input_ids = jax.random.randint(ikey, (B, T), 0, VOCAB, dtype=jnp.int32)
    # Second sequence has 3 trailing padding positions.
    attention_mask = jnp.ones((B, T), jnp.int32).at[1, -3:].set(0)

    fwd = jax.jit(functools.partial(sft_forward, n_heads=N_HEADS))
    loss, logits = fwd(params, input_ids, attention_mask)
    jax.block_until_ready((loss, logits))

    assert logits.shape == (B, T, VOCAB)
    assert loss.shape == ()
    assert bool(jnp.isfinite(loss))
    print("KERNEL_OK")
</pallas_src>

<mosaic_0001>
module attributes {stable_mosaic.version = 11 : i64} {
  func.func @_ln_matmul_kernel(%arg0: i32, %arg1: i32, %arg2: memref<32x128xf32, #tpu.memory_space<vmem>>, %arg3: memref<1x128xf32, #tpu.memory_space<vmem>>, %arg4: memref<1x128xf32, #tpu.memory_space<vmem>>, %arg5: memref<128x384xbf16, #tpu.memory_space<vmem>>, %arg6: memref<1x384xf32, #tpu.memory_space<vmem>>, %arg7: memref<32x384xf32, #tpu.memory_space<vmem>>) attributes {dimension_semantics = [#tpu.dimension_semantics<parallel>, #tpu.dimension_semantics<parallel>], iteration_bounds = array<i64: 1, 1>, scalar_prefetch = 0 : i64, scratch_operands = 0 : i64, tpu.core_type = #tpu.core_type<tc>, window_params = [{transform_indices = @transform_0, window_bounds = array<i64: 32, 128>}, {pipeline_mode = #tpu.pipeline_mode<synchronous>, transform_indices = @transform_1, window_bounds = array<i64: 1, 128>}, {pipeline_mode = #tpu.pipeline_mode<synchronous>, transform_indices = @transform_2, window_bounds = array<i64: 1, 128>}, {transform_indices = @transform_3, window_bounds = array<i64: 128, 384>}, {transform_indices = @transform_4, window_bounds = array<i64: 1, 384>}, {transform_indices = @transform_5, window_bounds = array<i64: 32, 384>}]} {
    %c0 = arith.constant 0 : index
    %c0_0 = arith.constant 0 : index
    %0 = vector.load %arg2[%c0, %c0_0] : memref<32x128xf32, #tpu.memory_space<vmem>>, vector<32x128xf32>
    %cst = arith.constant dense<0.000000e+00> : vector<32xf32>
    %1 = vector.multi_reduction <add>, %0, %cst [1] : vector<32x128xf32> to vector<32xf32>
    %2 = vector.shape_cast %1 : vector<32xf32> to vector<32x1xf32>
    %cst_1 = arith.constant 1.280000e+02 : f32
    %3 = vector.broadcast %cst_1 : f32 to vector<32x1xf32>
    %4 = arith.divf %2, %3 : vector<32x1xf32>
    %5 = vector.broadcast %4 : vector<32x1xf32> to vector<32x128xf32>
    %6 = arith.subf %0, %5 : vector<32x128xf32>
    %7 = arith.mulf %6, %6 : vector<32x128xf32>
    %cst_2 = arith.constant dense<0.000000e+00> : vector<32xf32>
    %8 = vector.multi_reduction <add>, %7, %cst_2 [1] : vector<32x128xf32> to vector<32xf32>
    %9 = vector.shape_cast %8 : vector<32xf32> to vector<32x1xf32>
    %cst_3 = arith.constant 1.280000e+02 : f32
    %10 = vector.broadcast %cst_3 : f32 to vector<32x1xf32>
    %11 = arith.divf %9, %10 : vector<32x1xf32>
    %12 = vector.broadcast %4 : vector<32x1xf32> to vector<32x128xf32>
    %13 = arith.subf %0, %12 : vector<32x128xf32>
    %cst_4 = arith.constant 9.99999974E-6 : f32
    %14 = vector.broadcast %cst_4 : f32 to vector<32x1xf32>
    %15 = arith.addf %11, %14 : vector<32x1xf32>
    %16 = math.rsqrt %15 : vector<32x1xf32>
    %17 = vector.broadcast %16 : vector<32x1xf32> to vector<32x128xf32>
    %18 = arith.mulf %13, %17 : vector<32x128xf32>
    %c0_5 = arith.constant 0 : index
    %c0_6 = arith.constant 0 : index
    %19 = vector.load %arg3[%c0_5, %c0_6] : memref<1x128xf32, #tpu.memory_space<vmem>>, vector<1x128xf32>
    %20 = vector.broadcast %19 : vector<1x128xf32> to vector<32x128xf32>
    %21 = arith.mulf %18, %20 : vector<32x128xf32>
    %c0_7 = arith.constant 0 : index
    %c0_8 = arith.constant 0 : index
    %22 = vector.load %arg4[%c0_7, %c0_8] : memref<1x128xf32, #tpu.memory_space<vmem>>, vector<1x128xf32>
    %23 = vector.broadcast %22 : vector<1x128xf32> to vector<32x128xf32>
    %24 = arith.addf %21, %23 : vector<32x128xf32>
    %25 = arith.truncf %24 : vector<32x128xf32> to vector<32x128xbf16>
    %c0_9 = arith.constant 0 : index
    %c0_10 = arith.constant 0 : index
    %26 = vector.load %arg5[%c0_9, %c0_10] : memref<128x384xbf16, #tpu.memory_space<vmem>>, vector<128x384xbf16>
    %cst_11 = arith.constant dense<0.000000e+00> : vector<32x384xf32>
    %27 = tpu.matmul %25, %26, %cst_11 {dimension_numbers = #tpu.dot_dimension_numbers<[1], [0], [0], [1], [0, 0, 1, 1], [], []>} : vector<32x128xbf16>, vector<128x384xbf16>, vector<32x384xf32> -> vector<32x384xf32>
    %c0_12 = arith.constant 0 : index
    %c0_13 = arith.constant 0 : index
    %28 = vector.load %arg6[%c0_12, %c0_13] : memref<1x384xf32, #tpu.memory_space<vmem>>, vector<1x384xf32>
    %29 = vector.broadcast %28 : vector<1x384xf32> to vector<32x384xf32>
    %30 = arith.addf %27, %29 : vector<32x384xf32>
    %c0_14 = arith.constant 0 : index
    %c0_15 = arith.constant 0 : index
    %31 = vector.load %arg7[%c0_14, %c0_15] : memref<32x384xf32, #tpu.memory_space<vmem>>, vector<32x384xf32>
    tpu.vector_store %arg7[%c0_14, %c0_15], %30 {strides = array<i32>} : memref<32x384xf32, #tpu.memory_space<vmem>>, vector<32x384xf32>,
    return
  }
  func.func @transform_0(%arg0: i32, %arg1: i32) -> (i32, i32) {
    %c0_i32 = arith.constant 0 : i32
    %c0_i32_0 = arith.constant 0 : i32
    return %arg0, %c0_i32 : i32, i32
  }
  func.func @transform_1(%arg0: i32, %arg1: i32) -> (i32, i32) {
    %c0_i32 = arith.constant 0 : i32
    %c0_i32_0 = arith.constant 0 : i32
    %c0_i32_1 = arith.constant 0 : i32
    return %c0_i32, %c0_i32_0 : i32, i32
  }
  func.func @transform_2(%arg0: i32, %arg1: i32) -> (i32, i32) {
    %c0_i32 = arith.constant 0 : i32
    %c0_i32_0 = arith.constant 0 : i32
    %c0_i32_1 = arith.constant 0 : i32
    return %c0_i32, %c0_i32_0 : i32, i32
  }
  func.func @transform_3(%arg0: i32, %arg1: i32) -> (i32, i32) {
    %c0_i32 = arith.constant 0 : i32
    %c0_i32_0 = arith.constant 0 : i32
    return %c0_i32, %arg1 : i32, i32
  }
  func.func @transform_4(%arg0: i32, %arg1: i32) -> (i32, i32) {
    %c0_i32 = arith.constant 0 : i32
    %c0_i32_0 = arith.constant 0 : i32
    return %c0_i32, %arg1 : i32, i32
  }
  func.func @transform_5(%arg0: i32, %arg1: i32) -> (i32, i32) {
    %c0_i32 = arith.constant 0 : i32
    return %arg0, %arg1 : i32, i32
  }
}

module attributes {stable_mosaic.version = 11 : i64} {
  func.func @_matmul_res_kernel(%arg0: i32, %arg1: i32, %arg2: i32, %arg3: memref<32x128xf32, #tpu.memory_space<vmem>>, %arg4: memref<128x128xbf16, #tpu.memory_space<vmem>>, %arg5: memref<1x128xf32, #tpu.memory_space<vmem>>, %arg6: memref<32x128xf32, #tpu.memory_space<vmem>>, %arg7: memref<32x128xf32, #tpu.memory_space<vmem>>, %arg8: memref<32x128xf32, #tpu.memory_space<vmem>>) attributes {dimension_semantics = [#tpu.dimension_semantics<parallel>, #tpu.dimension_semantics<parallel>, #tpu.dimension_semantics<arbitrary>], iteration_bounds = array<i64: 1, 1, 1>, scalar_prefetch = 0 : i64, scratch_operands = 1 : i64, tpu.core_type = #tpu.core_type<tc>, window_params = [{transform_indices = @transform_0, window_bounds = array<i64: 32, 128>}, {transform_indices = @transform_1, window_bounds = array<i64: 128, 128>}, {transform_indices = @transform_2, window_bounds = array<i64: 1, 128>}, {transform_indices = @transform_3, window_bounds = array<i64: 32, 128>}, {transform_indices = @transform_4, window_bounds = array<i64: 32, 128>}]} {
    %c0_i32 = arith.constant 0 : i32
    %0 = arith.cmpi eq, %arg2, %c0_i32 : i32
    %1 = arith.extui %0 : i1 to i32
    %c0_i32_0 = arith.constant 0 : i32
    %2 = arith.cmpi ne, %1, %c0_i32_0 : i32
    scf.if %2 {
      %cst_10 = arith.constant 0.000000e+00 : f32
      %13 = vector.broadcast %cst_10 : f32 to vector<32x128xf32>
      %c0_11 = arith.constant 0 : index
      %c0_12 = arith.constant 0 : index
      %14 = vector.load %arg8[%c0_11, %c0_12] : memref<32x128xf32, #tpu.memory_space<vmem>>, vector<32x128xf32>
      tpu.vector_store %arg8[%c0_11, %c0_12], %13 {strides = array<i32>} : memref<32x128xf32, #tpu.memory_space<vmem>>, vector<32x128xf32>,
    } else {
    }
    %c0 = arith.constant 0 : index
    %c0_1 = arith.constant 0 : index
    %3 = vector.load %arg8[%c0, %c0_1] : memref<32x128xf32, #tpu.memory_space<vmem>>, vector<32x128xf32>
    %c0_2 = arith.constant 0 : index
    %c0_3 = arith.constant 0 : index
    %4 = vector.load %arg3[%c0_2, %c0_3] : memref<32x128xf32, #tpu.memory_space<vmem>>, vector<32x128xf32>
    %5 = arith.truncf %4 : vector<32x128xf32> to vector<32x128xbf16>
    %c0_4 = arith.constant 0 : index
    %c0_5 = arith.constant 0 : index
    %6 = vector.load %arg4[%c0_4, %c0_5] : memref<128x128xbf16, #tpu.memory_space<vmem>>, vector<128x128xbf16>
    %cst = arith.constant dense<0.000000e+00> : vector<32x128xf32>
    %7 = tpu.matmul %5, %6, %cst {dimension_numbers = #tpu.dot_dimension_numbers<[1], [0], [0], [1], [0, 0, 1, 1], [], []>} : vector<32x128xbf16>, vector<128x128xbf16>, vector<32x128xf32> -> vector<32x128xf32>
    %8 = arith.addf %3, %7 : vector<32x128xf32>
    %c0_6 = arith.constant 0 : index
    %c0_7 = arith.constant 0 : index
    %9 = vector.load %arg8[%c0_6, %c0_7] : memref<32x128xf32, #tpu.memory_space<vmem>>, vector<32x128xf32>
    tpu.vector_store %arg8[%c0_6, %c0_7], %8 {strides = array<i32>} : memref<32x128xf32, #tpu.memory_space<vmem>>, vector<32x128xf32>,
    %c0_i32_8 = arith.constant 0 : i32
    %10 = arith.cmpi eq, %arg2, %c0_i32_8 : i32
    %11 = arith.extui %10 : i1 to i32
    %c0_i32_9 = arith.constant 0 : i32
    %12 = arith.cmpi ne, %11, %c0_i32_9 : i32
    scf.if %12 {
      %c0_10 = arith.constant 0 : index
      %c0_11 = arith.constant 0 : index
      %13 = vector.load %arg8[%c0_10, %c0_11] : memref<32x128xf32, #tpu.memory_space<vmem>>, vector<32x128xf32>
      %c0_12 = arith.constant 0 : index
      %c0_13 = arith.constant 0 : index
      %14 = vector.load %arg5[%c0_12, %c0_13] : memref<1x128xf32, #tpu.memory_space<vmem>>, vector<1x128xf32>
      %15 = vector.broadcast %14 : vector<1x128xf32> to vector<32x128xf32>
      %16 = arith.addf %13, %15 : vector<32x128xf32>
      %c0_14 = arith.constant 0 : index
      %c0_15 = arith.constant 0 : index
      %17 = vector.load %arg6[%c0_14, %c0_15] : memref<32x128xf32, #tpu.memory_space<vmem>>, vector<32x128xf32>
      %18 = arith.addf %16, %17 : vector<32x128xf32>
      %c0_16 = arith.constant 0 : index
      %c0_17 = arith.constant 0 : index
      %19 = vector.load %arg7[%c0_16, %c0_17] : memref<32x128xf32, #tpu.memory_space<vmem>>, vector<32x128xf32>
      tpu.vector_store %arg7[%c0_16, %c0_17], %18 {strides = array<i32>} : memref<32x128xf32, #tpu.memory_space<vmem>>, vector<32x128xf32>,
    } else {
    }
    return
  }
  func.func @transform_0(%arg0: i32, %arg1: i32, %arg2: i32) -> (i32, i32) {
    %c0_i32 = arith.constant 0 : i32
    return %arg0, %arg2 : i32, i32
  }
  func.func @transform_1(%arg0: i32, %arg1: i32, %arg2: i32) -> (i32, i32) {
    %c0_i32 = arith.constant 0 : i32
    return %arg2, %arg1 : i32, i32
  }
  func.func @transform_2(%arg0: i32, %arg1: i32, %arg2: i32) -> (i32, i32) {
    %c0_i32 = arith.constant 0 : i32
    %c0_i32_0 = arith.constant 0 : i32
    return %c0_i32, %arg1 : i32, i32
  }
  func.func @transform_3(%arg0: i32, %arg1: i32, %arg2: i32) -> (i32, i32) {
    %c0_i32 = arith.constant 0 : i32
    return %arg0, %arg1 : i32, i32
  }
  func.func @transform_4(%arg0: i32, %arg1: i32, %arg2: i32) -> (i32, i32) {
    %c0_i32 = arith.constant 0 : i32
    return %arg0, %arg1 : i32, i32
  }
}

module attributes {stable_mosaic.version = 11 : i64} {
  func.func @_attention_kernel(%arg0: i32, %arg1: memref<1x16x384xf32, #tpu.memory_space<vmem>>, %arg2: memref<1x1x16xf32, #tpu.memory_space<vmem>>, %arg3: memref<1x16x128xf32, #tpu.memory_space<vmem>>) attributes {dimension_semantics = [#tpu.dimension_semantics<parallel>], iteration_bounds = array<i64: 2>, scalar_prefetch = 0 : i64, scratch_operands = 0 : i64, tpu.core_type = #tpu.core_type<tc>, window_params = [{transform_indices = @transform_0, window_bounds = array<i64: 1, 16, 384>}, {transform_indices = @transform_1, window_bounds = array<i64: 1, 1, 16>}, {transform_indices = @transform_2, window_bounds = array<i64: 1, 16, 128>}]} {
    %c0 = arith.constant 0 : index
    %c0_0 = arith.constant 0 : index
    %c0_1 = arith.constant 0 : index
    %0 = vector.load %arg1[%c0, %c0_0, %c0_1] : memref<1x16x384xf32, #tpu.memory_space<vmem>>, vector<1x16x384xf32>
    %1 = vector.shape_cast %0 : vector<1x16x384xf32> to vector<16x384xf32>
    %2 = vector.extract_strided_slice %1 {offsets = [0, 0], sizes = [16, 128], strides = [1, 1]} : vector<16x384xf32> to vector<16x128xf32>
    %3 = vector.shape_cast %2 : vector<16x128xf32> to vector<16x4x32xf32>
    %4 = tpu.transpose %3, [1, 0, 2] : vector<16x4x32xf32> -> vector<4x16x32xf32>
    %5 = vector.extract_strided_slice %1 {offsets = [0, 128], sizes = [16, 128], strides = [1, 1]} : vector<16x384xf32> to vector<16x128xf32>
    %6 = vector.shape_cast %5 : vector<16x128xf32> to vector<16x4x32xf32>
    %7 = tpu.transpose %6, [1, 0, 2] : vector<16x4x32xf32> -> vector<4x16x32xf32>
    %8 = vector.extract_strided_slice %1 {offsets = [0, 256], sizes = [16, 128], strides = [1, 1]} : vector<16x384xf32> to vector<16x128xf32>
    %9 = vector.shape_cast %8 : vector<16x128xf32> to vector<16x4x32xf32>
    %10 = tpu.transpose %9, [1, 0, 2] : vector<16x4x32xf32> -> vector<4x16x32xf32>
    %11 = arith.truncf %4 : vector<4x16x32xf32> to vector<4x16x32xbf16>
    %12 = arith.truncf %7 : vector<4x16x32xf32> to vector<4x16x32xbf16>
    "tpu.trace_start"() <{level = 10 : i32, message = "hqd,hkd->hqk"}> : () -> ()
    %cst = arith.constant dense<0.000000e+00> : vector<4x16x16xf32>
    %13 = tpu.matmul %11, %12, %cst {dimension_numbers = #tpu.dot_dimension_numbers<[2], [2], [1], [1], [0, 0, 0, 1, 1, 1], [0], [0]>} : vector<4x16x32xbf16>, vector<4x16x32xbf16>, vector<4x16x16xf32> -> vector<4x16x16xf32>
    "tpu.trace_stop"() : () -> ()
    %cst_2 = arith.constant 0.176776692 : f32
    %14 = vector.broadcast %cst_2 : f32 to vector<4x16x16xf32>
    %15 = arith.mulf %13, %14 : vector<4x16x16xf32>
    %16 = tpu.iota {dimensions = array<i32: 0>} : vector<16x16xi32>
    %17 = tpu.iota {dimensions = array<i32: 1>} : vector<16x16xi32>
    %18 = arith.cmpi sle, %17, %16 : vector<16x16xi32>
    %cst_3 = arith.constant 0.000000e+00 : f32
    %cst_4 = arith.constant -1.000000e+09 : f32
    %19 = vector.broadcast %cst_3 : f32 to vector<16x16xf32>
    %20 = vector.broadcast %cst_4 : f32 to vector<16x16xf32>
    %21 = arith.select %18, %19, %20 : vector<16x16xi1>, vector<16x16xf32>
    %c0_5 = arith.constant 0 : index
    %c0_6 = arith.constant 0 : index
    %c0_7 = arith.constant 0 : index
    %22 = vector.load %arg2[%c0_5, %c0_6, %c0_7] : memref<1x1x16xf32, #tpu.memory_space<vmem>>, vector<1x1x16xf32>
    %23 = vector.shape_cast %22 : vector<1x1x16xf32> to vector<1x16xf32>
    %24 = vector.broadcast %23 : vector<1x16xf32> to vector<16x16xf32>
    %25 = arith.addf %21, %24 : vector<16x16xf32>
    %26 = vector.shape_cast %25 : vector<16x16xf32> to vector<1x16x16xf32>
    %27 = vector.broadcast %26 : vector<1x16x16xf32> to vector<4x16x16xf32>
    %28 = arith.addf %15, %27 : vector<4x16x16xf32>
    %cst_8 = arith.constant dense<0xFF800000> : vector<4x16xf32>
    %29 = vector.multi_reduction <maximumf>, %28, %cst_8 [2] : vector<4x16x16xf32> to vector<4x16xf32>
    %30 = vector.shape_cast %29 : vector<4x16xf32> to vector<4x16x1xf32>
    %31 = vector.broadcast %30 : vector<4x16x1xf32> to vector<4x16x16xf32>
    %32 = arith.subf %28, %31 : vector<4x16x16xf32>
    %33 = math.exp %32 : vector<4x16x16xf32>
    %cst_9 = arith.constant dense<0.000000e+00> : vector<4x16xf32>
    %34 = vector.multi_reduction <add>, %33, %cst_9 [2] : vector<4x16x16xf32> to vector<4x16xf32>
    %35 = vector.shape_cast %34 : vector<4x16xf32> to vector<4x16x1xf32>
    %36 = tpu.reciprocal %35 {approx = true} : vector<4x16x1xf32> -> vector<4x16x1xf32>
    %37 = vector.broadcast %36 : vector<4x16x1xf32> to vector<4x16x16xf32>
    %38 = arith.mulf %33, %37 : vector<4x16x16xf32>
    %39 = arith.truncf %38 : vector<4x16x16xf32> to vector<4x16x16xbf16>
    %40 = arith.truncf %10 : vector<4x16x32xf32> to vector<4x16x32xbf16>
    "tpu.trace_start"() <{level = 10 : i32, message = "hqk,hkd->hqd"}> : () -> ()
    %cst_10 = arith.constant dense<0.000000e+00> : vector<4x16x32xf32>
    %41 = tpu.matmul %39, %40, %cst_10 {dimension_numbers = #tpu.dot_dimension_numbers<[2], [1], [1], [2], [0, 0, 0, 1, 1, 2], [0], [0]>} : vector<4x16x16xbf16>, vector<4x16x32xbf16>, vector<4x16x32xf32> -> vector<4x16x32xf32>
    "tpu.trace_stop"() : () -> ()
    %42 = tpu.transpose %41, [1, 0, 2] : vector<4x16x32xf32> -> vector<16x4x32xf32>
    %43 = vector.shape_cast %42 : vector<16x4x32xf32> to vector<16x128xf32>
    %c0_11 = arith.constant 0 : index
    %c0_12 = arith.constant 0 : index
    %c0_13 = arith.constant 0 : index
    %44 = vector.load %arg3[%c0_11, %c0_12, %c0_13] : memref<1x16x128xf32, #tpu.memory_space<vmem>>, vector<1x16x128xf32>
    %45 = vector.shape_cast %44 : vector<1x16x128xf32> to vector<16x128xf32>
    %46 = vector.shape_cast %43 : vector<16x128xf32> to vector<1x16x128xf32>
    tpu.vector_store %arg3[%c0_11, %c0_12, %c0_13], %46 {strides = array<i32>} : memref<1x16x128xf32, #tpu.memory_space<vmem>>, vector<1x16x128xf32>,
    return
  }
  func.func @transform_0(%arg0: i32) -> (i32, i32, i32) {
    %c0_i32 = arith.constant 0 : i32
    %c0_i32_0 = arith.constant 0 : i32
    %c0_i32_1 = arith.constant 0 : i32
    return %arg0, %c0_i32, %c0_i32_0 : i32, i32, i32
  }
  func.func @transform_1(%arg0: i32) -> (i32, i32, i32) {
    %c0_i32 = arith.constant 0 : i32
    %c0_i32_0 = arith.constant 0 : i32
    %c0_i32_1 = arith.constant 0 : i32
    return %arg0, %c0_i32, %c0_i32_0 : i32, i32, i32
  }
  func.func @transform_2(%arg0: i32) -> (i32, i32, i32) {
    %c0_i32 = arith.constant 0 : i32
    %c0_i32_0 = arith.constant 0 : i32
    %c0_i32_1 = arith.constant 0 : i32
    return %arg0, %c0_i32, %c0_i32_0 : i32, i32, i32
  }
}

module attributes {stable_mosaic.version = 11 : i64} {
  func.func @_ln_matmul_kernel(%arg0: i32, %arg1: i32, %arg2: memref<32x128xf32, #tpu.memory_space<vmem>>, %arg3: memref<1x128xf32, #tpu.memory_space<vmem>>, %arg4: memref<1x128xf32, #tpu.memory_space<vmem>>, %arg5: memref<128x256xbf16, #tpu.memory_space<vmem>>, %arg6: memref<1x256xf32, #tpu.memory_space<vmem>>, %arg7: memref<32x256xf32, #tpu.memory_space<vmem>>) attributes {dimension_semantics = [#tpu.dimension_semantics<parallel>, #tpu.dimension_semantics<parallel>], iteration_bounds = array<i64: 1, 1>, scalar_prefetch = 0 : i64, scratch_operands = 0 : i64, tpu.core_type = #tpu.core_type<tc>, window_params = [{transform_indices = @transform_0, window_bounds = array<i64: 32, 128>}, {pipeline_mode = #tpu.pipeline_mode<synchronous>, transform_indices = @transform_1, window_bounds = array<i64: 1, 128>}, {pipeline_mode = #tpu.pipeline_mode<synchronous>, transform_indices = @transform_2, window_bounds = array<i64: 1, 128>}, {transform_indices = @transform_3, window_bounds = array<i64: 128, 256>}, {transform_indices = @transform_4, window_bounds = array<i64: 1, 256>}, {transform_indices = @transform_5, window_bounds = array<i64: 32, 256>}]} {
    %c0 = arith.constant 0 : index
    %c0_0 = arith.constant 0 : index
    %0 = vector.load %arg2[%c0, %c0_0] : memref<32x128xf32, #tpu.memory_space<vmem>>, vector<32x128xf32>
    %cst = arith.constant dense<0.000000e+00> : vector<32xf32>
    %1 = vector.multi_reduction <add>, %0, %cst [1] : vector<32x128xf32> to vector<32xf32>
    %2 = vector.shape_cast %1 : vector<32xf32> to vector<32x1xf32>
    %cst_1 = arith.constant 1.280000e+02 : f32
    %3 = vector.broadcast %cst_1 : f32 to vector<32x1xf32>
    %4 = arith.divf %2, %3 : vector<32x1xf32>
    %5 = vector.broadcast %4 : vector<32x1xf32> to vector<32x128xf32>
    %6 = arith.subf %0, %5 : vector<32x128xf32>
    %7 = arith.mulf %6, %6 : vector<32x128xf32>
    %cst_2 = arith.constant dense<0.000000e+00> : vector<32xf32>
    %8 = vector.multi_reduction <add>, %7, %cst_2 [1] : vector<32x128xf32> to vector<32xf32>
    %9 = vector.shape_cast %8 : vector<32xf32> to vector<32x1xf32>
    %cst_3 = arith.constant 1.280000e+02 : f32
    %10 = vector.broadcast %cst_3 : f32 to vector<32x1xf32>
    %11 = arith.divf %9, %10 : vector<32x1xf32>
    %12 = vector.broadcast %4 : vector<32x1xf32> to vector<32x128xf32>
    %13 = arith.subf %0, %12 : vector<32x128xf32>
    %cst_4 = arith.constant 9.99999974E-6 : f32
    %14 = vector.broadcast %cst_4 : f32 to vector<32x1xf32>
    %15 = arith.addf %11, %14 : vector<32x1xf32>
    %16 = math.rsqrt %15 : vector<32x1xf32>
    %17 = vector.broadcast %16 : vector<32x1xf32> to vector<32x128xf32>
    %18 = arith.mulf %13, %17 : vector<32x128xf32>
    %c0_5 = arith.constant 0 : index
    %c0_6 = arith.constant 0 : index
    %19 = vector.load %arg3[%c0_5, %c0_6] : memref<1x128xf32, #tpu.memory_space<vmem>>, vector<1x128xf32>
    %20 = vector.broadcast %19 : vector<1x128xf32> to vector<32x128xf32>
    %21 = arith.mulf %18, %20 : vector<32x128xf32>
    %c0_7 = arith.constant 0 : index
    %c0_8 = arith.constant 0 : index
    %22 = vector.load %arg4[%c0_7, %c0_8] : memref<1x128xf32, #tpu.memory_space<vmem>>, vector<1x128xf32>
    %23 = vector.broadcast %22 : vector<1x128xf32> to vector<32x128xf32>
    %24 = arith.addf %21, %23 : vector<32x128xf32>
    %25 = arith.truncf %24 : vector<32x128xf32> to vector<32x128xbf16>
    %c0_9 = arith.constant 0 : index
    %c0_10 = arith.constant 0 : index
    %26 = vector.load %arg5[%c0_9, %c0_10] : memref<128x256xbf16, #tpu.memory_space<vmem>>, vector<128x256xbf16>
    %cst_11 = arith.constant dense<0.000000e+00> : vector<32x256xf32>
    %27 = tpu.matmul %25, %26, %cst_11 {dimension_numbers = #tpu.dot_dimension_numbers<[1], [0], [0], [1], [0, 0, 1, 1], [], []>} : vector<32x128xbf16>, vector<128x256xbf16>, vector<32x256xf32> -> vector<32x256xf32>
    %c0_12 = arith.constant 0 : index
    %c0_13 = arith.constant 0 : index
    %28 = vector.load %arg6[%c0_12, %c0_13] : memref<1x256xf32, #tpu.memory_space<vmem>>, vector<1x256xf32>
    %29 = vector.broadcast %28 : vector<1x256xf32> to vector<32x256xf32>
    %30 = arith.addf %27, %29 : vector<32x256xf32>
    %31 = arith.mulf %30, %30 : vector<32x256xf32>
    %32 = arith.mulf %30, %31 : vector<32x256xf32>
    %cst_14 = arith.constant 4.471500e-02 : f32
    %33 = vector.broadcast %cst_14 : f32 to vector<32x256xf32>
    %34 = arith.mulf %33, %32 : vector<32x256xf32>
    %35 = arith.addf %30, %34 : vector<32x256xf32>
    %cst_15 = arith.constant 0.797884583 : f32
    %36 = vector.broadcast %cst_15 : f32 to vector<32x256xf32>
    %37 = arith.mulf %36, %35 : vector<32x256xf32>
    %38 = math.tanh %37 : vector<32x256xf32>
    %cst_16 = arith.constant 1.000000e+00 : f32
    %39 = vector.broadcast %cst_16 : f32 to vector<32x256xf32>
    %40 = arith.addf %39, %38 : vector<32x256xf32>
    %cst_17 = arith.constant 5.000000e-01 : f32
    %41 = vector.broadcast %cst_17 : f32 to vector<32x256xf32>
    %42 = arith.mulf %41, %40 : vector<32x256xf32>
    %43 = arith.mulf %30, %42 : vector<32x256xf32>
    %c0_18 = arith.constant 0 : index
    %c0_19 = arith.constant 0 : index
    %44 = vector.load %arg7[%c0_18, %c0_19] : memref<32x256xf32, #tpu.memory_space<vmem>>, vector<32x256xf32>
    tpu.vector_store %arg7[%c0_18, %c0_19], %43 {strides = array<i32>} : memref<32x256xf32, #tpu.memory_space<vmem>>, vector<32x256xf32>,
    return
  }
  func.func @transform_0(%arg0: i32, %arg1: i32) -> (i32, i32) {
    %c0_i32 = arith.constant 0 : i32
    %c0_i32_0 = arith.constant 0 : i32
    return %arg0, %c0_i32 : i32, i32
  }
  func.func @transform_1(%arg0: i32, %arg1: i32) -> (i32, i32) {
    %c0_i32 = arith.constant 0 : i32
    %c0_i32_0 = arith.constant 0 : i32
    %c0_i32_1 = arith.constant 0 : i32
    return %c0_i32, %c0_i32_0 : i32, i32
  }
  func.func @transform_2(%arg0: i32, %arg1: i32) -> (i32, i32) {
    %c0_i32 = arith.constant 0 : i32
    %c0_i32_0 = arith.constant 0 : i32
    %c0_i32_1 = arith.constant 0 : i32
    return %c0_i32, %c0_i32_0 : i32, i32
  }
  func.func @transform_3(%arg0: i32, %arg1: i32) -> (i32, i32) {
    %c0_i32 = arith.constant 0 : i32
    %c0_i32_0 = arith.constant 0 : i32
    return %c0_i32, %arg1 : i32, i32
  }
  func.func @transform_4(%arg0: i32, %arg1: i32) -> (i32, i32) {
    %c0_i32 = arith.constant 0 : i32
    %c0_i32_0 = arith.constant 0 : i32
    return %c0_i32, %arg1 : i32, i32
  }
  func.func @transform_5(%arg0: i32, %arg1: i32) -> (i32, i32) {
    %c0_i32 = arith.constant 0 : i32
    return %arg0, %arg1 : i32, i32
  }
}

module attributes {stable_mosaic.version = 11 : i64} {
  func.func @_matmul_res_kernel(%arg0: i32, %arg1: i32, %arg2: i32, %arg3: memref<32x256xf32, #tpu.memory_space<vmem>>, %arg4: memref<256x128xbf16, #tpu.memory_space<vmem>>, %arg5: memref<1x128xf32, #tpu.memory_space<vmem>>, %arg6: memref<32x128xf32, #tpu.memory_space<vmem>>, %arg7: memref<32x128xf32, #tpu.memory_space<vmem>>, %arg8: memref<32x128xf32, #tpu.memory_space<vmem>>) attributes {dimension_semantics = [#tpu.dimension_semantics<parallel>, #tpu.dimension_semantics<parallel>, #tpu.dimension_semantics<arbitrary>], iteration_bounds = array<i64: 1, 1, 1>, scalar_prefetch = 0 : i64, scratch_operands = 1 : i64, tpu.core_type = #tpu.core_type<tc>, window_params = [{transform_indices = @transform_0, window_bounds = array<i64: 32, 256>}, {transform_indices = @transform_1, window_bounds = array<i64: 256, 128>}, {transform_indices = @transform_2, window_bounds = array<i64: 1, 128>}, {transform_indices = @transform_3, window_bounds = array<i64: 32, 128>}, {transform_indices = @transform_4, window_bounds = array<i64: 32, 128>}]} {
    %c0_i32 = arith.constant 0 : i32
    %0 = arith.cmpi eq, %arg2, %c0_i32 : i32
    %1 = arith.extui %0 : i1 to i32
    %c0_i32_0 = arith.constant 0 : i32
    %2 = arith.cmpi ne, %1, %c0_i32_0 : i32
    scf.if %2 {
      %cst_10 = arith.constant 0.000000e+00 : f32
      %13 = vector.broadcast %cst_10 : f32 to vector<32x128xf32>
      %c0_11 = arith.constant 0 : index
      %c0_12 = arith.constant 0 : index
      %14 = vector.load %arg8[%c0_11, %c0_12] : memref<32x128xf32, #tpu.memory_space<vmem>>, vector<32x128xf32>
      tpu.vector_store %arg8[%c0_11, %c0_12], %13 {strides = array<i32>} : memref<32x128xf32, #tpu.memory_space<vmem>>, vector<32x128xf32>,
    } else {
    }
    %c0 = arith.constant 0 : index
    %c0_1 = arith.constant 0 : index
    %3 = vector.load %arg8[%c0, %c0_1] : memref<32x128xf32, #tpu.memory_space<vmem>>, vector<32x128xf32>
    %c0_2 = arith.constant 0 : index
    %c0_3 = arith.constant 0 : index
    %4 = vector.load %arg3[%c0_2, %c0_3] : memref<32x256xf32, #tpu.memory_space<vmem>>, vector<32x256xf32>
    %5 = arith.truncf %4 : vector<32x256xf32> to vector<32x256xbf16>
    %c0_4 = arith.constant 0 : index
    %c0_5 = arith.constant 0 : index
    %6 = vector.load %arg4[%c0_4, %c0_5] : memref<256x128xbf16, #tpu.memory_space<vmem>>, vector<256x128xbf16>
    %cst = arith.constant dense<0.000000e+00> : vector<32x128xf32>
    %7 = tpu.matmul %5, %6, %cst {dimension_numbers = #tpu.dot_dimension_numbers<[1], [0], [0], [1], [0, 0, 1, 1], [], []>} : vector<32x256xbf16>, vector<256x128xbf16>, vector<32x128xf32> -> vector<32x128xf32>
    %8 = arith.addf %3, %7 : vector<32x128xf32>
    %c0_6 = arith.constant 0 : index
    %c0_7 = arith.constant 0 : index
    %9 = vector.load %arg8[%c0_6, %c0_7] : memref<32x128xf32, #tpu.memory_space<vmem>>, vector<32x128xf32>
    tpu.vector_store %arg8[%c0_6, %c0_7], %8 {strides = array<i32>} : memref<32x128xf32, #tpu.memory_space<vmem>>, vector<32x128xf32>,
    %c0_i32_8 = arith.constant 0 : i32
    %10 = arith.cmpi eq, %arg2, %c0_i32_8 : i32
    %11 = arith.extui %10 : i1 to i32
    %c0_i32_9 = arith.constant 0 : i32
    %12 = arith.cmpi ne, %11, %c0_i32_9 : i32
    scf.if %12 {
      %c0_10 = arith.constant 0 : index
      %c0_11 = arith.constant 0 : index
      %13 = vector.load %arg8[%c0_10, %c0_11] : memref<32x128xf32, #tpu.memory_space<vmem>>, vector<32x128xf32>
      %c0_12 = arith.constant 0 : index
      %c0_13 = arith.constant 0 : index
      %14 = vector.load %arg5[%c0_12, %c0_13] : memref<1x128xf32, #tpu.memory_space<vmem>>, vector<1x128xf32>
      %15 = vector.broadcast %14 : vector<1x128xf32> to vector<32x128xf32>
      %16 = arith.addf %13, %15 : vector<32x128xf32>
      %c0_14 = arith.constant 0 : index
      %c0_15 = arith.constant 0 : index
      %17 = vector.load %arg6[%c0_14, %c0_15] : memref<32x128xf32, #tpu.memory_space<vmem>>, vector<32x128xf32>
      %18 = arith.addf %16, %17 : vector<32x128xf32>
      %c0_16 = arith.constant 0 : index
      %c0_17 = arith.constant 0 : index
      %19 = vector.load %arg7[%c0_16, %c0_17] : memref<32x128xf32, #tpu.memory_space<vmem>>, vector<32x128xf32>
      tpu.vector_store %arg7[%c0_16, %c0_17], %18 {strides = array<i32>} : memref<32x128xf32, #tpu.memory_space<vmem>>, vector<32x128xf32>,
    } else {
    }
    return
  }
  func.func @transform_0(%arg0: i32, %arg1: i32, %arg2: i32) -> (i32, i32) {
    %c0_i32 = arith.constant 0 : i32
    return %arg0, %arg2 : i32, i32
  }
  func.func @transform_1(%arg0: i32, %arg1: i32, %arg2: i32) -> (i32, i32) {
    %c0_i32 = arith.constant 0 : i32
    return %arg2, %arg1 : i32, i32
  }
  func.func @transform_2(%arg0: i32, %arg1: i32, %arg2: i32) -> (i32, i32) {
    %c0_i32 = arith.constant 0 : i32
    %c0_i32_0 = arith.constant 0 : i32
    return %c0_i32, %arg1 : i32, i32
  }
  func.func @transform_3(%arg0: i32, %arg1: i32, %arg2: i32) -> (i32, i32) {
    %c0_i32 = arith.constant 0 : i32
    return %arg0, %arg1 : i32, i32
  }
  func.func @transform_4(%arg0: i32, %arg1: i32, %arg2: i32) -> (i32, i32) {
    %c0_i32 = arith.constant 0 : i32
    return %arg0, %arg1 : i32, i32
  }
}

module attributes {stable_mosaic.version = 11 : i64} {
  func.func @_lm_head_ce_kernel(%arg0: i32, %arg1: i32, %arg2: memref<32x128xf32, #tpu.memory_space<vmem>>, %arg3: memref<1x128xf32, #tpu.memory_space<vmem>>, %arg4: memref<1x128xf32, #tpu.memory_space<vmem>>, %arg5: memref<128x256xbf16, #tpu.memory_space<vmem>>, %arg6: memref<1x256xf32, #tpu.memory_space<vmem>>, %arg7: memref<32x1xi32, #tpu.memory_space<vmem>>, %arg8: memref<32x256xf32, #tpu.memory_space<vmem>>, %arg9: memref<32x1xf32, #tpu.memory_space<vmem>>, %arg10: memref<32x1xf32, #tpu.memory_space<vmem>>, %arg11: memref<32x1xf32, #tpu.memory_space<vmem>>, %arg12: memref<32x1xf32, #tpu.memory_space<vmem>>) attributes {dimension_semantics = [#tpu.dimension_semantics<parallel>, #tpu.dimension_semantics<arbitrary>], iteration_bounds = array<i64: 1, 1>, scalar_prefetch = 0 : i64, scratch_operands = 3 : i64, tpu.core_type = #tpu.core_type<tc>, window_params = [{transform_indices = @transform_0, window_bounds = array<i64: 32, 128>}, {pipeline_mode = #tpu.pipeline_mode<synchronous>, transform_indices = @transform_1, window_bounds = array<i64: 1, 128>}, {pipeline_mode = #tpu.pipeline_mode<synchronous>, transform_indices = @transform_2, window_bounds = array<i64: 1, 128>}, {transform_indices = @transform_3, window_bounds = array<i64: 128, 256>}, {transform_indices = @transform_4, window_bounds = array<i64: 1, 256>}, {transform_indices = @transform_5, window_bounds = array<i64: 32, 1>}, {transform_indices = @transform_6, window_bounds = array<i64: 32, 256>}, {transform_indices = @transform_7, window_bounds = array<i64: 32, 1>}]} {
    %c0_i32 = arith.constant 0 : i32
    %0 = arith.cmpi eq, %arg1, %c0_i32 : i32
    %1 = arith.extui %0 : i1 to i32
    %c0_i32_0 = arith.constant 0 : i32
    %2 = arith.cmpi ne, %1, %c0_i32_0 : i32
    scf.if %2 {
      %cst_39 = arith.constant 0xFF800000 : f32
      %69 = vector.broadcast %cst_39 : f32 to vector<32x1xf32>
      %c0_40 = arith.constant 0 : index
      %c0_41 = arith.constant 0 : index
      %70 = vector.load %arg10[%c0_40, %c0_41] : memref<32x1xf32, #tpu.memory_space<vmem>>, vector<32x1xf32>
      tpu.vector_store %arg10[%c0_40, %c0_41], %69 {strides = array<i32>} : memref<32x1xf32, #tpu.memory_space<vmem>>, vector<32x1xf32>,
      %cst_42 = arith.constant 0.000000e+00 : f32
      %71 = vector.broadcast %cst_42 : f32 to vector<32x1xf32>
      %c0_43 = arith.constant 0 : index
      %c0_44 = arith.constant 0 : index
      %72 = vector.load %arg11[%c0_43, %c0_44] : memref<32x1xf32, #tpu.memory_space<vmem>>, vector<32x1xf32>
      tpu.vector_store %arg11[%c0_43, %c0_44], %71 {strides = array<i32>} : memref<32x1xf32, #tpu.memory_space<vmem>>, vector<32x1xf32>,
      %cst_45 = arith.constant 0.000000e+00 : f32
      %73 = vector.broadcast %cst_45 : f32 to vector<32x1xf32>
      %c0_46 = arith.constant 0 : index
      %c0_47 = arith.constant 0 : index
      %74 = vector.load %arg12[%c0_46, %c0_47] : memref<32x1xf32, #tpu.memory_space<vmem>>, vector<32x1xf32>
      tpu.vector_store %arg12[%c0_46, %c0_47], %73 {strides = array<i32>} : memref<32x1xf32, #tpu.memory_space<vmem>>, vector<32x1xf32>,
    } else {
    }
    %c0 = arith.constant 0 : index
    %c0_1 = arith.constant 0 : index
    %3 = vector.load %arg2[%c0, %c0_1] : memref<32x128xf32, #tpu.memory_space<vmem>>, vector<32x128xf32>
    %cst = arith.constant dense<0.000000e+00> : vector<32xf32>
    %4 = vector.multi_reduction <add>, %3, %cst [1] : vector<32x128xf32> to vector<32xf32>
    %5 = vector.shape_cast %4 : vector<32xf32> to vector<32x1xf32>
    %cst_2 = arith.constant 1.280000e+02 : f32
    %6 = vector.broadcast %cst_2 : f32 to vector<32x1xf32>
    %7 = arith.divf %5, %6 : vector<32x1xf32>
    %8 = vector.broadcast %7 : vector<32x1xf32> to vector<32x128xf32>
    %9 = arith.subf %3, %8 : vector<32x128xf32>
    %10 = arith.mulf %9, %9 : vector<32x128xf32>
    %cst_3 = arith.constant dense<0.000000e+00> : vector<32xf32>
    %11 = vector.multi_reduction <add>, %10, %cst_3 [1] : vector<32x128xf32> to vector<32xf32>
    %12 = vector.shape_cast %11 : vector<32xf32> to vector<32x1xf32>
    %cst_4 = arith.constant 1.280000e+02 : f32
    %13 = vector.broadcast %cst_4 : f32 to vector<32x1xf32>
    %14 = arith.divf %12, %13 : vector<32x1xf32>
    %15 = vector.broadcast %7 : vector<32x1xf32> to vector<32x128xf32>
    %16 = arith.subf %3, %15 : vector<32x128xf32>
    %cst_5 = arith.constant 9.99999974E-6 : f32
    %17 = vector.broadcast %cst_5 : f32 to vector<32x1xf32>
    %18 = arith.addf %14, %17 : vector<32x1xf32>
    %19 = math.rsqrt %18 : vector<32x1xf32>
    %20 = vector.broadcast %19 : vector<32x1xf32> to vector<32x128xf32>
    %21 = arith.mulf %16, %20 : vector<32x128xf32>
    %c0_6 = arith.constant 0 : index
    %c0_7 = arith.constant 0 : index
    %22 = vector.load %arg3[%c0_6, %c0_7] : memref<1x128xf32, #tpu.memory_space<vmem>>, vector<1x128xf32>
    %23 = vector.broadcast %22 : vector<1x128xf32> to vector<32x128xf32>
    %24 = arith.mulf %21, %23 : vector<32x128xf32>
    %c0_8 = arith.constant 0 : index
    %c0_9 = arith.constant 0 : index
    %25 = vector.load %arg4[%c0_8, %c0_9] : memref<1x128xf32, #tpu.memory_space<vmem>>, vector<1x128xf32>
    %26 = vector.broadcast %25 : vector<1x128xf32> to vector<32x128xf32>
    %27 = arith.addf %24, %26 : vector<32x128xf32>
    %28 = arith.truncf %27 : vector<32x128xf32> to vector<32x128xbf16>
    %c0_10 = arith.constant 0 : index
    %c0_11 = arith.constant 0 : index
    %29 = vector.load %arg5[%c0_10, %c0_11] : memref<128x256xbf16, #tpu.memory_space<vmem>>, vector<128x256xbf16>
    %cst_12 = arith.constant dense<0.000000e+00> : vector<32x256xf32>
    %30 = tpu.matmul %28, %29, %cst_12 {dimension_numbers = #tpu.dot_dimension_numbers<[1], [0], [0], [1], [0, 0, 1, 1], [], []>} : vector<32x128xbf16>, vector<128x256xbf16>, vector<32x256xf32> -> vector<32x256xf32>
    %c0_13 = arith.constant 0 : index
    %c0_14 = arith.constant 0 : index
    %31 = vector.load %arg6[%c0_13, %c0_14] : memref<1x256xf32, #tpu.memory_space<vmem>>, vector<1x256xf32>
    %32 = vector.broadcast %31 : vector<1x256xf32> to vector<32x256xf32>
    %33 = arith.addf %30, %32 : vector<32x256xf32>
    %c0_15 = arith.constant 0 : index
    %c0_16 = arith.constant 0 : index
    %34 = vector.load %arg8[%c0_15, %c0_16] : memref<32x256xf32, #tpu.memory_space<vmem>>, vector<32x256xf32>
    tpu.vector_store %arg8[%c0_15, %c0_16], %33 {strides = array<i32>} : memref<32x256xf32, #tpu.memory_space<vmem>>, vector<32x256xf32>,
    %c0_17 = arith.constant 0 : index
    %c0_18 = arith.constant 0 : index
    %35 = vector.load %arg10[%c0_17, %c0_18] : memref<32x1xf32, #tpu.memory_space<vmem>>, vector<32x1xf32>
    %cst_19 = arith.constant dense<0xFF800000> : vector<32xf32>
    %36 = vector.multi_reduction <maximumf>, %33, %cst_19 [1] : vector<32x256xf32> to vector<32xf32>
    %37 = vector.shape_cast %36 : vector<32xf32> to vector<32x1xf32>
    %38 = arith.maximumf %35, %37 : vector<32x1xf32>
    %c0_20 = arith.constant 0 : index
    %c0_21 = arith.constant 0 : index
    %39 = vector.load %arg10[%c0_20, %c0_21] : memref<32x1xf32, #tpu.memory_space<vmem>>, vector<32x1xf32>
    %40 = arith.subf %39, %38 : vector<32x1xf32>
    %41 = math.exp %40 : vector<32x1xf32>
    %c0_22 = arith.constant 0 : index
    %c0_23 = arith.constant 0 : index
    %42 = vector.load %arg11[%c0_22, %c0_23] : memref<32x1xf32, #tpu.memory_space<vmem>>, vector<32x1xf32>
    %43 = arith.mulf %41, %42 : vector<32x1xf32>
    %44 = vector.broadcast %38 : vector<32x1xf32> to vector<32x256xf32>
    %45 = arith.subf %33, %44 : vector<32x256xf32>
    %46 = math.exp %45 : vector<32x256xf32>
    %cst_24 = arith.constant dense<0.000000e+00> : vector<32xf32>
    %47 = vector.multi_reduction <add>, %46, %cst_24 [1] : vector<32x256xf32> to vector<32xf32>
    %48 = vector.shape_cast %47 : vector<32xf32> to vector<32x1xf32>
    %49 = arith.addf %43, %48 : vector<32x1xf32>
    %c0_25 = arith.constant 0 : index
    %c0_26 = arith.constant 0 : index
    %50 = vector.load %arg11[%c0_25, %c0_26] : memref<32x1xf32, #tpu.memory_space<vmem>>, vector<32x1xf32>
    tpu.vector_store %arg11[%c0_25, %c0_26], %49 {strides = array<i32>} : memref<32x1xf32, #tpu.memory_space<vmem>>, vector<32x1xf32>,
    %c0_27 = arith.constant 0 : index
    %c0_28 = arith.constant 0 : index
    %51 = vector.load %arg10[%c0_27, %c0_28] : memref<32x1xf32, #tpu.memory_space<vmem>>, vector<32x1xf32>
    tpu.vector_store %arg10[%c0_27, %c0_28], %38 {strides = array<i32>} : memref<32x1xf32, #tpu.memory_space<vmem>>, vector<32x1xf32>,
    %52 = tpu.iota {dimensions = array<i32: 1>} : vector<32x256xi32>
    %c256_i32 = arith.constant 256 : i32
    %53 = arith.muli %arg1, %c256_i32 : i32
    %54 = vector.broadcast %53 : i32 to vector<32x256xi32>
    %55 = arith.addi %52, %54 : vector<32x256xi32>
    %c0_29 = arith.constant 0 : index
    %c0_30 = arith.constant 0 : index
    %56 = vector.load %arg12[%c0_29, %c0_30] : memref<32x1xf32, #tpu.memory_space<vmem>>, vector<32x1xf32>
    %c0_31 = arith.constant 0 : index
    %c0_32 = arith.constant 0 : index
    %57 = vector.load %arg7[%c0_31, %c0_32] : memref<32x1xi32, #tpu.memory_space<vmem>>, vector<32x1xi32>
    %58 = vector.broadcast %57 : vector<32x1xi32> to vector<32x256xi32>
    %59 = arith.cmpi eq, %55, %58 : vector<32x256xi32>
    %cst_33 = arith.constant 0.000000e+00 : f32
    %60 = vector.broadcast %cst_33 : f32 to vector<32x256xf32>
    %61 = arith.select %59, %33, %60 : vector<32x256xi1>, vector<32x256xf32>
    %cst_34 = arith.constant dense<0.000000e+00> : vector<32xf32>
    %62 = vector.multi_reduction <add>, %61, %cst_34 [1] : vector<32x256xf32> to vector<32xf32>
    %63 = vector.shape_cast %62 : vector<32xf32> to vector<32x1xf32>
    %64 = arith.addf %56, %63 : vector<32x1xf32>
    %c0_35 = arith.constant 0 : index
    %c0_36 = arith.constant 0 : index
    %65 = vector.load %arg12[%c0_35, %c0_36] : memref<32x1xf32, #tpu.memory_space<vmem>>, vector<32x1xf32>
    tpu.vector_store %arg12[%c0_35, %c0_36], %64 {strides = array<i32>} : memref<32x1xf32, #tpu.memory_space<vmem>>, vector<32x1xf32>,
    %c0_i32_37 = arith.constant 0 : i32
    %66 = arith.cmpi eq, %arg1, %c0_i32_37 : i32
    %67 = arith.extui %66 : i1 to i32
    %c0_i32_38 = arith.constant 0 : i32
    %68 = arith.cmpi ne, %67, %c0_i32_38 : i32
    scf.if %68 {
      %c0_39 = arith.constant 0 : index
      %c0_40 = arith.constant 0 : index
      %69 = vector.load %arg10[%c0_39, %c0_40] : memref<32x1xf32, #tpu.memory_space<vmem>>, vector<32x1xf32>
      %c0_41 = arith.constant 0 : index
      %c0_42 = arith.constant 0 : index
      %70 = vector.load %arg11[%c0_41, %c0_42] : memref<32x1xf32, #tpu.memory_space<vmem>>, vector<32x1xf32>
      %71 = math.log %70 : vector<32x1xf32>
      %72 = arith.addf %69, %71 : vector<32x1xf32>
      %c0_43 = arith.constant 0 : index
      %c0_44 = arith.constant 0 : index
      %73 = vector.load %arg12[%c0_43, %c0_44] : memref<32x1xf32, #tpu.memory_space<vmem>>, vector<32x1xf32>
      %74 = arith.subf %72, %73 : vector<32x1xf32>
      %c0_45 = arith.constant 0 : index
      %c0_46 = arith.constant 0 : index
      %75 = vector.load %arg9[%c0_45, %c0_46] : memref<32x1xf32, #tpu.memory_space<vmem>>, vector<32x1xf32>
      tpu.vector_store %arg9[%c0_45, %c0_46], %74 {strides = array<i32>} : memref<32x1xf32, #tpu.memory_space<vmem>>, vector<32x1xf32>,
    } else {
    }
    return
  }
  func.func @transform_0(%arg0: i32, %arg1: i32) -> (i32, i32) {
    %c0_i32 = arith.constant 0 : i32
    %c0_i32_0 = arith.constant 0 : i32
    return %arg0, %c0_i32 : i32, i32
  }
  func.func @transform_1(%arg0: i32, %arg1: i32) -> (i32, i32) {
    %c0_i32 = arith.constant 0 : i32
    %c0_i32_0 = arith.constant 0 : i32
    %c0_i32_1 = arith.constant 0 : i32
    return %c0_i32, %c0_i32_0 : i32, i32
  }
  func.func @transform_2(%arg0: i32, %arg1: i32) -> (i32, i32) {
    %c0_i32 = arith.constant 0 : i32
    %c0_i32_0 = arith.constant 0 : i32
    %c0_i32_1 = arith.constant 0 : i32
    return %c0_i32, %c0_i32_0 : i32, i32
  }
  func.func @transform_3(%arg0: i32, %arg1: i32) -> (i32, i32) {
    %c0_i32 = arith.constant 0 : i32
    %c0_i32_0 = arith.constant 0 : i32
    return %c0_i32, %arg1 : i32, i32
  }
  func.func @transform_4(%arg0: i32, %arg1: i32) -> (i32, i32) {
    %c0_i32 = arith.constant 0 : i32
    %c0_i32_0 = arith.constant 0 : i32
    return %c0_i32, %arg1 : i32, i32
  }
  func.func @transform_5(%arg0: i32, %arg1: i32) -> (i32, i32) {
    %c0_i32 = arith.constant 0 : i32
    %c0_i32_0 = arith.constant 0 : i32
    return %arg0, %c0_i32 : i32, i32
  }
  func.func @transform_6(%arg0: i32, %arg1: i32) -> (i32, i32) {
    %c0_i32 = arith.constant 0 : i32
    return %arg0, %arg1 : i32, i32
  }
  func.func @transform_7(%arg0: i32, %arg1: i32) -> (i32, i32) {
    %c0_i32 = arith.constant 0 : i32
    %c0_i32_0 = arith.constant 0 : i32
    return %arg0, %c0_i32 : i32, i32
  }
}

</mosaic_0001>

<llo_original>
// kernel: sft_forward.13
$region0: #{sft_forward.13}
  #allocation0 [shape = 'u32[]', space=smem, size = 0x4, offset = 0x4, fixed_abs, tag = 'smem constant byte address 0x4 - core index']
  #allocation1 [shape = 'u32[144,128]{1,0:T(1,128)}', space=vmem, size = 0x12000, scoped, tag = 'internal scratch']
  #allocation2 [shape = 'f32[32,128]{1,0:T(8,128)}', space=vmem, size = 0x4000, scoped, tag = 'scratch operand']
  %s0 = inlined_call_operand.vmem [shape: f32[32,128], index: 0, kind: input, shape index: {}]
  %s1 = inlined_call_operand.vmem [shape: bf16[128,128], index: 1, kind: input, shape index: {}]
  %s2 = inlined_call_operand.vmem [shape: f32[1,128], index: 2, kind: input, shape index: {}]
  %s3 = inlined_call_operand.vmem [shape: f32[32,128], index: 3, kind: input, shape index: {}]
  %s4 = inlined_call_operand.vmem [shape: f32[32,128], index: 4, kind: output, shape index: {}]
  %s5 = sld [smem:[#allocation0]]
  $region34: #{sft_forward.13} parent=0
    _
  %s7 = ssub.s32 1, %s5
  %s8 = scalar_select 0, %s7, %s5
  // Predicated region
  $region2: #{sft_forward.13} parent=0 // pred_check
    _
  $region3: #{sft_forward.13} parent=0 // pred_check_branch
    %10 = sbr.rel (0) target = $region5
  $region4: #{sft_forward.13} parent=0 // pred_region
    _
  $region5: #{sft_forward.13} parent=0 // pred_fallthru
    _
  // Predicated region
  $region6: #{sft_forward.13} parent=0 // pred_check
    _
  $region7: #{sft_forward.13} parent=0 // pred_check_branch
    %12 = sbr.rel (0) target = $region9
  $region8: #{sft_forward.13} parent=0 // pred_region
    _
  $region9: #{sft_forward.13} parent=0 // pred_fallthru
    _
  // Predicated region
  $region10: #{sft_forward.13} parent=0 // pred_check
    _
  $region11: #{sft_forward.13} parent=0 // pred_check_branch
    %14 = sbr.rel (0) target = $region13
  $region12: #{sft_forward.13} parent=0 // pred_region
    _
  $region13: #{sft_forward.13} parent=0 // pred_fallthru
    _
  // Predicated region
  $region14: #{sft_forward.13} parent=0 // pred_check
    _
  $region15: #{sft_forward.13} parent=0 // pred_check_branch
    %16 = sbr.rel (0) target = $region17
  $region16: #{sft_forward.13} parent=0 // pred_region
    _
  $region17: #{sft_forward.13} parent=0 // pred_fallthru
    _
  %p18 = scmp.eq.s32.totalorder 0, 0
  // Predicated region
  $region18: #{sft_forward.13} parent=0 // pred_check
    %p19 = pneg %p18
  $region19: #{sft_forward.13} parent=0 // pred_check_branch
    %21 = sbr.rel (%p19) target = $region21
  $region20: #{sft_forward.13} parent=0 // pred_region
    %22 = vst [vmem:[#allocation2] sm:$0xff] 0.0
    %23 = vst [vmem:[#allocation2 + $0x8] sm:$0xff] 0.0
    %24 = vst [vmem:[#allocation2 + $0x10] sm:$0xff] 0.0
    %25 = vst [vmem:[#allocation2 + $0x18] sm:$0xff] 0.0
  $region21: #{sft_forward.13} parent=0 // pred_fallthru
    _
  %v26 = vld [vmem:[#allocation2] sm:$0xff]
  %v27 = vld [vmem:[#allocation2 + $0x8] sm:$0xff]
  %v28 = vld [vmem:[#allocation2 + $0x10] sm:$0xff]
  %v29 = vld [vmem:[#allocation2 + $0x18] sm:$0xff]
  %v30 = vld [vmem:[%s0] sm:$0xff]
  %v31 = vld [vmem:[%s0 + $0x8] sm:$0xff]
  %v32 = vld [vmem:[%s0 + $0x10] sm:$0xff]
  %v33 = vld [vmem:[%s0 + $0x18] sm:$0xff]
  %v34 = vpack.c.bf16 %v31, %v30
  %v35 = vpack.c.bf16 %v33, %v32
  %v36 = vld [vmem:[%s1] sm:$0xf]
  %v37 = vld [vmem:[%s1 + $0x4] sm:$0xf]
  %v38 = vld [vmem:[%s1 + $0x8] sm:$0xf]
  %v39 = vld [vmem:[%s1 + $0xc] sm:$0xf]
  %v40 = vld [vmem:[%s1 + $0x10] sm:$0xf]
  %v41 = vld [vmem:[%s1 + $0x14] sm:$0xf]
  %v42 = vld [vmem:[%s1 + $0x18] sm:$0xf]
  %v43 = vld [vmem:[%s1 + $0x1c] sm:$0xf]
  %v44 = vld [vmem:[%s1 + $0x20] sm:$0xf]
  %v45 = vld [vmem:[%s1 + $0x24] sm:$0xf]
  %v46 = vld [vmem:[%s1 + $0x28] sm:$0xf]
  %v47 = vld [vmem:[%s1 + $0x2c] sm:$0xf]
  %v48 = vld [vmem:[%s1 + $0x30] sm:$0xf]
  %v49 = vld [vmem:[%s1 + $0x34] sm:$0xf]
  %v50 = vld [vmem:[%s1 + $0x38] sm:$0xf]
  %v51 = vld [vmem:[%s1 + $0x3c] sm:$0xf]
  %v68 = vunpack.c.l.b16 %v36
  %v69 = vunpack.c.l.b16 %v37
  %v70 = vunpack.c.l.b16 %v38
  %v71 = vunpack.c.l.b16 %v39
  %v72 = vunpack.c.l.b16 %v40
  %v73 = vunpack.c.l.b16 %v41
  %v74 = vunpack.c.l.b16 %v42
  %v75 = vunpack.c.l.b16 %v43
  %v76 = vunpack.c.l.b16 %v44
  %v77 = vunpack.c.l.b16 %v45
  %v78 = vunpack.c.l.b16 %v46
  %v79 = vunpack.c.l.b16 %v47
  %v80 = vunpack.c.l.b16 %v48
  %v81 = vunpack.c.l.b16 %v49
  %v82 = vunpack.c.l.b16 %v50
  %v83 = vunpack.c.l.b16 %v51
  %v84 = vpack.c.b16 %v69, %v68
  %v85 = vpack.c.b16 %v71, %v70
  %v86 = vpack.c.b16 %v73, %v72
  %v87 = vpack.c.b16 %v75, %v74
  %v88 = vpack.c.b16 %v77, %v76
  %v89 = vpack.c.b16 %v79, %v78
  %v90 = vpack.c.b16 %v81, %v80
  %v91 = vpack.c.b16 %v83, %v82
  %100 = vmatprep.subr.bf16.mxu0 0
  %101 = vmatpush1.bf16.msra.mxu0 %v84
  %102 = vmatprep.subr.bf16.mxu0 0
  %103 = vmatpush1.bf16.msra.mxu0 %v85
  %104 = vmatprep.subr.bf16.mxu0 0
  %105 = vmatpush1.bf16.msra.mxu0 %v86
  %106 = vmatprep.subr.bf16.mxu0 0
  %107 = vmatpush1.bf16.msra.mxu0 %v87
  %108 = vmatprep.subr.bf16.mxu0 0
  %109 = vmatpush1.bf16.msra.mxu0 %v88
  %110 = vmatprep.subr.bf16.mxu0 0
  %111 = vmatpush1.bf16.msra.mxu0 %v89
  %112 = vmatprep.subr.bf16.mxu0 0
  %113 = vmatpush1.bf16.msra.mxu0 %v90
  %114 = vmatprep.subr.bf16.mxu0 0
  %115 = vmatpush1.bf16.msra.mxu0 %v91
  %116 = vmatprep.subr.bf16.mxu0 0
  %117 = vmatpush1.bf16.msra.mxu0 0
  %118 = vmatprep.subr.bf16.mxu0 0
  %119 = vmatpush1.bf16.msra.mxu0 0
  %120 = vmatprep.subr.bf16.mxu0 0
  %121 = vmatpush1.bf16.msra.mxu0 0
  %122 = vmatprep.subr.bf16.mxu0 0
  %123 = vmatpush1.bf16.msra.mxu0 0
  %124 = vmatprep.subr.bf16.mxu0 0
  %125 = vmatpush1.bf16.msra.mxu0 0
  %126 = vmatprep.subr.bf16.mxu0 0
  %127 = vmatpush1.bf16.msra.mxu0 0
  %128 = vmatprep.subr.bf16.mxu0 0
  %129 = vmatpush1.bf16.msra.mxu0 0
  %130 = vmatprep.subr.bf16.mxu0 0
  %131 = vmatpush1.bf16.msra.mxu0 0
  %132 = vmatprep.mubr.bf16.mxu0 0
  %133 = vmatmul.mubr.bf16.gmra.mrb[0].mxu0 %v34
  %v134 = vpop.f32.mrb[0].mxu0
  %v135 = vadd.f32 0.0, %v134
  %v136 = vpop.f32.mrb[0].mxu0
  %v137 = vpop.f32.mrb[0].mxu0
  %v138 = vadd.f32 0.0, %v137
  %v139 = vpop.f32.mrb[0].mxu0
  %140 = vmatprep.mubr.bf16.mxu0 0
  %141 = vmatmul.mubr.bf16.gmra.mrb[0].mxu0 %v35
  %v142 = vpop.f32.mrb[0].mxu0
  %v143 = vadd.f32 0.0, %v142
  %v144 = vpop.f32.mrb[0].mxu0
  %v145 = vpop.f32.mrb[0].mxu0
  %v146 = vadd.f32 0.0, %v145
  %v147 = vpop.f32.mrb[0].mxu0
  %148 = vdwg.mxu0
  %v149 = vadd.f32 %v26, %v135
  %v150 = vadd.f32 %v27, %v138
  %v151 = vadd.f32 %v28, %v143
  %v152 = vadd.f32 %v29, %v146
  %153 = vst [vmem:[#allocation2] sm:$0xff] %v149
  %154 = vst [vmem:[#allocation2 + $0x8] sm:$0xff] %v150
  %155 = vst [vmem:[#allocation2 + $0x10] sm:$0xff] %v151
  %156 = vst [vmem:[#allocation2 + $0x18] sm:$0xff] %v152
  // Predicated region
  $region22: #{sft_forward.13} parent=0 // pred_check
    %p157 = pneg %p18
  $region23: #{sft_forward.13} parent=0 // pred_check_branch
    %159 = sbr.rel (%p157) target = $region25
  $region24: #{sft_forward.13} parent=0 // pred_region
    %v160 = vld [vmem:[#allocation2] sm:$0xff]
    %v161 = vld [vmem:[#allocation2 + $0x8] sm:$0xff]
    %v162 = vld [vmem:[#allocation2 + $0x10] sm:$0xff]
    %v163 = vld [vmem:[#allocation2 + $0x18] sm:$0xff]
    %v164 = vld [vmem:[%s2] sm:$0x1]
    %v166 = vlaneseq
    %v167 = vshrl.u32 %v166, 7
    %v168 = vsub.s32 0, %v167
    %v169 = vrot.slane %v164, %v168
    %v171 = vadd.f32 %v160, %v169
    %v172 = vadd.f32 %v161, %v169
    %v173 = vadd.f32 %v162, %v169
    %v174 = vadd.f32 %v163, %v169
    %v175 = vld [vmem:[%s3] sm:$0xff]
    %v176 = vld [vmem:[%s3 + $0x8] sm:$0xff]
    %v177 = vld [vmem:[%s3 + $0x10] sm:$0xff]
    %v178 = vld [vmem:[%s3 + $0x18] sm:$0xff]
    %v179 = vadd.f32 %v171, %v175
    %v180 = vadd.f32 %v172, %v176
    %v181 = vadd.f32 %v173, %v177
    %v182 = vadd.f32 %v174, %v178
    %183 = vst [vmem:[%s4] sm:$0xff] %v179
    %184 = vst [vmem:[%s4 + $0x8] sm:$0xff] %v180
    %185 = vst [vmem:[%s4 + $0x10] sm:$0xff] %v181
    %186 = vst [vmem:[%s4 + $0x18] sm:$0xff] %v182
  $region25: #{sft_forward.13} parent=0 // pred_fallthru
    _
  // Predicated region
  $region26: #{sft_forward.13} parent=0 // pred_check
    _
  $region27: #{sft_forward.13} parent=0 // pred_check_branch
    %188 = sbr.rel (0) target = $region29
  $region28: #{sft_forward.13} parent=0 // pred_region
    _
  $region29: #{sft_forward.13} parent=0 // pred_fallthru
    _
  // Predicated region
  $region30: #{sft_forward.13} parent=0 // pred_check
    _
  $region31: #{sft_forward.13} parent=0 // pred_check_branch
    %190 = sbr.rel (0) target = $region33
  $region32: #{sft_forward.13} parent=0 // pred_region
    _
  $region33: #{sft_forward.13} parent=0 // pred_fallthru
    _

// kernel: sft_forward.11
$region0: #{sft_forward.11}
  #allocation0 [shape = 'u32[]', space=smem, size = 0x4, offset = 0x4, fixed_abs, tag = 'smem constant byte address 0x4 - core index']
  #allocation1 [shape = 'u32[144,128]{1,0:T(1,128)}', space=vmem, size = 0x12000, scoped, tag = 'internal scratch']
  %s0 = inlined_call_operand.vmem [shape: f32[32,128], index: 0, kind: input, shape index: {}]
  %s1 = inlined_call_operand.vmem [shape: f32[1,128], index: 1, kind: input, shape index: {}]
  %s2 = inlined_call_operand.vmem [shape: f32[1,128], index: 2, kind: input, shape index: {}]
  %s3 = inlined_call_operand.vmem [shape: bf16[128,384], index: 3, kind: input, shape index: {}]
  %s4 = inlined_call_operand.vmem [shape: f32[1,384], index: 4, kind: input, shape index: {}]
  %s5 = inlined_call_operand.vmem [shape: f32[32,384], index: 5, kind: output, shape index: {}]
  %s6 = sld [smem:[#allocation0]]
  $region30: #{sft_forward.11} parent=0
    _
  %s8 = ssub.s32 1, %s6
  %s9 = scalar_select 0, %s8, %s6
  // Predicated region
  $region2: #{sft_forward.11} parent=0 // pred_check
    _
  $region3: #{sft_forward.11} parent=0 // pred_check_branch
    %11 = sbr.rel (0) target = $region5
  $region4: #{sft_forward.11} parent=0 // pred_region
    _
  $region5: #{sft_forward.11} parent=0 // pred_fallthru
    _
  // Predicated region
  $region6: #{sft_forward.11} parent=0 // pred_check
    _
  $region7: #{sft_forward.11} parent=0 // pred_check_branch
    %13 = sbr.rel (0) target = $region9
  $region8: #{sft_forward.11} parent=0 // pred_region
    _
  $region9: #{sft_forward.11} parent=0 // pred_fallthru
    _
  // Predicated region
  $region10: #{sft_forward.11} parent=0 // pred_check
    _
  $region11: #{sft_forward.11} parent=0 // pred_check_branch
    %15 = sbr.rel (0) target = $region13
  $region12: #{sft_forward.11} parent=0 // pred_region
    _
  $region13: #{sft_forward.11} parent=0 // pred_fallthru
    _
  // Predicated region
  $region14: #{sft_forward.11} parent=0 // pred_check
    _
  $region15: #{sft_forward.11} parent=0 // pred_check_branch
    %17 = sbr.rel (0) target = $region17
  $region16: #{sft_forward.11} parent=0 // pred_region
    _
  $region17: #{sft_forward.11} parent=0 // pred_fallthru
    _
  // Predicated region
  $region18: #{sft_forward.11} parent=0 // pred_check
    _
  $region19: #{sft_forward.11} parent=0 // pred_check_branch
    %19 = sbr.rel (0) target = $region21
  $region20: #{sft_forward.11} parent=0 // pred_region
    _
  $region21: #{sft_forward.11} parent=0 // pred_fallthru
    _
  %v21 = vld [vmem:[%s0] sm:$0xff]
  %v22 = vld [vmem:[%s0 + $0x8] sm:$0xff]
  %v23 = vld [vmem:[%s0 + $0x10] sm:$0xff]
  %v24 = vld [vmem:[%s0 + $0x18] sm:$0xff]
  %25 = vadd.xlane.f32.xlu0 %v21
  %v26 = vpop.xlane.xlu0 %25
  %27 = vadd.xlane.f32.xlu0 %v22
  %v28 = vpop.xlane.xlu0 %27
  %29 = vadd.xlane.f32.xlu0 %v23
  %v30 = vpop.xlane.xlu0 %29
  %31 = vadd.xlane.f32.xlu0 %v24
  %v32 = vpop.xlane.xlu0 %31
  %v33 = vrcp.pop 128.0
  %v34 = vmul.f32 %v26, %v33
  %v35 = vmul.f32 %v28, %v33
  %v36 = vmul.f32 %v30, %v33
  %v37 = vmul.f32 %v32, %v33
  %v38 = vsub.f32 %v21, %v34
  %v39 = vsub.f32 %v22, %v35
  %v40 = vsub.f32 %v23, %v36
  %v41 = vsub.f32 %v24, %v37
  %v42 = vmul.f32 %v38, %v38
  %v43 = vmul.f32 %v39, %v39
  %v44 = vmul.f32 %v40, %v40
  %v45 = vmul.f32 %v41, %v41
  %46 = vadd.xlane.f32.xlu0 %v42
  %v47 = vpop.xlane.xlu0 %46
  %48 = vadd.xlane.f32.xlu0 %v43
  %v49 = vpop.xlane.xlu0 %48
  %50 = vadd.xlane.f32.xlu0 %v44
  %v51 = vpop.xlane.xlu0 %50
  %52 = vadd.xlane.f32.xlu0 %v45
  %v53 = vpop.xlane.xlu0 %52
  %v54 = vmul.f32 %v47, %v33
  %v55 = vmul.f32 %v49, %v33
  %v56 = vmul.f32 %v51, %v33
  %v57 = vmul.f32 %v53, %v33
  %v58 = vadd.f32 %v54, 1e-05
  %v59 = vadd.f32 %v55, 1e-05
  %v60 = vadd.f32 %v56, 1e-05
  %v61 = vadd.f32 %v57, 1e-05
  %v62 = vrsqrt.pop %v58
  %v63 = vrsqrt.pop %v59
  %v64 = vrsqrt.pop %v60
  %v65 = vrsqrt.pop %v61
  %v66 = vmul.f32 %v38, %v62
  %v67 = vmul.f32 %v39, %v63
  %v68 = vmul.f32 %v40, %v64
  %v69 = vmul.f32 %v41, %v65
  %v70 = vld [vmem:[%s1] sm:$0x1]
  %v72 = vlaneseq
  %v73 = vshrl.u32 %v72, 7
  %v74 = vsub.s32 0, %v73
  %v75 = vrot.slane %v70, %v74
  %v77 = vmul.f32 %v66, %v75
  %v78 = vmul.f32 %v67, %v75
  %v79 = vmul.f32 %v68, %v75
  %v80 = vmul.f32 %v69, %v75
  %v81 = vld [vmem:[%s2] sm:$0x1]
  %v83 = vlaneseq
  %v84 = vshrl.u32 %v83, 7
  %v85 = vsub.s32 0, %v84
  %v86 = vrot.slane %v81, %v85
  %v88 = vadd.f32 %v77, %v86
  %v89 = vadd.f32 %v78, %v86
  %v90 = vadd.f32 %v79, %v86
  %v91 = vadd.f32 %v80, %v86
  %v92 = vpack.c.bf16 %v89, %v88
  %v93 = vpack.c.bf16 %v91, %v90
  %v94 = vld [vmem:[%s3] sm:$0xff]
  %v95 = vld [vmem:[%s3 + $0x8] sm:$0xf]
  %v96 = vld [vmem:[%s3 + $0xc] sm:$0xff]
  %v97 = vld [vmem:[%s3 + $0x14] sm:$0xf]
  %v98 = vld [vmem:[%s3 + $0x18] sm:$0xff]
  %v99 = vld [vmem:[%s3 + $0x20] sm:$0xf]
  %v100 = vld [vmem:[%s3 + $0x24] sm:$0xff]
  %v101 = vld [vmem:[%s3 + $0x2c] sm:$0xf]
  %v102 = vld [vmem:[%s3 + $0x30] sm:$0xff]
  %v103 = vld [vmem:[%s3 + $0x38] sm:$0xf]
  %v104 = vld [vmem:[%s3 + $0x3c] sm:$0xff]
  %v105 = vld [vmem:[%s3 + $0x44] sm:$0xf]
  %v106 = vld [vmem:[%s3 + $0x48] sm:$0xff]
  %v107 = vld [vmem:[%s3 + $0x50] sm:$0xf]
  %v108 = vld [vmem:[%s3 + $0x54] sm:$0xff]
  %v109 = vld [vmem:[%s3 + $0x5c] sm:$0xf]
  %v110 = vld [vmem:[%s3 + $0x60] sm:$0xff]
  %v111 = vld [vmem:[%s3 + $0x68] sm:$0xf]
  %v112 = vld [vmem:[%s3 + $0x6c] sm:$0xff]
  %v113 = vld [vmem:[%s3 + $0x74] sm:$0xf]
  %v114 = vld [vmem:[%s3 + $0x78] sm:$0xff]
  %v115 = vld [vmem:[%s3 + $0x80] sm:$0xf]
  %v116 = vld [vmem:[%s3 + $0x84] sm:$0xff]
  %v117 = vld [vmem:[%s3 + $0x8c] sm:$0xf]
  %v118 = vld [vmem:[%s3 + $0x90] sm:$0xff]
  %v119 = vld [vmem:[%s3 + $0x98] sm:$0xf]
  %v120 = vld [vmem:[%s3 + $0x9c] sm:$0xff]
  %v121 = vld [vmem:[%s3 + $0xa4] sm:$0xf]
  %v122 = vld [vmem:[%s3 + $0xa8] sm:$0xff]
  %v123 = vld [vmem:[%s3 + $0xb0] sm:$0xf]
  %v124 = vld [vmem:[%s3 + $0xb4] sm:$0xff]
  %v125 = vld [vmem:[%s3 + $0xbc] sm:$0xf]
  %v126 = vld [vmem:[%s4] sm:$0x7]
  %v128 = vlaneseq
  %v129 = vshrl.u32 %v128, 7
  %v130 = vsub.s32 0, %v129
  %v131 = vrot.slane %v126, %v130
  %v132 = vlaneseq
  %v133 = vshrl.u32 %v132, 7
  %v134 = vsub.s32 1, %v133
  %v135 = vrot.slane %v126, %v134
  %v136 = vlaneseq
  %v137 = vshrl.u32 %v136, 7
  %v138 = vsub.s32 2, %v137
  %v139 = vrot.slane %v126, %v138
  %v175 = vunpack.c.l.b16 %v94
  %v176 = vunpack.c.h.b16 %v94
  %v177 = vunpack.c.l.b16 %v95
  %v178 = vunpack.c.l.b16 %v96
  %v179 = vunpack.c.h.b16 %v96
  %v180 = vunpack.c.l.b16 %v97
  %v181 = vunpack.c.l.b16 %v98
  %v182 = vunpack.c.h.b16 %v98
  %v183 = vunpack.c.l.b16 %v99
  %v184 = vunpack.c.l.b16 %v100
  %v185 = vunpack.c.h.b16 %v100
  %v186 = vunpack.c.l.b16 %v101
  %v187 = vunpack.c.l.b16 %v102
  %v188 = vunpack.c.h.b16 %v102
  %v189 = vunpack.c.l.b16 %v103
  %v190 = vunpack.c.l.b16 %v104
  %v191 = vunpack.c.h.b16 %v104
  %v192 = vunpack.c.l.b16 %v105
  %v193 = vunpack.c.l.b16 %v106
  %v194 = vunpack.c.h.b16 %v106
  %v195 = vunpack.c.l.b16 %v107
  %v196 = vunpack.c.l.b16 %v108
  %v197 = vunpack.c.h.b16 %v108
  %v198 = vunpack.c.l.b16 %v109
  %v199 = vunpack.c.l.b16 %v110
  %v200 = vunpack.c.h.b16 %v110
  %v201 = vunpack.c.l.b16 %v111
  %v202 = vunpack.c.l.b16 %v112
  %v203 = vunpack.c.h.b16 %v112
  %v204 = vunpack.c.l.b16 %v113
  %v205 = vunpack.c.l.b16 %v114
  %v206 = vunpack.c.h.b16 %v114
  %v207 = vunpack.c.l.b16 %v115
  %v208 = vunpack.c.l.b16 %v116
  %v209 = vunpack.c.h.b16 %v116
  %v210 = vunpack.c.l.b16 %v117
  %v211 = vunpack.c.l.b16 %v118
  %v212 = vunpack.c.h.b16 %v118
  %v213 = vunpack.c.l.b16 %v119
  %v214 = vunpack.c.l.b16 %v120
  %v215 = vunpack.c.h.b16 %v120
  %v216 = vunpack.c.l.b16 %v121
  %v217 = vunpack.c.l.b16 %v122
  %v218 = vunpack.c.h.b16 %v122
  %v219 = vunpack.c.l.b16 %v123
  %v220 = vunpack.c.l.b16 %v124
  %v221 = vunpack.c.h.b16 %v124
  %v222 = vunpack.c.l.b16 %v125
  %v223 = vpack.c.b16 %v178, %v175
  %v224 = vpack.c.b16 %v179, %v176
  %v225 = vpack.c.b16 %v180, %v177
  %v226 = vpack.c.b16 %v184, %v181
  %v227 = vpack.c.b16 %v185, %v182
  %v228 = vpack.c.b16 %v186, %v183
  %v229 = vpack.c.b16 %v190, %v187
  %v230 = vpack.c.b16 %v191, %v188
  %v231 = vpack.c.b16 %v192, %v189
  %v232 = vpack.c.b16 %v196, %v193
  %v233 = vpack.c.b16 %v197, %v194
  %v234 = vpack.c.b16 %v198, %v195
  %v235 = vpack.c.b16 %v202, %v199
  %v236 = vpack.c.b16 %v203, %v200
  %v237 = vpack.c.b16 %v204, %v201
  %v238 = vpack.c.b16 %v208, %v205
  %v239 = vpack.c.b16 %v209, %v206
  %v240 = vpack.c.b16 %v210, %v207
  %v241 = vpack.c.b16 %v214, %v211
  %v242 = vpack.c.b16 %v215, %v212
  %v243 = vpack.c.b16 %v216, %v213
  %v244 = vpack.c.b16 %v220, %v217
  %v245 = vpack.c.b16 %v221, %v218
  %v246 = vpack.c.b16 %v222, %v219
  %271 = vmatprep.subr.bf16.mxu0 %v224
  %272 = vmatpush1.bf16.msra.mxu0 %v223
  %273 = vmatprep.subr.bf16.mxu0 %v227
  %274 = vmatpush1.bf16.msra.mxu0 %v226
  %275 = vmatprep.subr.bf16.mxu0 %v230
  %276 = vmatpush1.bf16.msra.mxu0 %v229
  %277 = vmatprep.subr.bf16.mxu0 %v233
  %278 = vmatpush1.bf16.msra.mxu0 %v232
  %279 = vmatprep.subr.bf16.mxu0 %v236
  %280 = vmatpush1.bf16.msra.mxu0 %v235
  %281 = vmatprep.subr.bf16.mxu0 %v239
  %282 = vmatpush1.bf16.msra.mxu0 %v238
  %283 = vmatprep.subr.bf16.mxu0 %v242
  %284 = vmatpush1.bf16.msra.mxu0 %v241
  %285 = vmatprep.subr.bf16.mxu0 %v245
  %286 = vmatpush1.bf16.msra.mxu0 %v244
  %287 = vmatprep.subr.bf16.mxu0 0
  %288 = vmatpush1.bf16.msra.mxu0 0
  %289 = vmatprep.subr.bf16.mxu0 0
  %290 = vmatpush1.bf16.msra.mxu0 0
  %291 = vmatprep.subr.bf16.mxu0 0
  %292 = vmatpush1.bf16.msra.mxu0 0
  %293 = vmatprep.subr.bf16.mxu0 0
  %294 = vmatpush1.bf16.msra.mxu0 0
  %295 = vmatprep.subr.bf16.mxu0 0
  %296 = vmatpush1.bf16.msra.mxu0 0
  %297 = vmatprep.subr.bf16.mxu0 0
  %298 = vmatpush1.bf16.msra.mxu0 0
  %299 = vmatprep.subr.bf16.mxu0 0
  %300 = vmatpush1.bf16.msra.mxu0 0
  %301 = vmatprep.subr.bf16.mxu0 0
  %302 = vmatpush1.bf16.msra.mxu0 0
  %303 = vmatprep.mubr.bf16.mxu0 0
  %304 = vmatmul.mubr.bf16.gmra.mrb[0].mxu0 %v92
  %v305 = vpop.f32.mrb[0].mxu0
  %v306 = vadd.f32 %v131, %v305
  %v307 = vpop.f32.mrb[0].mxu0
  %v308 = vadd.f32 %v135, %v307
  %v309 = vpop.f32.mrb[0].mxu0
  %v310 = vadd.f32 %v131, %v309
  %v311 = vpop.f32.mrb[0].mxu0
  %v312 = vadd.f32 %v135, %v311
  %313 = vmatprep.mubr.bf16.mxu0 0
  %314 = vmatmul.mubr.bf16.gmra.mrb[0].mxu0 %v93
  %v315 = vpop.f32.mrb[0].mxu0
  %v316 = vadd.f32 %v131, %v315
  %v317 = vpop.f32.mrb[0].mxu0
  %v318 = vadd.f32 %v135, %v317
  %v319 = vpop.f32.mrb[0].mxu0
  %v320 = vadd.f32 %v131, %v319
  %v321 = vpop.f32.mrb[0].mxu0
  %v322 = vadd.f32 %v135, %v321
  %323 = vdwg.mxu0
  %324 = vmatprep.subr.bf16.mxu0 0
  %325 = vmatpush1.bf16.msra.mxu0 %v225
  %326 = vmatprep.subr.bf16.mxu0 0
  %327 = vmatpush1.bf16.msra.mxu0 %v228
  %328 = vmatprep.subr.bf16.mxu0 0
  %329 = vmatpush1.bf16.msra.mxu0 %v231
  %330 = vmatprep.subr.bf16.mxu0 0
  %331 = vmatpush1.bf16.msra.mxu0 %v234
  %332 = vmatprep.subr.bf16.mxu0 0
  %333 = vmatpush1.bf16.msra.mxu0 %v237
  %334 = vmatprep.subr.bf16.mxu0 0
  %335 = vmatpush1.bf16.msra.mxu0 %v240
  %336 = vmatprep.subr.bf16.mxu0 0
  %337 = vmatpush1.bf16.msra.mxu0 %v243
  %338 = vmatprep.subr.bf16.mxu0 0
  %339 = vmatpush1.bf16.msra.mxu0 %v246
  %340 = vmatprep.subr.bf16.mxu0 0
  %341 = vmatpush1.bf16.msra.mxu0 0
  %342 = vmatprep.subr.bf16.mxu0 0
  %343 = vmatpush1.bf16.msra.mxu0 0
  %344 = vmatprep.subr.bf16.mxu0 0
  %345 = vmatpush1.bf16.msra.mxu0 0
  %346 = vmatprep.subr.bf16.mxu0 0
  %347 = vmatpush1.bf16.msra.mxu0 0
  %348 = vmatprep.subr.bf16.mxu0 0
  %349 = vmatpush1.bf16.msra.mxu0 0
  %350 = vmatprep.subr.bf16.mxu0 0
  %351 = vmatpush1.bf16.msra.mxu0 0
  %352 = vmatprep.subr.bf16.mxu0 0
  %353 = vmatpush1.bf16.msra.mxu0 0
  %354 = vmatprep.subr.bf16.mxu0 0
  %355 = vmatpush1.bf16.msra.mxu0 0
  %356 = vmatprep.mubr.bf16.mxu0 0
  %357 = vmatmul.mubr.bf16.gmra.mrb[0].mxu0 %v92
  %v358 = vpop.f32.mrb[0].mxu0
  %v359 = vadd.f32 %v139, %v358
  %v360 = vpop.f32.mrb[0].mxu0
  %v361 = vpop.f32.mrb[0].mxu0
  %v362 = vadd.f32 %v139, %v361
  %v363 = vpop.f32.mrb[0].mxu0
  %364 = vmatprep.mubr.bf16.mxu0 0
  %365 = vmatmul.mubr.bf16.gmra.mrb[0].mxu0 %v93
  %v366 = vpop.f32.mrb[0].mxu0
  %v367 = vadd.f32 %v139, %v366
  %v368 = vpop.f32.mrb[0].mxu0
  %v369 = vpop.f32.mrb[0].mxu0
  %v370 = vadd.f32 %v139, %v369
  %v371 = vpop.f32.mrb[0].mxu0
  %372 = vdwg.mxu0
  %373 = vst [vmem:[%s5] sm:$0xff] %v306
  %374 = vst [vmem:[%s5 + $0x8] sm:$0xff] %v308
  %375 = vst [vmem:[%s5 + $0x10] sm:$0xff] %v359
  %376 = vst [vmem:[%s5 + $0x18] sm:$0xff] %v310
  %377 = vst [vmem:[%s5 + $0x20] sm:$0xff] %v312
  %378 = vst [vmem:[%s5 + $0x28] sm:$0xff] %v362
  %379 = vst [vmem:[%s5 + $0x30] sm:$0xff] %v316
  %380 = vst [vmem:[%s5 + $0x38] sm:$0xff] %v318
  %381 = vst [vmem:[%s5 + $0x40] sm:$0xff] %v367
  %382 = vst [vmem:[%s5 + $0x48] sm:$0xff] %v320
  %383 = vst [vmem:[%s5 + $0x50] sm:$0xff] %v322
  %384 = vst [vmem:[%s5 + $0x58] sm:$0xff] %v370
  // Predicated region
  $region22: #{sft_forward.11} parent=0 // pred_check
    _
  $region23: #{sft_forward.11} parent=0 // pred_check_branch
    %386 = sbr.rel (0) target = $region25
  $region24: #{sft_forward.11} parent=0 // pred_region
    _
  $region25: #{sft_forward.11} parent=0 // pred_fallthru
    _
  // Predicated region
  $region26: #{sft_forward.11} parent=0 // pred_check
    _
  $region27: #{sft_forward.11} parent=0 // pred_check_branch
    %388 = sbr.rel (0) target = $region29
  $region28: #{sft_forward.11} parent=0 // pred_region
    _
  $region29: #{sft_forward.11} parent=0 // pred_fallthru
    _

// kernel: sft_forward.14
$region0: #{sft_forward.14}
  #allocation0 [shape = 'u32[]', space=smem, size = 0x4, offset = 0x4, fixed_abs, tag = 'smem constant byte address 0x4 - core index']
  #allocation1 [shape = 'u32[144,128]{1,0:T(1,128)}', space=vmem, size = 0x12000, scoped, tag = 'internal scratch']
  %s0 = inlined_call_operand.vmem [shape: f32[32,128], index: 0, kind: input, shape index: {}]
  %s1 = inlined_call_operand.vmem [shape: f32[1,128], index: 1, kind: input, shape index: {}]
  %s2 = inlined_call_operand.vmem [shape: f32[1,128], index: 2, kind: input, shape index: {}]
  %s3 = inlined_call_operand.vmem [shape: bf16[128,256], index: 3, kind: input, shape index: {}]
  %s4 = inlined_call_operand.vmem [shape: f32[1,256], index: 4, kind: input, shape index: {}]
  %s5 = inlined_call_operand.vmem [shape: f32[32,256], index: 5, kind: output, shape index: {}]
  %s6 = sld [smem:[#allocation0]]
  $region30: #{sft_forward.14} parent=0
    _
  %s8 = ssub.s32 1, %s6
  %s9 = scalar_select 0, %s8, %s6
  // Predicated region
  $region2: #{sft_forward.14} parent=0 // pred_check
    _
  $region3: #{sft_forward.14} parent=0 // pred_check_branch
    %11 = sbr.rel (0) target = $region5
  $region4: #{sft_forward.14} parent=0 // pred_region
    _
  $region5: #{sft_forward.14} parent=0 // pred_fallthru
    _
  // Predicated region
  $region6: #{sft_forward.14} parent=0 // pred_check
    _
  $region7: #{sft_forward.14} parent=0 // pred_check_branch
    %13 = sbr.rel (0) target = $region9
  $region8: #{sft_forward.14} parent=0 // pred_region
    _
  $region9: #{sft_forward.14} parent=0 // pred_fallthru
    _
  // Predicated region
  $region10: #{sft_forward.14} parent=0 // pred_check
    _
  $region11: #{sft_forward.14} parent=0 // pred_check_branch
    %15 = sbr.rel (0) target = $region13
  $region12: #{sft_forward.14} parent=0 // pred_region
    _
  $region13: #{sft_forward.14} parent=0 // pred_fallthru
    _
  // Predicated region
  $region14: #{sft_forward.14} parent=0 // pred_check
    _
  $region15: #{sft_forward.14} parent=0 // pred_check_branch
    %17 = sbr.rel (0) target = $region17
  $region16: #{sft_forward.14} parent=0 // pred_region
    _
  $region17: #{sft_forward.14} parent=0 // pred_fallthru
    _
  // Predicated region
  $region18: #{sft_forward.14} parent=0 // pred_check
    _
  $region19: #{sft_forward.14} parent=0 // pred_check_branch
    %19 = sbr.rel (0) target = $region21
  $region20: #{sft_forward.14} parent=0 // pred_region
    _
  $region21: #{sft_forward.14} parent=0 // pred_fallthru
    _
  %v21 = vld [vmem:[%s0] sm:$0xff]
  %v22 = vld [vmem:[%s0 + $0x8] sm:$0xff]
  %v23 = vld [vmem:[%s0 + $0x10] sm:$0xff]
  %v24 = vld [vmem:[%s0 + $0x18] sm:$0xff]
  %25 = vadd.xlane.f32.xlu0 %v21
  %v26 = vpop.xlane.xlu0 %25
  %27 = vadd.xlane.f32.xlu0 %v22
  %v28 = vpop.xlane.xlu0 %27
  %29 = vadd.xlane.f32.xlu0 %v23
  %v30 = vpop.xlane.xlu0 %29
  %31 = vadd.xlane.f32.xlu0 %v24
  %v32 = vpop.xlane.xlu0 %31
  %v33 = vrcp.pop 128.0
  %v34 = vmul.f32 %v26, %v33
  %v35 = vmul.f32 %v28, %v33
  %v36 = vmul.f32 %v30, %v33
  %v37 = vmul.f32 %v32, %v33
  %v38 = vsub.f32 %v21, %v34
  %v39 = vsub.f32 %v22, %v35
  %v40 = vsub.f32 %v23, %v36
  %v41 = vsub.f32 %v24, %v37
  %v42 = vmul.f32 %v38, %v38
  %v43 = vmul.f32 %v39, %v39
  %v44 = vmul.f32 %v40, %v40
  %v45 = vmul.f32 %v41, %v41
  %46 = vadd.xlane.f32.xlu0 %v42
  %v47 = vpop.xlane.xlu0 %46
  %48 = vadd.xlane.f32.xlu0 %v43
  %v49 = vpop.xlane.xlu0 %48
  %50 = vadd.xlane.f32.xlu0 %v44
  %v51 = vpop.xlane.xlu0 %50
  %52 = vadd.xlane.f32.xlu0 %v45
  %v53 = vpop.xlane.xlu0 %52
  %v54 = vmul.f32 %v47, %v33
  %v55 = vmul.f32 %v49, %v33
  %v56 = vmul.f32 %v51, %v33
  %v57 = vmul.f32 %v53, %v33
  %v58 = vadd.f32 %v54, 1e-05
  %v59 = vadd.f32 %v55, 1e-05
  %v60 = vadd.f32 %v56, 1e-05
  %v61 = vadd.f32 %v57, 1e-05
  %v62 = vrsqrt.pop %v58
  %v63 = vrsqrt.pop %v59
  %v64 = vrsqrt.pop %v60
  %v65 = vrsqrt.pop %v61
  %v66 = vmul.f32 %v38, %v62
  %v67 = vmul.f32 %v39, %v63
  %v68 = vmul.f32 %v40, %v64
  %v69 = vmul.f32 %v41, %v65
  %v70 = vld [vmem:[%s1] sm:$0x1]
  %v72 = vlaneseq
  %v73 = vshrl.u32 %v72, 7
  %v74 = vsub.s32 0, %v73
  %v75 = vrot.slane %v70, %v74
  %v77 = vmul.f32 %v66, %v75
  %v78 = vmul.f32 %v67, %v75
  %v79 = vmul.f32 %v68, %v75
  %v80 = vmul.f32 %v69, %v75
  %v81 = vld [vmem:[%s2] sm:$0x1]
  %v83 = vlaneseq
  %v84 = vshrl.u32 %v83, 7
  %v85 = vsub.s32 0, %v84
  %v86 = vrot.slane %v81, %v85
  %v88 = vadd.f32 %v77, %v86
  %v89 = vadd.f32 %v78, %v86
  %v90 = vadd.f32 %v79, %v86
  %v91 = vadd.f32 %v80, %v86
  %v92 = vpack.c.bf16 %v89, %v88
  %v93 = vpack.c.bf16 %v91, %v90
  %v94 = vld [vmem:[%s3] sm:$0xff]
  %v95 = vld [vmem:[%s3 + $0x8] sm:$0xff]
  %v96 = vld [vmem:[%s3 + $0x10] sm:$0xff]
  %v97 = vld [vmem:[%s3 + $0x18] sm:$0xff]
  %v98 = vld [vmem:[%s3 + $0x20] sm:$0xff]
  %v99 = vld [vmem:[%s3 + $0x28] sm:$0xff]
  %v100 = vld [vmem:[%s3 + $0x30] sm:$0xff]
  %v101 = vld [vmem:[%s3 + $0x38] sm:$0xff]
  %v102 = vld [vmem:[%s3 + $0x40] sm:$0xff]
  %v103 = vld [vmem:[%s3 + $0x48] sm:$0xff]
  %v104 = vld [vmem:[%s3 + $0x50] sm:$0xff]
  %v105 = vld [vmem:[%s3 + $0x58] sm:$0xff]
  %v106 = vld [vmem:[%s3 + $0x60] sm:$0xff]
  %v107 = vld [vmem:[%s3 + $0x68] sm:$0xff]
  %v108 = vld [vmem:[%s3 + $0x70] sm:$0xff]
  %v109 = vld [vmem:[%s3 + $0x78] sm:$0xff]
  %v110 = vld [vmem:[%s4] sm:$0x3]
  %v112 = vlaneseq
  %v113 = vshrl.u32 %v112, 7
  %v114 = vsub.s32 0, %v113
  %v115 = vrot.slane %v110, %v114
  %v116 = vlaneseq
  %v117 = vshrl.u32 %v116, 7
  %v118 = vsub.s32 1, %v117
  %v119 = vrot.slane %v110, %v118
  %v138 = vunpack.c.l.b16 %v94
  %v139 = vunpack.c.h.b16 %v94
  %v140 = vunpack.c.l.b16 %v95
  %v141 = vunpack.c.h.b16 %v95
  %v142 = vunpack.c.l.b16 %v96
  %v143 = vunpack.c.h.b16 %v96
  %v144 = vunpack.c.l.b16 %v97
  %v145 = vunpack.c.h.b16 %v97
  %v146 = vunpack.c.l.b16 %v98
  %v147 = vunpack.c.h.b16 %v98
  %v148 = vunpack.c.l.b16 %v99
  %v149 = vunpack.c.h.b16 %v99
  %v150 = vunpack.c.l.b16 %v100
  %v151 = vunpack.c.h.b16 %v100
  %v152 = vunpack.c.l.b16 %v101
  %v153 = vunpack.c.h.b16 %v101
  %v154 = vunpack.c.l.b16 %v102
  %v155 = vunpack.c.h.b16 %v102
  %v156 = vunpack.c.l.b16 %v103
  %v157 = vunpack.c.h.b16 %v103
  %v158 = vunpack.c.l.b16 %v104
  %v159 = vunpack.c.h.b16 %v104
  %v160 = vunpack.c.l.b16 %v105
  %v161 = vunpack.c.h.b16 %v105
  %v162 = vunpack.c.l.b16 %v106
  %v163 = vunpack.c.h.b16 %v106
  %v164 = vunpack.c.l.b16 %v107
  %v165 = vunpack.c.h.b16 %v107
  %v166 = vunpack.c.l.b16 %v108
  %v167 = vunpack.c.h.b16 %v108
  %v168 = vunpack.c.l.b16 %v109
  %v169 = vunpack.c.h.b16 %v109
  %v170 = vpack.c.b16 %v140, %v138
  %v171 = vpack.c.b16 %v141, %v139
  %v172 = vpack.c.b16 %v144, %v142
  %v173 = vpack.c.b16 %v145, %v143
  %v174 = vpack.c.b16 %v148, %v146
  %v175 = vpack.c.b16 %v149, %v147
  %v176 = vpack.c.b16 %v152, %v150
  %v177 = vpack.c.b16 %v153, %v151
  %v178 = vpack.c.b16 %v156, %v154
  %v179 = vpack.c.b16 %v157, %v155
  %v180 = vpack.c.b16 %v160, %v158
  %v181 = vpack.c.b16 %v161, %v159
  %v182 = vpack.c.b16 %v164, %v162
  %v183 = vpack.c.b16 %v165, %v163
  %v184 = vpack.c.b16 %v168, %v166
  %v185 = vpack.c.b16 %v169, %v167
  %202 = vmatprep.subr.bf16.mxu0 %v171
  %203 = vmatpush1.bf16.msra.mxu0 %v170
  %204 = vmatprep.subr.bf16.mxu0 %v173
  %205 = vmatpush1.bf16.msra.mxu0 %v172
  %206 = vmatprep.subr.bf16.mxu0 %v175
  %207 = vmatpush1.bf16.msra.mxu0 %v174
  %208 = vmatprep.subr.bf16.mxu0 %v177
  %209 = vmatpush1.bf16.msra.mxu0 %v176
  %210 = vmatprep.subr.bf16.mxu0 %v179
  %211 = vmatpush1.bf16.msra.mxu0 %v178
  %212 = vmatprep.subr.bf16.mxu0 %v181
  %213 = vmatpush1.bf16.msra.mxu0 %v180
  %214 = vmatprep.subr.bf16.mxu0 %v183
  %215 = vmatpush1.bf16.msra.mxu0 %v182
  %216 = vmatprep.subr.bf16.mxu0 %v185
  %217 = vmatpush1.bf16.msra.mxu0 %v184
  %218 = vmatprep.subr.bf16.mxu0 0
  %219 = vmatpush1.bf16.msra.mxu0 0
  %220 = vmatprep.subr.bf16.mxu0 0
  %221 = vmatpush1.bf16.msra.mxu0 0
  %222 = vmatprep.subr.bf16.mxu0 0
  %223 = vmatpush1.bf16.msra.mxu0 0
  %224 = vmatprep.subr.bf16.mxu0 0
  %225 = vmatpush1.bf16.msra.mxu0 0
  %226 = vmatprep.subr.bf16.mxu0 0
  %227 = vmatpush1.bf16.msra.mxu0 0
  %228 = vmatprep.subr.bf16.mxu0 0
  %229 = vmatpush1.bf16.msra.mxu0 0
  %230 = vmatprep.subr.bf16.mxu0 0
  %231 = vmatpush1.bf16.msra.mxu0 0
  %232 = vmatprep.subr.bf16.mxu0 0
  %233 = vmatpush1.bf16.msra.mxu0 0
  %234 = vmatprep.mubr.bf16.mxu0 0
  %235 = vmatmul.mubr.bf16.gmra.mrb[0].mxu0 %v92
  %v236 = vpop.f32.mrb[0].mxu0
  %v237 = vadd.f32 %v115, %v236
  %v238 = vpop.f32.mrb[0].mxu0
  %v239 = vadd.f32 %v119, %v238
  %v240 = vpop.f32.mrb[0].mxu0
  %v241 = vadd.f32 %v115, %v240
  %v242 = vpop.f32.mrb[0].mxu0
  %v243 = vadd.f32 %v119, %v242
  %244 = vmatprep.mubr.bf16.mxu0 0
  %245 = vmatmul.mubr.bf16.gmra.mrb[0].mxu0 %v93
  %v246 = vpop.f32.mrb[0].mxu0
  %v247 = vadd.f32 %v115, %v246
  %v248 = vpop.f32.mrb[0].mxu0
  %v249 = vadd.f32 %v119, %v248
  %v250 = vpop.f32.mrb[0].mxu0
  %v251 = vadd.f32 %v115, %v250
  %v252 = vpop.f32.mrb[0].mxu0
  %v253 = vadd.f32 %v119, %v252
  %254 = vdwg.mxu0
  %v255 = vmul.f32 %v237, %v237
  %v256 = vmul.f32 %v239, %v239
  %v257 = vmul.f32 %v241, %v241
  %v258 = vmul.f32 %v243, %v243
  %v259 = vmul.f32 %v247, %v247
  %v260 = vmul.f32 %v249, %v249
  %v261 = vmul.f32 %v251, %v251
  %v262 = vmul.f32 %v253, %v253
  %v263 = vmul.f32 %v237, %v255
  %v264 = vmul.f32 %v239, %v256
  %v265 = vmul.f32 %v241, %v257
  %v266 = vmul.f32 %v243, %v258
  %v267 = vmul.f32 %v247, %v259
  %v268 = vmul.f32 %v249, %v260
  %v269 = vmul.f32 %v251, %v261
  %v270 = vmul.f32 %v253, %v262
  %v271 = vmul.f32 %v263, 0.044715
  %v272 = vmul.f32 %v264, 0.044715
  %v273 = vmul.f32 %v265, 0.044715
  %v274 = vmul.f32 %v266, 0.044715
  %v275 = vmul.f32 %v267, 0.044715
  %v276 = vmul.f32 %v268, 0.044715
  %v277 = vmul.f32 %v269, 0.044715
  %v278 = vmul.f32 %v270, 0.044715
  %v279 = vadd.f32 %v237, %v271
  %v280 = vadd.f32 %v239, %v272
  %v281 = vadd.f32 %v241, %v273
  %v282 = vadd.f32 %v243, %v274
  %v283 = vadd.f32 %v247, %v275
  %v284 = vadd.f32 %v249, %v276
  %v285 = vadd.f32 %v251, %v277
  %v286 = vadd.f32 %v253, %v278
  %v287 = vmul.f32 %v279, 0.7978846
  %v288 = vmul.f32 %v280, 0.7978846
  %v289 = vmul.f32 %v281, 0.7978846
  %v290 = vmul.f32 %v282, 0.7978846
  %v291 = vmul.f32 %v283, 0.7978846
  %v292 = vmul.f32 %v284, 0.7978846
  %v293 = vmul.f32 %v285, 0.7978846
  %v294 = vmul.f32 %v286, 0.7978846
  %v295 = vtanh.pop %v287
  %v296 = vtanh.pop %v288
  %v297 = vtanh.pop %v289
  %v298 = vtanh.pop %v290
  %v299 = vtanh.pop %v291
  %v300 = vtanh.pop %v292
  %v301 = vtanh.pop %v293
  %v302 = vtanh.pop %v294
  %v303 = vadd.f32 %v295, 1.0
  %v304 = vadd.f32 %v296, 1.0
  %v305 = vadd.f32 %v297, 1.0
  %v306 = vadd.f32 %v298, 1.0
  %v307 = vadd.f32 %v299, 1.0
  %v308 = vadd.f32 %v300, 1.0
  %v309 = vadd.f32 %v301, 1.0
  %v310 = vadd.f32 %v302, 1.0
  %v311 = vmul.f32 %v303, 0.5
  %v312 = vmul.f32 %v304, 0.5
  %v313 = vmul.f32 %v305, 0.5
  %v314 = vmul.f32 %v306, 0.5
  %v315 = vmul.f32 %v307, 0.5
  %v316 = vmul.f32 %v308, 0.5
  %v317 = vmul.f32 %v309, 0.5
  %v318 = vmul.f32 %v310, 0.5
  %v319 = vmul.f32 %v237, %v311
  %v320 = vmul.f32 %v239, %v312
  %v321 = vmul.f32 %v241, %v313
  %v322 = vmul.f32 %v243, %v314
  %v323 = vmul.f32 %v247, %v315
  %v324 = vmul.f32 %v249, %v316
  %v325 = vmul.f32 %v251, %v317
  %v326 = vmul.f32 %v253, %v318
  %327 = vst [vmem:[%s5] sm:$0xff] %v319
  %328 = vst [vmem:[%s5 + $0x8] sm:$0xff] %v320
  %329 = vst [vmem:[%s5 + $0x10] sm:$0xff] %v321
  %330 = vst [vmem:[%s5 + $0x18] sm:$0xff] %v322
  %331 = vst [vmem:[%s5 + $0x20] sm:$0xff] %v323
  %332 = vst [vmem:[%s5 + $0x28] sm:$0xff] %v324
  %333 = vst [vmem:[%s5 + $0x30] sm:$0xff] %v325
  %334 = vst [vmem:[%s5 + $0x38] sm:$0xff] %v326
  // Predicated region
  $region22: #{sft_forward.14} parent=0 // pred_check
    _
  $region23: #{sft_forward.14} parent=0 // pred_check_branch
    %336 = sbr.rel (0) target = $region25
  $region24: #{sft_forward.14} parent=0 // pred_region
    _
  $region25: #{sft_forward.14} parent=0 // pred_fallthru
    _
  // Predicated region
  $region26: #{sft_forward.14} parent=0 // pred_check
    _
  $region27: #{sft_forward.14} parent=0 // pred_check_branch
    %338 = sbr.rel (0) target = $region29
  $region28: #{sft_forward.14} parent=0 // pred_region
    _
  $region29: #{sft_forward.14} parent=0 // pred_fallthru
    _

// kernel: sft_forward.12
$region0: #{sft_forward.12}
  #allocation0 [shape = 'u32[]', space=smem, size = 0x4, offset = 0x4, fixed_abs, tag = 'smem constant byte address 0x4 - core index']
  #allocation1 [shape = 'u32[144,128]{1,0:T(1,128)}', space=vmem, size = 0x12000, scoped, tag = 'internal scratch']
  %s0 = inlined_call_operand.vmem [shape: f32[2,16,384], index: 0, kind: input, shape index: {}]
  %s1 = inlined_call_operand.vmem [shape: f32[2,1,16], index: 1, kind: input, shape index: {}]
  %s2 = inlined_call_operand.vmem [shape: f32[2,16,128], index: 2, kind: output, shape index: {}]
  %s3 = sld [smem:[#allocation0]]
  $region41: #{sft_forward.12} parent=0
    _
  %s5 = ssub.s32 1, %s3
  %s6 = scalar_select 0, %s5, %s3
  loop: start=0, step=1, limit=4
  $region2: #{sft_forward.12} parent=0 // loop_pre_header
    _
  $region3: #{sft_forward.12} parent=0 // loop_header
    %s8 = sphi 0, %s12
    %p9 = scmp.ge.s32.totalorder %s8, 4
    %s18 = sphi 0, %s20
    %s21 = sphi 0, %s18
    %s22 = sphi 0, %s21
    %s38 = sphi 0, %s22
    %s44 = sphi 0, %s46
    %s47 = sphi 0, %s44
    %s48 = sphi 0, %s47
    %s64 = sphi 0, %s48
    %s70 = sphi 0, %s72
    %s73 = sphi 0, %s70
    %s74 = sphi 0, %s73
    %s90 = sphi 0, %s74
  $region4: #{sft_forward.12} parent=0 // loop_header_branch
    %11 = sbr.rel (%p9) target = $region8
  $region5: #{sft_forward.12} parent=0 // loop_body
    %s13 = ssub.s32 %s8, 1
    %s14 = ssub.s32 %s8, 2
    %s15 = sadd.s32 %s8, 1
    %s16 = ssub.s32 %s8, %s15
    %p17 = scmp.eq.s32.totalorder %s16, 0
    %s19 = sadd.s32 %s18, 1
    %s20 = scalar_select %p17, %s18, %s19
    %p23 = pneg %p17
    %p24 = scmp.eq.s32.totalorder %s8, 1
    %p25 = por %p23, %p24
    %p26 = scmp.ne.s32.totalorder %s18, %s21
    %p27 = scmp.eq.s32.totalorder %s8, 0
    %p28 = por %p26, %p27
    %p29 = scmp.ne.s32.totalorder %s18, %s21
    %p30 = scmp.eq.s32.totalorder %s13, 1
    %p31 = por %p29, %p30
    %p32 = scmp.ne.s32.totalorder %s21, %s22
    %p33 = scmp.eq.s32.totalorder %s13, 0
    %p34 = por %p32, %p33
    %p35 = scmp.ne.s32.totalorder %s21, %s22
    %p36 = scmp.eq.s32.totalorder %s14, 1
    %p37 = por %p35, %p36
    %p39 = scmp.ne.s32.totalorder %s22, %s38
    %p40 = scmp.eq.s32.totalorder %s14, 0
    %p41 = por %p39, %p40
    %s42 = ssub.s32 %s8, %s15
    %p43 = scmp.eq.s32.totalorder %s42, 0
    %s45 = sadd.s32 %s44, 1
    %s46 = scalar_select %p43, %s44, %s45
    %p49 = pneg %p43
    %p50 = scmp.eq.s32.totalorder %s8, 1
    %p51 = por %p49, %p50
    %p52 = scmp.ne.s32.totalorder %s44, %s47
    %p53 = scmp.eq.s32.totalorder %s8, 0
    %p54 = por %p52, %p53
    %p55 = scmp.ne.s32.totalorder %s44, %s47
    %p56 = scmp.eq.s32.totalorder %s13, 1
    %p57 = por %p55, %p56
    %p58 = scmp.ne.s32.totalorder %s47, %s48
    %p59 = scmp.eq.s32.totalorder %s13, 0
    %p60 = por %p58, %p59
    %p61 = scmp.ne.s32.totalorder %s47, %s48
    %p62 = scmp.eq.s32.totalorder %s14, 1
    %p63 = por %p61, %p62
    %p65 = scmp.ne.s32.totalorder %s48, %s64
    %p66 = scmp.eq.s32.totalorder %s14, 0
    %p67 = por %p65, %p66
    %s68 = ssub.s32 %s8, %s15
    %p69 = scmp.eq.s32.totalorder %s68, 0
    %s71 = sadd.s32 %s70, 1
    %s72 = scalar_select %p69, %s70, %s71
    %p75 = pneg %p69
    %p76 = scmp.eq.s32.totalorder %s8, 1
    %p77 = por %p75, %p76
    %p78 = scmp.ne.s32.totalorder %s70, %s73
    %p79 = scmp.eq.s32.totalorder %s8, 0
    %p80 = por %p78, %p79
    %p81 = scmp.ne.s32.totalorder %s70, %s73
    %p82 = scmp.eq.s32.totalorder %s13, 1
    %p83 = por %p81, %p82
    %p84 = scmp.ne.s32.totalorder %s73, %s74
    %p85 = scmp.eq.s32.totalorder %s13, 0
    %p86 = por %p84, %p85
    %p87 = scmp.ne.s32.totalorder %s73, %s74
    %p88 = scmp.eq.s32.totalorder %s14, 1
    %p89 = por %p87, %p88
    %p91 = scmp.ne.s32.totalorder %s74, %s90
    %p92 = scmp.eq.s32.totalorder %s14, 0
    %p93 = por %p91, %p92
    %p94 = scmp.le.s32.totalorder 1, %s8
    %p95 = scmp.lt.s32.totalorder %s8, 3
    %p96 = pnand %p94, %p95
    %p97 = pneg %p96
    // Predicated region
    $region9: #{sft_forward.12} parent=5 // pred_check
      _
    $region10: #{sft_forward.12} parent=5 // pred_check_branch
      %99 = sbr.rel (%p96) target = $region12
    $region11: #{sft_forward.12} parent=5 // pred_region
      %s100 = ssub.s32 %s8, 1
    $region12: #{sft_forward.12} parent=5 // pred_fallthru
      _
    %p101 = scmp.lt.s32.totalorder %s8, 2
    // Predicated region
    $region13: #{sft_forward.12} parent=5 // pred_check
      %p102 = pneg %p101
    $region14: #{sft_forward.12} parent=5 // pred_check_branch
      %104 = sbr.rel (%p102) target = $region16
    $region15: #{sft_forward.12} parent=5 // pred_region
      // Predicated region
      $region17: #{sft_forward.12} parent=15 // pred_check
        %p105 = pneg %p28
      $region18: #{sft_forward.12} parent=15 // pred_check_branch
        %107 = sbr.rel (%p105) target = $region20
      $region19: #{sft_forward.12} parent=15 // pred_region
        %p108 = scmp.lt.s32.totalorder %s8, 1
        %s109 = scalar_select %p108, %s8, 1
        %s110 = smul.addr %s109, 6
        %s111 = smul.addr %s110, 8
        %s112 = scalar_lea.vmem %s0, %s111
      $region20: #{sft_forward.12} parent=15 // pred_fallthru
        _
      // Predicated region
      $region21: #{sft_forward.12} parent=15 // pred_check
        %p113 = pneg %p54
      $region22: #{sft_forward.12} parent=15 // pred_check_branch
        %115 = sbr.rel (%p113) target = $region24
      $region23: #{sft_forward.12} parent=15 // pred_region
        %p116 = scmp.lt.s32.totalorder %s8, 1
        %s117 = scalar_select %p116, %s8, 1
        %s118 = scalar_lea.vmem %s1, %s117
      $region24: #{sft_forward.12} parent=15 // pred_fallthru
        _
    $region16: #{sft_forward.12} parent=5 // pred_fallthru
      _
    %p119 = scmp.le.s32.totalorder 1, %s8
    %p120 = scmp.lt.s32.totalorder %s8, 3
    %p121 = pnand %p119, %p120
    %p122 = pneg %p121
    // Predicated region
    $region25: #{sft_forward.12} parent=5 // pred_check
      _
    $region26: #{sft_forward.12} parent=5 // pred_check_branch
      %124 = sbr.rel (%p121) target = $region28
    $region27: #{sft_forward.12} parent=5 // pred_region
      %s125 = ssub.s32 %s8, 1
      %p126 = scmp.lt.s32.totalorder %s13, 1
      %s127 = scalar_select %p126, %s13, 1
      %s128 = smul.addr %s127, 6
      %s129 = smul.addr %s128, 8
      %s130 = scalar_lea.vmem %s0, %s129
      %p131 = pneg %p34
      %p132 = pneg %p31
      %p133 = scmp.lt.s32.totalorder %s13, 1
      %s134 = scalar_select %p133, %s13, 1
      %s135 = scalar_lea.vmem %s1, %s134
      %p136 = pneg %p60
      %p137 = pneg %p57
      %p138 = pneg %p86
      %p139 = pneg %p83
      %p140 = scmp.lt.s32.totalorder %s13, 1
      %s141 = scalar_select %p140, %s13, 1
      %s142 = smul.addr %s141, 2
      %s143 = smul.addr %s142, 8
      %s144 = scalar_lea.vmem %s2, %s143
      %p145 = scmp.lt.s32.totalorder %s13, 1
      %s146 = scalar_select %p145, %s13, 1
      %s147 = smul.addr %s146, 6
      %s148 = smul.addr %s147, 8
      %s149 = scalar_lea.vmem %s0, %s148
      %p150 = scmp.lt.s32.totalorder %s13, 1
      %s151 = scalar_select %p150, %s13, 1
      %s152 = scalar_lea.vmem %s1, %s151
      %p153 = scmp.lt.s32.totalorder %s13, 1
      %s154 = scalar_select %p153, %s13, 1
      %s155 = smul.addr %s154, 2
      %s156 = smul.addr %s155, 8
      %s157 = scalar_lea.vmem %s2, %s156
      %v159 = vld [vmem:[%s149] sm:$0xff]
      %v160 = vld [vmem:[%s149 + $0x8] sm:$0xff]
      %v161 = vld [vmem:[%s149 + $0x10] sm:$0xff]
      %v162 = vld [vmem:[%s149 + $0x18] sm:$0xff]
      %v163 = vld [vmem:[%s149 + $0x20] sm:$0xff]
      %v164 = vld [vmem:[%s149 + $0x28] sm:$0xff]
      %167 = vrot.lane.b32.xlu0 %v159, 96
      %v168 = vpop.permute.xlu0 %167
      %169 = vrot.lane.b32.xlu0 %v162, 96
      %v170 = vpop.permute.xlu0 %169
      %173 = vrot.lane.b32.xlu0 %v159, 64
      %v174 = vpop.permute.xlu0 %173
      %175 = vrot.lane.b32.xlu0 %v162, 64
      %v176 = vpop.permute.xlu0 %175
      %179 = vrot.lane.b32.xlu0 %v159, 32
      %v180 = vpop.permute.xlu0 %179
      %181 = vrot.lane.b32.xlu0 %v162, 32
      %v182 = vpop.permute.xlu0 %181
      %v185 = vcombine.low %v159, %v174
      %v186 = vcombine.high %v159, %v174
      %v188 = vunpack.c.l.s4 1983009808
      %v189 = vunpack.c.0.s8 %v188
      %v190 = vlaneseq
      %v191 = vshrl.u32 %v190, 7
      %v192 = vsub.s32 %v189, %v191
      %v193 = vrot.slane %v185, %v192
      %v195 = vunpack.c.l.s4 1983009808
      %v196 = vunpack.c.0.s8 %v195
      %v197 = vlaneseq
      %v198 = vshrl.u32 %v197, 7
      %v199 = vsub.s32 %v196, %v198
      %v200 = vrot.slane %v186, %v199
      %v201 = vcombine.low %v168, %v180
      %v202 = vcombine.high %v168, %v180
      %v204 = vunpack.c.l.s4 1983009808
      %v205 = vunpack.c.0.s8 %v204
      %v206 = vlaneseq
      %v207 = vshrl.u32 %v206, 7
      %v208 = vsub.s32 %v205, %v207
      %v209 = vrot.slane %v201, %v208
      %v211 = vunpack.c.l.s4 1983009808
      %v212 = vunpack.c.0.s8 %v211
      %v213 = vlaneseq
      %v214 = vshrl.u32 %v213, 7
      %v215 = vsub.s32 %v212, %v214
      %v216 = vrot.slane %v202, %v215
      %v217 = vcombine.low %v193, %v209
      %v218 = vcombine.high %v193, %v209
      %v220 = vunpack.c.l.s4 1934713408
      %v221 = vunpack.c.0.s8 %v220
      %v222 = vlaneseq
      %v223 = vshrl.u32 %v222, 7
      %v224 = vsub.s32 %v221, %v223
      %v225 = vrot.slane %v217, %v224
      %v227 = vunpack.c.l.s4 1934713408
      %v228 = vunpack.c.0.s8 %v227
      %v229 = vlaneseq
      %v230 = vshrl.u32 %v229, 7
      %v231 = vsub.s32 %v228, %v230
      %v232 = vrot.slane %v218, %v231
      %v233 = vcombine.low %v200, %v216
      %v234 = vcombine.high %v200, %v216
      %v236 = vunpack.c.l.s4 1934713408
      %v237 = vunpack.c.0.s8 %v236
      %v238 = vlaneseq
      %v239 = vshrl.u32 %v238, 7
      %v240 = vsub.s32 %v237, %v239
      %v241 = vrot.slane %v233, %v240
      %v243 = vunpack.c.l.s4 1934713408
      %v244 = vunpack.c.0.s8 %v243
      %v245 = vlaneseq
      %v246 = vshrl.u32 %v245, 7
      %v247 = vsub.s32 %v244, %v246
      %v248 = vrot.slane %v234, %v247
      %v249 = vcombine.high %v225, 0.0
      %v250 = vcombine.high %v232, 0.0
      %v251 = vcombine.high %v241, 0.0
      %v252 = vcombine.high %v248, 0.0
      %v253 = vcombine.low %v162, %v176
      %v254 = vcombine.high %v162, %v176
      %v256 = vunpack.c.l.s4 1983009808
      %v257 = vunpack.c.0.s8 %v256
      %v258 = vlaneseq
      %v259 = vshrl.u32 %v258, 7
      %v260 = vsub.s32 %v257, %v259
      %v261 = vrot.slane %v253, %v260
      %v263 = vunpack.c.l.s4 1983009808
      %v264 = vunpack.c.0.s8 %v263
      %v265 = vlaneseq
      %v266 = vshrl.u32 %v265, 7
      %v267 = vsub.s32 %v264, %v266
      %v268 = vrot.slane %v254, %v267
      %v269 = vcombine.low %v170, %v182
      %v270 = vcombine.high %v170, %v182
      %v272 = vunpack.c.l.s4 1983009808
      %v273 = vunpack.c.0.s8 %v272
      %v274 = vlaneseq
      %v275 = vshrl.u32 %v274, 7
      %v276 = vsub.s32 %v273, %v275
      %v277 = vrot.slane %v269, %v276
      %v279 = vunpack.c.l.s4 1983009808
      %v280 = vunpack.c.0.s8 %v279
      %v281 = vlaneseq
      %v282 = vshrl.u32 %v281, 7
      %v283 = vsub.s32 %v280, %v282
      %v284 = vrot.slane %v270, %v283
      %v285 = vcombine.low %v261, %v277
      %v286 = vcombine.high %v261, %v277
      %v288 = vunpack.c.l.s4 1934713408
      %v289 = vunpack.c.0.s8 %v288
      %v290 = vlaneseq
      %v291 = vshrl.u32 %v290, 7
      %v292 = vsub.s32 %v289, %v291
      %v293 = vrot.slane %v285, %v292
      %v295 = vunpack.c.l.s4 1934713408
      %v296 = vunpack.c.0.s8 %v295
      %v297 = vlaneseq
      %v298 = vshrl.u32 %v297, 7
      %v299 = vsub.s32 %v296, %v298
      %v300 = vrot.slane %v286, %v299
      %v301 = vcombine.low %v268, %v284
      %v302 = vcombine.high %v268, %v284
      %v304 = vunpack.c.l.s4 1934713408
      %v305 = vunpack.c.0.s8 %v304
      %v306 = vlaneseq
      %v307 = vshrl.u32 %v306, 7
      %v308 = vsub.s32 %v305, %v307
      %v309 = vrot.slane %v301, %v308
      %v311 = vunpack.c.l.s4 1934713408
      %v312 = vunpack.c.0.s8 %v311
      %v313 = vlaneseq
      %v314 = vshrl.u32 %v313, 7
      %v315 = vsub.s32 %v312, %v314
      %v316 = vrot.slane %v302, %v315
      %v317 = vcombine.high %v293, 0.0
      %v318 = vcombine.high %v300, 0.0
      %v319 = vcombine.high %v309, 0.0
      %v320 = vcombine.high %v316, 0.0
      %v321 = vcombine.low %v225, %v232
      %v323 = vunpack.c.l.s4 1983009808
      %v324 = vunpack.c.0.s8 %v323
      %v325 = vlaneseq
      %v326 = vshrl.u32 %v325, 7
      %v327 = vsub.s32 %v324, %v326
      %v328 = vrot.slane %v321, %v327
      %v329 = vcombine.low %v249, %v250
      %v331 = vunpack.c.l.s4 1983009808
      %v332 = vunpack.c.0.s8 %v331
      %v333 = vlaneseq
      %v334 = vshrl.u32 %v333, 7
      %v335 = vsub.s32 %v332, %v334
      %v336 = vrot.slane %v329, %v335
      %v337 = vcombine.low %v241, %v248
      %v339 = vunpack.c.l.s4 1983009808
      %v340 = vunpack.c.0.s8 %v339
      %v341 = vlaneseq
      %v342 = vshrl.u32 %v341, 7
      %v343 = vsub.s32 %v340, %v342
      %v344 = vrot.slane %v337, %v343
      %v345 = vcombine.low %v251, %v252
      %v347 = vunpack.c.l.s4 1983009808
      %v348 = vunpack.c.0.s8 %v347
      %v349 = vlaneseq
      %v350 = vshrl.u32 %v349, 7
      %v351 = vsub.s32 %v348, %v350
      %v352 = vrot.slane %v345, %v351
      %v353 = vcombine.low %v328, %v336
      %v354 = vcombine.high %v328, %v336
      %v356 = vunpack.c.l.s4 1934713408
      %v357 = vunpack.c.0.s8 %v356
      %v358 = vlaneseq
      %v359 = vshrl.u32 %v358, 7
      %v360 = vsub.s32 %v357, %v359
      %v361 = vrot.slane %v353, %v360
      %v363 = vunpack.c.l.s4 1934713408
      %v364 = vunpack.c.0.s8 %v363
      %v365 = vlaneseq
      %v366 = vshrl.u32 %v365, 7
      %v367 = vsub.s32 %v364, %v366
      %v368 = vrot.slane %v354, %v367
      %v369 = vcombine.low %v344, %v352
      %v370 = vcombine.high %v344, %v352
      %v372 = vunpack.c.l.s4 1934713408
      %v373 = vunpack.c.0.s8 %v372
      %v374 = vlaneseq
      %v375 = vshrl.u32 %v374, 7
      %v376 = vsub.s32 %v373, %v375
      %v377 = vrot.slane %v369, %v376
      %v379 = vunpack.c.l.s4 1934713408
      %v380 = vunpack.c.0.s8 %v379
      %v381 = vlaneseq
      %v382 = vshrl.u32 %v381, 7
      %v383 = vsub.s32 %v380, %v382
      %v384 = vrot.slane %v370, %v383
      %v385 = vcombine.low %v361, %v377
      %v386 = vcombine.high %v361, %v377
      %v387 = vcombine.low %v368, %v384
      %v388 = vcombine.high %v368, %v384
      %v389 = vcombine.low %v293, %v300
      %v391 = vunpack.c.l.s4 1983009808
      %v392 = vunpack.c.0.s8 %v391
      %v393 = vlaneseq
      %v394 = vshrl.u32 %v393, 7
      %v395 = vsub.s32 %v392, %v394
      %v396 = vrot.slane %v389, %v395
      %v397 = vcombine.low %v317, %v318
      %v399 = vunpack.c.l.s4 1983009808
      %v400 = vunpack.c.0.s8 %v399
      %v401 = vlaneseq
      %v402 = vshrl.u32 %v401, 7
      %v403 = vsub.s32 %v400, %v402
      %v404 = vrot.slane %v397, %v403
      %v405 = vcombine.low %v309, %v316
      %v407 = vunpack.c.l.s4 1983009808
      %v408 = vunpack.c.0.s8 %v407
      %v409 = vlaneseq
      %v410 = vshrl.u32 %v409, 7
      %v411 = vsub.s32 %v408, %v410
      %v412 = vrot.slane %v405, %v411
      %v413 = vcombine.low %v319, %v320
      %v415 = vunpack.c.l.s4 1983009808
      %v416 = vunpack.c.0.s8 %v415
      %v417 = vlaneseq
      %v418 = vshrl.u32 %v417, 7
      %v419 = vsub.s32 %v416, %v418
      %v420 = vrot.slane %v413, %v419
      %v421 = vcombine.low %v396, %v404
      %v422 = vcombine.high %v396, %v404
      %v424 = vunpack.c.l.s4 1934713408
      %v425 = vunpack.c.0.s8 %v424
      %v426 = vlaneseq
      %v427 = vshrl.u32 %v426, 7
      %v428 = vsub.s32 %v425, %v427
      %v429 = vrot.slane %v421, %v428
      %v431 = vunpack.c.l.s4 1934713408
      %v432 = vunpack.c.0.s8 %v431
      %v433 = vlaneseq
      %v434 = vshrl.u32 %v433, 7
      %v435 = vsub.s32 %v432, %v434
      %v436 = vrot.slane %v422, %v435
      %v437 = vcombine.low %v412, %v420
      %v438 = vcombine.high %v412, %v420
      %v440 = vunpack.c.l.s4 1934713408
      %v441 = vunpack.c.0.s8 %v440
      %v442 = vlaneseq
      %v443 = vshrl.u32 %v442, 7
      %v444 = vsub.s32 %v441, %v443
      %v445 = vrot.slane %v437, %v444
      %v447 = vunpack.c.l.s4 1934713408
      %v448 = vunpack.c.0.s8 %v447
      %v449 = vlaneseq
      %v450 = vshrl.u32 %v449, 7
      %v451 = vsub.s32 %v448, %v450
      %v452 = vrot.slane %v438, %v451
      %v453 = vcombine.low %v429, %v445
      %v454 = vcombine.high %v429, %v445
      %v455 = vcombine.low %v436, %v452
      %v456 = vcombine.high %v436, %v452
      %459 = vrot.lane.b32.xlu0 %v160, 96
      %v460 = vpop.permute.xlu0 %459
      %461 = vrot.lane.b32.xlu0 %v163, 96
      %v462 = vpop.permute.xlu0 %461
      %465 = vrot.lane.b32.xlu0 %v160, 64
      %v466 = vpop.permute.xlu0 %465
      %467 = vrot.lane.b32.xlu0 %v163, 64
      %v468 = vpop.permute.xlu0 %467
      %471 = vrot.lane.b32.xlu0 %v160, 32
      %v472 = vpop.permute.xlu0 %471
      %473 = vrot.lane.b32.xlu0 %v163, 32
      %v474 = vpop.permute.xlu0 %473
      %v477 = vcombine.low %v160, %v466
      %v478 = vcombine.high %v160, %v466
      %v480 = vunpack.c.l.s4 1983009808
      %v481 = vunpack.c.0.s8 %v480
      %v482 = vlaneseq
      %v483 = vshrl.u32 %v482, 7
      %v484 = vsub.s32 %v481, %v483
      %v485 = vrot.slane %v477, %v484
      %v487 = vunpack.c.l.s4 1983009808
      %v488 = vunpack.c.0.s8 %v487
      %v489 = vlaneseq
      %v490 = vshrl.u32 %v489, 7
      %v491 = vsub.s32 %v488, %v490
      %v492 = vrot.slane %v478, %v491
      %v493 = vcombine.low %v460, %v472
      %v494 = vcombine.high %v460, %v472
      %v496 = vunpack.c.l.s4 1983009808
      %v497 = vunpack.c.0.s8 %v496
      %v498 = vlaneseq
      %v499 = vshrl.u32 %v498, 7
      %v500 = vsub.s32 %v497, %v499
      %v501 = vrot.slane %v493, %v500
      %v503 = vunpack.c.l.s4 1983009808
      %v504 = vunpack.c.0.s8 %v503
      %v505 = vlaneseq
      %v506 = vshrl.u32 %v505, 7
      %v507 = vsub.s32 %v504, %v506
      %v508 = vrot.slane %v494, %v507
      %v509 = vcombine.low %v485, %v501
      %v510 = vcombine.high %v485, %v501
      %v512 = vunpack.c.l.s4 1934713408
      %v513 = vunpack.c.0.s8 %v512
      %v514 = vlaneseq
      %v515 = vshrl.u32 %v514, 7
      %v516 = vsub.s32 %v513, %v515
      %v517 = vrot.slane %v509, %v516
      %v519 = vunpack.c.l.s4 1934713408
      %v520 = vunpack.c.0.s8 %v519
      %v521 = vlaneseq
      %v522 = vshrl.u32 %v521, 7
      %v523 = vsub.s32 %v520, %v522
      %v524 = vrot.slane %v510, %v523
      %v525 = vcombine.low %v492, %v508
      %v526 = vcombine.high %v492, %v508
      %v528 = vunpack.c.l.s4 1934713408
      %v529 = vunpack.c.0.s8 %v528
      %v530 = vlaneseq
      %v531 = vshrl.u32 %v530, 7
      %v532 = vsub.s32 %v529, %v531
      %v533 = vrot.slane %v525, %v532
      %v535 = vunpack.c.l.s4 1934713408
      %v536 = vunpack.c.0.s8 %v535
      %v537 = vlaneseq
      %v538 = vshrl.u32 %v537, 7
      %v539 = vsub.s32 %v536, %v538
      %v540 = vrot.slane %v526, %v539
      %v541 = vcombine.high %v517, 0.0
      %v542 = vcombine.high %v524, 0.0
      %v543 = vcombine.high %v533, 0.0
      %v544 = vcombine.high %v540, 0.0
      %v545 = vcombine.low %v163, %v468
      %v546 = vcombine.high %v163, %v468
      %v548 = vunpack.c.l.s4 1983009808
      %v549 = vunpack.c.0.s8 %v548
      %v550 = vlaneseq
      %v551 = vshrl.u32 %v550, 7
      %v552 = vsub.s32 %v549, %v551
      %v553 = vrot.slane %v545, %v552
      %v555 = vunpack.c.l.s4 1983009808
      %v556 = vunpack.c.0.s8 %v555
      %v557 = vlaneseq
      %v558 = vshrl.u32 %v557, 7
      %v559 = vsub.s32 %v556, %v558
      %v560 = vrot.slane %v546, %v559
      %v561 = vcombine.low %v462, %v474
      %v562 = vcombine.high %v462, %v474
      %v564 = vunpack.c.l.s4 1983009808
      %v565 = vunpack.c.0.s8 %v564
      %v566 = vlaneseq
      %v567 = vshrl.u32 %v566, 7
      %v568 = vsub.s32 %v565, %v567
      %v569 = vrot.slane %v561, %v568
      %v571 = vunpack.c.l.s4 1983009808
      %v572 = vunpack.c.0.s8 %v571
      %v573 = vlaneseq
      %v574 = vshrl.u32 %v573, 7
      %v575 = vsub.s32 %v572, %v574
      %v576 = vrot.slane %v562, %v575
      %v577 = vcombine.low %v553, %v569
      %v578 = vcombine.high %v553, %v569
      %v580 = vunpack.c.l.s4 1934713408
      %v581 = vunpack.c.0.s8 %v580
      %v582 = vlaneseq
      %v583 = vshrl.u32 %v582, 7
      %v584 = vsub.s32 %v581, %v583
      %v585 = vrot.slane %v577, %v584
      %v587 = vunpack.c.l.s4 1934713408
      %v588 = vunpack.c.0.s8 %v587
      %v589 = vlaneseq
      %v590 = vshrl.u32 %v589, 7
      %v591 = vsub.s32 %v588, %v590
      %v592 = vrot.slane %v578, %v591
      %v593 = vcombine.low %v560, %v576
      %v594 = vcombine.high %v560, %v576
      %v596 = vunpack.c.l.s4 1934713408
      %v597 = vunpack.c.0.s8 %v596
      %v598 = vlaneseq
      %v599 = vshrl.u32 %v598, 7
      %v600 = vsub.s32 %v597, %v599
      %v601 = vrot.slane %v593, %v600
      %v603 = vunpack.c.l.s4 1934713408
      %v604 = vunpack.c.0.s8 %v603
      %v605 = vlaneseq
      %v606 = vshrl.u32 %v605, 7
      %v607 = vsub.s32 %v604, %v606
      %v608 = vrot.slane %v594, %v607
      %v609 = vcombine.high %v585, 0.0
      %v610 = vcombine.high %v592, 0.0
      %v611 = vcombine.high %v601, 0.0
      %v612 = vcombine.high %v608, 0.0
      %v613 = vcombine.low %v517, %v524
      %v615 = vunpack.c.l.s4 1983009808
      %v616 = vunpack.c.0.s8 %v615
      %v617 = vlaneseq
      %v618 = vshrl.u32 %v617, 7
      %v619 = vsub.s32 %v616, %v618
      %v620 = vrot.slane %v613, %v619
      %v621 = vcombine.low %v541, %v542
      %v623 = vunpack.c.l.s4 1983009808
      %v624 = vunpack.c.0.s8 %v623
      %v625 = vlaneseq
      %v626 = vshrl.u32 %v625, 7
      %v627 = vsub.s32 %v624, %v626
      %v628 = vrot.slane %v621, %v627
      %v629 = vcombine.low %v533, %v540
      %v631 = vunpack.c.l.s4 1983009808
      %v632 = vunpack.c.0.s8 %v631
      %v633 = vlaneseq
      %v634 = vshrl.u32 %v633, 7
      %v635 = vsub.s32 %v632, %v634
      %v636 = vrot.slane %v629, %v635
      %v637 = vcombine.low %v543, %v544
      %v639 = vunpack.c.l.s4 1983009808
      %v640 = vunpack.c.0.s8 %v639
      %v641 = vlaneseq
      %v642 = vshrl.u32 %v641, 7
      %v643 = vsub.s32 %v640, %v642
      %v644 = vrot.slane %v637, %v643
      %v645 = vcombine.low %v620, %v628
      %v646 = vcombine.high %v620, %v628
      %v648 = vunpack.c.l.s4 1934713408
      %v649 = vunpack.c.0.s8 %v648
      %v650 = vlaneseq
      %v651 = vshrl.u32 %v650, 7
      %v652 = vsub.s32 %v649, %v651
      %v653 = vrot.slane %v645, %v652
      %v655 = vunpack.c.l.s4 1934713408
      %v656 = vunpack.c.0.s8 %v655
      %v657 = vlaneseq
      %v658 = vshrl.u32 %v657, 7
      %v659 = vsub.s32 %v656, %v658
      %v660 = vrot.slane %v646, %v659
      %v661 = vcombine.low %v636, %v644
      %v662 = vcombine.high %v636, %v644
      %v664 = vunpack.c.l.s4 1934713408
      %v665 = vunpack.c.0.s8 %v664
      %v666 = vlaneseq
      %v667 = vshrl.u32 %v666, 7
      %v668 = vsub.s32 %v665, %v667
      %v669 = vrot.slane %v661, %v668
      %v671 = vunpack.c.l.s4 1934713408
      %v672 = vunpack.c.0.s8 %v671
      %v673 = vlaneseq
      %v674 = vshrl.u32 %v673, 7
      %v675 = vsub.s32 %v672, %v674
      %v676 = vrot.slane %v662, %v675
      %v677 = vcombine.low %v653, %v669
      %v678 = vcombine.high %v653, %v669
      %v679 = vcombine.low %v660, %v676
      %v680 = vcombine.high %v660, %v676
      %v681 = vcombine.low %v585, %v592
      %v683 = vunpack.c.l.s4 1983009808
      %v684 = vunpack.c.0.s8 %v683
      %v685 = vlaneseq
      %v686 = vshrl.u32 %v685, 7
      %v687 = vsub.s32 %v684, %v686
      %v688 = vrot.slane %v681, %v687
      %v689 = vcombine.low %v609, %v610
      %v691 = vunpack.c.l.s4 1983009808
      %v692 = vunpack.c.0.s8 %v691
      %v693 = vlaneseq
      %v694 = vshrl.u32 %v693, 7
      %v695 = vsub.s32 %v692, %v694
      %v696 = vrot.slane %v689, %v695
      %v697 = vcombine.low %v601, %v608
      %v699 = vunpack.c.l.s4 1983009808
      %v700 = vunpack.c.0.s8 %v699
      %v701 = vlaneseq
      %v702 = vshrl.u32 %v701, 7
      %v703 = vsub.s32 %v700, %v702
      %v704 = vrot.slane %v697, %v703
      %v705 = vcombine.low %v611, %v612
      %v707 = vunpack.c.l.s4 1983009808
      %v708 = vunpack.c.0.s8 %v707
      %v709 = vlaneseq
      %v710 = vshrl.u32 %v709, 7
      %v711 = vsub.s32 %v708, %v710
      %v712 = vrot.slane %v705, %v711
      %v713 = vcombine.low %v688, %v696
      %v714 = vcombine.high %v688, %v696
      %v716 = vunpack.c.l.s4 1934713408
      %v717 = vunpack.c.0.s8 %v716
      %v718 = vlaneseq
      %v719 = vshrl.u32 %v718, 7
      %v720 = vsub.s32 %v717, %v719
      %v721 = vrot.slane %v713, %v720
      %v723 = vunpack.c.l.s4 1934713408
      %v724 = vunpack.c.0.s8 %v723
      %v725 = vlaneseq
      %v726 = vshrl.u32 %v725, 7
      %v727 = vsub.s32 %v724, %v726
      %v728 = vrot.slane %v714, %v727
      %v729 = vcombine.low %v704, %v712
      %v730 = vcombine.high %v704, %v712
      %v732 = vunpack.c.l.s4 1934713408
      %v733 = vunpack.c.0.s8 %v732
      %v734 = vlaneseq
      %v735 = vshrl.u32 %v734, 7
      %v736 = vsub.s32 %v733, %v735
      %v737 = vrot.slane %v729, %v736
      %v739 = vunpack.c.l.s4 1934713408
      %v740 = vunpack.c.0.s8 %v739
      %v741 = vlaneseq
      %v742 = vshrl.u32 %v741, 7
      %v743 = vsub.s32 %v740, %v742
      %v744 = vrot.slane %v730, %v743
      %v745 = vcombine.low %v721, %v737
      %v746 = vcombine.high %v721, %v737
      %v747 = vcombine.low %v728, %v744
      %v748 = vcombine.high %v728, %v744
      %751 = vrot.lane.b32.xlu0 %v161, 96
      %v752 = vpop.permute.xlu0 %751
      %753 = vrot.lane.b32.xlu0 %v164, 96
      %v754 = vpop.permute.xlu0 %753
      %757 = vrot.lane.b32.xlu0 %v161, 64
      %v758 = vpop.permute.xlu0 %757
      %759 = vrot.lane.b32.xlu0 %v164, 64
      %v760 = vpop.permute.xlu0 %759
      %763 = vrot.lane.b32.xlu0 %v161, 32
      %v764 = vpop.permute.xlu0 %763
      %765 = vrot.lane.b32.xlu0 %v164, 32
      %v766 = vpop.permute.xlu0 %765
      %v769 = vcombine.low %v161, %v758
      %v770 = vcombine.high %v161, %v758
      %v772 = vunpack.c.l.s4 1983009808
      %v773 = vunpack.c.0.s8 %v772
      %v774 = vlaneseq
      %v775 = vshrl.u32 %v774, 7
      %v776 = vsub.s32 %v773, %v775
      %v777 = vrot.slane %v769, %v776
      %v779 = vunpack.c.l.s4 1983009808
      %v780 = vunpack.c.0.s8 %v779
      %v781 = vlaneseq
      %v782 = vshrl.u32 %v781, 7
      %v783 = vsub.s32 %v780, %v782
      %v784 = vrot.slane %v770, %v783
      %v785 = vcombine.low %v752, %v764
      %v786 = vcombine.high %v752, %v764
      %v788 = vunpack.c.l.s4 1983009808
      %v789 = vunpack.c.0.s8 %v788
      %v790 = vlaneseq
      %v791 = vshrl.u32 %v790, 7
      %v792 = vsub.s32 %v789, %v791
      %v793 = vrot.slane %v785, %v792
      %v795 = vunpack.c.l.s4 1983009808
      %v796 = vunpack.c.0.s8 %v795
      %v797 = vlaneseq
      %v798 = vshrl.u32 %v797, 7
      %v799 = vsub.s32 %v796, %v798
      %v800 = vrot.slane %v786, %v799
      %v801 = vcombine.low %v777, %v793
      %v802 = vcombine.high %v777, %v793
      %v804 = vunpack.c.l.s4 1934713408
      %v805 = vunpack.c.0.s8 %v804
      %v806 = vlaneseq
      %v807 = vshrl.u32 %v806, 7
      %v808 = vsub.s32 %v805, %v807
      %v809 = vrot.slane %v801, %v808
      %v811 = vunpack.c.l.s4 1934713408
      %v812 = vunpack.c.0.s8 %v811
      %v813 = vlaneseq
      %v814 = vshrl.u32 %v813, 7
      %v815 = vsub.s32 %v812, %v814
      %v816 = vrot.slane %v802, %v815
      %v817 = vcombine.low %v784, %v800
      %v818 = vcombine.high %v784, %v800
      %v820 = vunpack.c.l.s4 1934713408
      %v821 = vunpack.c.0.s8 %v820
      %v822 = vlaneseq
      %v823 = vshrl.u32 %v822, 7
      %v824 = vsub.s32 %v821, %v823
      %v825 = vrot.slane %v817, %v824
      %v827 = vunpack.c.l.s4 1934713408
      %v828 = vunpack.c.0.s8 %v827
      %v829 = vlaneseq
      %v830 = vshrl.u32 %v829, 7
      %v831 = vsub.s32 %v828, %v830
      %v832 = vrot.slane %v818, %v831
      %v833 = vcombine.high %v809, 0.0
      %v834 = vcombine.high %v816, 0.0
      %v835 = vcombine.high %v825, 0.0
      %v836 = vcombine.high %v832, 0.0
      %v837 = vcombine.low %v164, %v760
      %v838 = vcombine.high %v164, %v760
      %v840 = vunpack.c.l.s4 1983009808
      %v841 = vunpack.c.0.s8 %v840
      %v842 = vlaneseq
      %v843 = vshrl.u32 %v842, 7
      %v844 = vsub.s32 %v841, %v843
      %v845 = vrot.slane %v837, %v844
      %v847 = vunpack.c.l.s4 1983009808
      %v848 = vunpack.c.0.s8 %v847
      %v849 = vlaneseq
      %v850 = vshrl.u32 %v849, 7
      %v851 = vsub.s32 %v848, %v850
      %v852 = vrot.slane %v838, %v851
      %v853 = vcombine.low %v754, %v766
      %v854 = vcombine.high %v754, %v766
      %v856 = vunpack.c.l.s4 1983009808
      %v857 = vunpack.c.0.s8 %v856
      %v858 = vlaneseq
      %v859 = vshrl.u32 %v858, 7
      %v860 = vsub.s32 %v857, %v859
      %v861 = vrot.slane %v853, %v860
      %v863 = vunpack.c.l.s4 1983009808
      %v864 = vunpack.c.0.s8 %v863
      %v865 = vlaneseq
      %v866 = vshrl.u32 %v865, 7
      %v867 = vsub.s32 %v864, %v866
      %v868 = vrot.slane %v854, %v867
      %v869 = vcombine.low %v845, %v861
      %v870 = vcombine.high %v845, %v861
      %v872 = vunpack.c.l.s4 1934713408
      %v873 = vunpack.c.0.s8 %v872
      %v874 = vlaneseq
      %v875 = vshrl.u32 %v874, 7
      %v876 = vsub.s32 %v873, %v875
      %v877 = vrot.slane %v869, %v876
      %v879 = vunpack.c.l.s4 1934713408
      %v880 = vunpack.c.0.s8 %v879
      %v881 = vlaneseq
      %v882 = vshrl.u32 %v881, 7
      %v883 = vsub.s32 %v880, %v882
      %v884 = vrot.slane %v870, %v883
      %v885 = vcombine.low %v852, %v868
      %v886 = vcombine.high %v852, %v868
      %v888 = vunpack.c.l.s4 1934713408
      %v889 = vunpack.c.0.s8 %v888
      %v890 = vlaneseq
      %v891 = vshrl.u32 %v890, 7
      %v892 = vsub.s32 %v889, %v891
      %v893 = vrot.slane %v885, %v892
      %v895 = vunpack.c.l.s4 1934713408
      %v896 = vunpack.c.0.s8 %v895
      %v897 = vlaneseq
      %v898 = vshrl.u32 %v897, 7
      %v899 = vsub.s32 %v896, %v898
      %v900 = vrot.slane %v886, %v899
      %v901 = vcombine.high %v877, 0.0
      %v902 = vcombine.high %v884, 0.0
      %v903 = vcombine.high %v893, 0.0
      %v904 = vcombine.high %v900, 0.0
      %v905 = vcombine.low %v809, %v816
      %v907 = vunpack.c.l.s4 1983009808
      %v908 = vunpack.c.0.s8 %v907
      %v909 = vlaneseq
      %v910 = vshrl.u32 %v909, 7
      %v911 = vsub.s32 %v908, %v910
      %v912 = vrot.slane %v905, %v911
      %v913 = vcombine.low %v833, %v834
      %v915 = vunpack.c.l.s4 1983009808
      %v916 = vunpack.c.0.s8 %v915
      %v917 = vlaneseq
      %v918 = vshrl.u32 %v917, 7
      %v919 = vsub.s32 %v916, %v918
      %v920 = vrot.slane %v913, %v919
      %v921 = vcombine.low %v825, %v832
      %v923 = vunpack.c.l.s4 1983009808
      %v924 = vunpack.c.0.s8 %v923
      %v925 = vlaneseq
      %v926 = vshrl.u32 %v925, 7
      %v927 = vsub.s32 %v924, %v926
      %v928 = vrot.slane %v921, %v927
      %v929 = vcombine.low %v835, %v836
      %v931 = vunpack.c.l.s4 1983009808
      %v932 = vunpack.c.0.s8 %v931
      %v933 = vlaneseq
      %v934 = vshrl.u32 %v933, 7
      %v935 = vsub.s32 %v932, %v934
      %v936 = vrot.slane %v929, %v935
      %v937 = vcombine.low %v912, %v920
      %v938 = vcombine.high %v912, %v920
      %v940 = vunpack.c.l.s4 1934713408
      %v941 = vunpack.c.0.s8 %v940
      %v942 = vlaneseq
      %v943 = vshrl.u32 %v942, 7
      %v944 = vsub.s32 %v941, %v943
      %v945 = vrot.slane %v937, %v944
      %v947 = vunpack.c.l.s4 1934713408
      %v948 = vunpack.c.0.s8 %v947
      %v949 = vlaneseq
      %v950 = vshrl.u32 %v949, 7
      %v951 = vsub.s32 %v948, %v950
      %v952 = vrot.slane %v938, %v951
      %v953 = vcombine.low %v928, %v936
      %v954 = vcombine.high %v928, %v936
      %v956 = vunpack.c.l.s4 1934713408
      %v957 = vunpack.c.0.s8 %v956
      %v958 = vlaneseq
      %v959 = vshrl.u32 %v958, 7
      %v960 = vsub.s32 %v957, %v959
      %v961 = vrot.slane %v953, %v960
      %v963 = vunpack.c.l.s4 1934713408
      %v964 = vunpack.c.0.s8 %v963
      %v965 = vlaneseq
      %v966 = vshrl.u32 %v965, 7
      %v967 = vsub.s32 %v964, %v966
      %v968 = vrot.slane %v954, %v967
      %v969 = vcombine.low %v945, %v961
      %v970 = vcombine.high %v945, %v961
      %v971 = vcombine.low %v952, %v968
      %v972 = vcombine.high %v952, %v968
      %v973 = vcombine.low %v877, %v884
      %v975 = vunpack.c.l.s4 1983009808
      %v976 = vunpack.c.0.s8 %v975
      %v977 = vlaneseq
      %v978 = vshrl.u32 %v977, 7
      %v979 = vsub.s32 %v976, %v978
      %v980 = vrot.slane %v973, %v979
      %v981 = vcombine.low %v901, %v902
      %v983 = vunpack.c.l.s4 1983009808
      %v984 = vunpack.c.0.s8 %v983
      %v985 = vlaneseq
      %v986 = vshrl.u32 %v985, 7
      %v987 = vsub.s32 %v984, %v986
      %v988 = vrot.slane %v981, %v987
      %v989 = vcombine.low %v893, %v900
      %v991 = vunpack.c.l.s4 1983009808
      %v992 = vunpack.c.0.s8 %v991
      %v993 = vlaneseq
      %v994 = vshrl.u32 %v993, 7
      %v995 = vsub.s32 %v992, %v994
      %v996 = vrot.slane %v989, %v995
      %v997 = vcombine.low %v903, %v904
      %v999 = vunpack.c.l.s4 1983009808
      %v1000 = vunpack.c.0.s8 %v999
      %v1001 = vlaneseq
      %v1002 = vshrl.u32 %v1001, 7
      %v1003 = vsub.s32 %v1000, %v1002
      %v1004 = vrot.slane %v997, %v1003
      %v1005 = vcombine.low %v980, %v988
      %v1006 = vcombine.high %v980, %v988
      %v1008 = vunpack.c.l.s4 1934713408
      %v1009 = vunpack.c.0.s8 %v1008
      %v1010 = vlaneseq
      %v1011 = vshrl.u32 %v1010, 7
      %v1012 = vsub.s32 %v1009, %v1011
      %v1013 = vrot.slane %v1005, %v1012
      %v1015 = vunpack.c.l.s4 1934713408
      %v1016 = vunpack.c.0.s8 %v1015
      %v1017 = vlaneseq
      %v1018 = vshrl.u32 %v1017, 7
      %v1019 = vsub.s32 %v1016, %v1018
      %v1020 = vrot.slane %v1006, %v1019
      %v1021 = vcombine.low %v996, %v1004
      %v1022 = vcombine.high %v996, %v1004
      %v1024 = vunpack.c.l.s4 1934713408
      %v1025 = vunpack.c.0.s8 %v1024
      %v1026 = vlaneseq
      %v1027 = vshrl.u32 %v1026, 7
      %v1028 = vsub.s32 %v1025, %v1027
      %v1029 = vrot.slane %v1021, %v1028
      %v1031 = vunpack.c.l.s4 1934713408
      %v1032 = vunpack.c.0.s8 %v1031
      %v1033 = vlaneseq
      %v1034 = vshrl.u32 %v1033, 7
      %v1035 = vsub.s32 %v1032, %v1034
      %v1036 = vrot.slane %v1022, %v1035
      %v1037 = vcombine.low %v1013, %v1029
      %v1038 = vcombine.high %v1013, %v1029
      %v1039 = vcombine.low %v1020, %v1036
      %v1040 = vcombine.high %v1020, %v1036
      %v1041 = vpack.c.bf16 %v453, %v385
      %v1042 = vpack.c.bf16 %v454, %v386
      %v1043 = vpack.c.bf16 %v455, %v387
      %v1044 = vpack.c.bf16 %v456, %v388
      %v1045 = vpack.c.bf16 %v745, %v677
      %v1046 = vpack.c.bf16 %v746, %v678
      %v1047 = vpack.c.bf16 %v747, %v679
      %v1048 = vpack.c.bf16 %v748, %v680
      %vm1049 = vcmask 261120
      %v1051 = vsel %vm1049, %v1041, 0
      %v1054 = vsel %vm1049, %v1045, 0
      %1056 = vmatprep.subr.bf16.mxu0 0
      %1057 = vmatpush1.bf16.xpose.msra.mxu0 %v1054
      %1058 = vmatprep.subr.bf16.mxu0 0
      %1059 = vmatpush1.bf16.xpose.msra.mxu0 0
      %1060 = vmatprep.subr.bf16.mxu0 0
      %1061 = vmatpush1.bf16.xpose.msra.mxu0 0
      %1062 = vmatprep.subr.bf16.mxu0 0
      %1063 = vmatpush1.bf16.xpose.msra.mxu0 0
      %1064 = vmatprep.subr.bf16.mxu0 0
      %1065 = vmatpush1.bf16.xpose.msra.mxu0 0
      %1066 = vmatprep.subr.bf16.mxu0 0
      %1067 = vmatpush1.bf16.xpose.msra.mxu0 0
      %1068 = vmatprep.subr.bf16.mxu0 0
      %1069 = vmatpush1.bf16.xpose.msra.mxu0 0
      %1070 = vmatprep.subr.bf16.mxu0 0
      %1071 = vmatpush1.bf16.xpose.msra.mxu0 0
      %1072 = vmatprep.subr.bf16.mxu0 0
      %1073 = vmatpush1.bf16.xpose.msra.mxu0 0
      %1074 = vmatprep.subr.bf16.mxu0 0
      %1075 = vmatpush1.bf16.xpose.msra.mxu0 0
      %1076 = vmatprep.subr.bf16.mxu0 0
      %1077 = vmatpush1.bf16.xpose.msra.mxu0 0
      %1078 = vmatprep.subr.bf16.mxu0 0
      %1079 = vmatpush1.bf16.xpose.msra.mxu0 0
      %1080 = vmatprep.subr.bf16.mxu0 0
      %1081 = vmatpush1.bf16.xpose.msra.mxu0 0
      %1082 = vmatprep.subr.bf16.mxu0 0
      %1083 = vmatpush1.bf16.xpose.msra.mxu0 0
      %1084 = vmatprep.subr.bf16.mxu0 0
      %1085 = vmatpush1.bf16.xpose.msra.mxu0 0
      %1086 = vmatprep.subr.bf16.mxu0 0
      %1087 = vmatpush1.bf16.xpose.msra.mxu0 0
      %1088 = vmatprep.mubr.bf16.mxu0 0
      %1089 = vmatmul.mubr.bf16.gmra.mrb[0].mxu0 %v1051
      %v1090 = vpop.f32.mrb[0].mxu0
      %v1091 = vadd.f32 0.0, %v1090
      %v1092 = vpop.f32.mrb[0].mxu0
      %v1093 = vpop.f32.mrb[0].mxu0
      %v1094 = vadd.f32 0.0, %v1093
      %v1095 = vpop.f32.mrb[0].mxu0
      %1096 = vdwg.mxu0
      %v1098 = vsel %vm1049, %v1042, 0
      %v1101 = vsel %vm1049, %v1046, 0
      %1103 = vmatprep.subr.bf16.mxu0 0
      %1104 = vmatpush1.bf16.xpose.msra.mxu0 %v1101
      %1105 = vmatprep.subr.bf16.mxu0 0
      %1106 = vmatpush1.bf16.xpose.msra.mxu0 0
      %1107 = vmatprep.subr.bf16.mxu0 0
      %1108 = vmatpush1.bf16.xpose.msra.mxu0 0
      %1109 = vmatprep.subr.bf16.mxu0 0
      %1110 = vmatpush1.bf16.xpose.msra.mxu0 0
      %1111 = vmatprep.subr.bf16.mxu0 0
      %1112 = vmatpush1.bf16.xpose.msra.mxu0 0
      %1113 = vmatprep.subr.bf16.mxu0 0
      %1114 = vmatpush1.bf16.xpose.msra.mxu0 0
      %1115 = vmatprep.subr.bf16.mxu0 0
      %1116 = vmatpush1.bf16.xpose.msra.mxu0 0
      %1117 = vmatprep.subr.bf16.mxu0 0
      %1118 = vmatpush1.bf16.xpose.msra.mxu0 0
      %1119 = vmatprep.subr.bf16.mxu0 0
      %1120 = vmatpush1.bf16.xpose.msra.mxu0 0
      %1121 = vmatprep.subr.bf16.mxu0 0
      %1122 = vmatpush1.bf16.xpose.msra.mxu0 0
      %1123 = vmatprep.subr.bf16.mxu0 0
      %1124 = vmatpush1.bf16.xpose.msra.mxu0 0
      %1125 = vmatprep.subr.bf16.mxu0 0
      %1126 = vmatpush1.bf16.xpose.msra.mxu0 0
      %1127 = vmatprep.subr.bf16.mxu0 0
      %1128 = vmatpush1.bf16.xpose.msra.mxu0 0
      %1129 = vmatprep.subr.bf16.mxu0 0
      %1130 = vmatpush1.bf16.xpose.msra.mxu0 0
      %1131 = vmatprep.subr.bf16.mxu0 0
      %1132 = vmatpush1.bf16.xpose.msra.mxu0 0
      %1133 = vmatprep.subr.bf16.mxu0 0
      %1134 = vmatpush1.bf16.xpose.msra.mxu0 0
      %1135 = vmatprep.mubr.bf16.mxu0 0
      %1136 = vmatmul.mubr.bf16.gmra.mrb[0].mxu0 %v1098
      %v1137 = vpop.f32.mrb[0].mxu0
      %v1138 = vadd.f32 0.0, %v1137
      %v1139 = vpop.f32.mrb[0].mxu0
      %v1140 = vpop.f32.mrb[0].mxu0
      %v1141 = vadd.f32 0.0, %v1140
      %v1142 = vpop.f32.mrb[0].mxu0
      %1143 = vdwg.mxu0
      %v1145 = vsel %vm1049, %v1043, 0
      %v1148 = vsel %vm1049, %v1047, 0
      %1150 = vmatprep.subr.bf16.mxu0 0
      %1151 = vmatpush1.bf16.xpose.msra.mxu0 %v1148
      %1152 = vmatprep.subr.bf16.mxu0 0
      %1153 = vmatpush1.bf16.xpose.msra.mxu0 0
      %1154 = vmatprep.subr.bf16.mxu0 0
      %1155 = vmatpush1.bf16.xpose.msra.mxu0 0
      %1156 = vmatprep.subr.bf16.mxu0 0
      %1157 = vmatpush1.bf16.xpose.msra.mxu0 0
      %1158 = vmatprep.subr.bf16.mxu0 0
      %1159 = vmatpush1.bf16.xpose.msra.mxu0 0
      %1160 = vmatprep.subr.bf16.mxu0 0
      %1161 = vmatpush1.bf16.xpose.msra.mxu0 0
      %1162 = vmatprep.subr.bf16.mxu0 0
      %1163 = vmatpush1.bf16.xpose.msra.mxu0 0
      %1164 = vmatprep.subr.bf16.mxu0 0
      %1165 = vmatpush1.bf16.xpose.msra.mxu0 0
      %1166 = vmatprep.subr.bf16.mxu0 0
      %1167 = vmatpush1.bf16.xpose.msra.mxu0 0
      %1168 = vmatprep.subr.bf16.mxu0 0
      %1169 = vmatpush1.bf16.xpose.msra.mxu0 0
      %1170 = vmatprep.subr.bf16.mxu0 0
      %1171 = vmatpush1.bf16.xpose.msra.mxu0 0
      %1172 = vmatprep.subr.bf16.mxu0 0
      %1173 = vmatpush1.bf16.xpose.msra.mxu0 0
      %1174 = vmatprep.subr.bf16.mxu0 0
      %1175 = vmatpush1.bf16.xpose.msra.mxu0 0
      %1176 = vmatprep.subr.bf16.mxu0 0
      %1177 = vmatpush1.bf16.xpose.msra.mxu0 0
      %1178 = vmatprep.subr.bf16.mxu0 0
      %1179 = vmatpush1.bf16.xpose.msra.mxu0 0
      %1180 = vmatprep.subr.bf16.mxu0 0
      %1181 = vmatpush1.bf16.xpose.msra.mxu0 0
      %1182 = vmatprep.mubr.bf16.mxu0 0
      %1183 = vmatmul.mubr.bf16.gmra.mrb[0].mxu0 %v1145
      %v1184 = vpop.f32.mrb[0].mxu0
      %v1185 = vadd.f32 0.0, %v1184
      %v1186 = vpop.f32.mrb[0].mxu0
      %v1187 = vpop.f32.mrb[0].mxu0
      %v1188 = vadd.f32 0.0, %v1187
      %v1189 = vpop.f32.mrb[0].mxu0
      %1190 = vdwg.mxu0
      %v1192 = vsel %vm1049, %v1044, 0
      %v1195 = vsel %vm1049, %v1048, 0
      %1197 = vmatprep.subr.bf16.mxu0 0
      %1198 = vmatpush1.bf16.xpose.msra.mxu0 %v1195
      %1199 = vmatprep.subr.bf16.mxu0 0
      %1200 = vmatpush1.bf16.xpose.msra.mxu0 0
      %1201 = vmatprep.subr.bf16.mxu0 0
      %1202 = vmatpush1.bf16.xpose.msra.mxu0 0
      %1203 = vmatprep.subr.bf16.mxu0 0
      %1204 = vmatpush1.bf16.xpose.msra.mxu0 0
      %1205 = vmatprep.subr.bf16.mxu0 0
      %1206 = vmatpush1.bf16.xpose.msra.mxu0 0
      %1207 = vmatprep.subr.bf16.mxu0 0
      %1208 = vmatpush1.bf16.xpose.msra.mxu0 0
      %1209 = vmatprep.subr.bf16.mxu0 0
      %1210 = vmatpush1.bf16.xpose.msra.mxu0 0
      %1211 = vmatprep.subr.bf16.mxu0 0
      %1212 = vmatpush1.bf16.xpose.msra.mxu0 0
      %1213 = vmatprep.subr.bf16.mxu0 0
      %1214 = vmatpush1.bf16.xpose.msra.mxu0 0
      %1215 = vmatprep.subr.bf16.mxu0 0
      %1216 = vmatpush1.bf16.xpose.msra.mxu0 0
      %1217 = vmatprep.subr.bf16.mxu0 0
      %1218 = vmatpush1.bf16.xpose.msra.mxu0 0
      %1219 = vmatprep.subr.bf16.mxu0 0
      %1220 = vmatpush1.bf16.xpose.msra.mxu0 0
      %1221 = vmatprep.subr.bf16.mxu0 0
      %1222 = vmatpush1.bf16.xpose.msra.mxu0 0
      %1223 = vmatprep.subr.bf16.mxu0 0
      %1224 = vmatpush1.bf16.xpose.msra.mxu0 0
      %1225 = vmatprep.subr.bf16.mxu0 0
      %1226 = vmatpush1.bf16.xpose.msra.mxu0 0
      %1227 = vmatprep.subr.bf16.mxu0 0
      %1228 = vmatpush1.bf16.xpose.msra.mxu0 0
      %1229 = vmatprep.mubr.bf16.mxu0 0
      %1230 = vmatmul.mubr.bf16.gmra.mrb[0].mxu0 %v1192
      %v1231 = vpop.f32.mrb[0].mxu0
      %v1232 = vadd.f32 0.0, %v1231
      %v1233 = vpop.f32.mrb[0].mxu0
      %v1234 = vpop.f32.mrb[0].mxu0
      %v1235 = vadd.f32 0.0, %v1234
      %v1236 = vpop.f32.mrb[0].mxu0
      %1237 = vdwg.mxu0
      %v1238 = vmul.f32 %v1091, 0.17677669
      %v1239 = vmul.f32 %v1094, 0.17677669
      %v1240 = vmul.f32 %v1138, 0.17677669
      %v1241 = vmul.f32 %v1141, 0.17677669
      %v1242 = vmul.f32 %v1185, 0.17677669
      %v1243 = vmul.f32 %v1188, 0.17677669
      %v1244 = vmul.f32 %v1232, 0.17677669
      %v1245 = vmul.f32 %v1235, 0.17677669
      %v1246 = vlaneseq
      %v1247 = vshrl.u32 %v1246, 7
      %v1248 = vadd.s32 %v1247, 8
      %v1249 = vlaneseq
      %v1250 = vand.u32 %v1249, 127
      %vm1251 = vcmp.le.s32.totalorder %v1250, %v1247
      %vm1252 = vcmp.le.s32.totalorder %v1250, %v1248
      %v1253 = vsel %vm1251, 0.0, -1e+09
      %v1254 = vsel %vm1252, 0.0, -1e+09
      %v1255 = vld [vmem:[%s152] sm:$0x1]
      %v1257 = vlaneseq
      %v1258 = vshrl.u32 %v1257, 7
      %v1259 = vsub.s32 0, %v1258
      %v1260 = vrot.slane %v1255, %v1259
      %v1262 = vadd.f32 %v1253, %v1260
      %v1263 = vadd.f32 %v1254, %v1260
      %v1264 = vadd.f32 %v1238, %v1262
      %v1265 = vadd.f32 %v1239, %v1263
      %v1266 = vadd.f32 %v1240, %v1262
      %v1267 = vadd.f32 %v1241, %v1263
      %v1268 = vadd.f32 %v1242, %v1262
      %v1269 = vadd.f32 %v1243, %v1263
      %v1270 = vadd.f32 %v1244, %v1262
      %v1271 = vadd.f32 %v1245, %v1263
      %vm1272 = vcmask 130048
      %v1273 = vsel %vm1272, %v1264, -inf
      %1274 = vmax.xlane.f32.xlu0 %v1273
      %v1275 = vpop.xlane.xlu0 %1274
      %v1276 = vsel %vm1272, %v1265, -inf
      %1277 = vmax.xlane.f32.xlu0 %v1276
      %v1278 = vpop.xlane.xlu0 %1277
      %v1279 = vsel %vm1272, %v1266, -inf
      %1280 = vmax.xlane.f32.xlu0 %v1279
      %v1281 = vpop.xlane.xlu0 %1280
      %v1282 = vsel %vm1272, %v1267, -inf
      %1283 = vmax.xlane.f32.xlu0 %v1282
      %v1284 = vpop.xlane.xlu0 %1283
      %v1285 = vsel %vm1272, %v1268, -inf
      %1286 = vmax.xlane.f32.xlu0 %v1285
      %v1287 = vpop.xlane.xlu0 %1286
      %v1288 = vsel %vm1272, %v1269, -inf
      %1289 = vmax.xlane.f32.xlu0 %v1288
      %v1290 = vpop.xlane.xlu0 %1289
      %v1291 = vsel %vm1272, %v1270, -inf
      %1292 = vmax.xlane.f32.xlu0 %v1291
      %v1293 = vpop.xlane.xlu0 %1292
      %v1294 = vsel %vm1272, %v1271, -inf
      %1295 = vmax.xlane.f32.xlu0 %v1294
      %v1296 = vpop.xlane.xlu0 %1295
      %v1297 = vsub.f32 %v1264, %v1275
      %v1298 = vsub.f32 %v1265, %v1278
      %v1299 = vsub.f32 %v1266, %v1281
      %v1300 = vsub.f32 %v1267, %v1284
      %v1301 = vsub.f32 %v1268, %v1287
      %v1302 = vsub.f32 %v1269, %v1290
      %v1303 = vsub.f32 %v1270, %v1293
      %v1304 = vsub.f32 %v1271, %v1296
      %v1305 = vmul.f32 %v1297, 1.442695
      %v1306 = vpow.pop %v1305
      %v1307 = vmul.f32 %v1298, 1.442695
      %v1308 = vpow.pop %v1307
      %v1309 = vmul.f32 %v1299, 1.442695
      %v1310 = vpow.pop %v1309
      %v1311 = vmul.f32 %v1300, 1.442695
      %v1312 = vpow.pop %v1311
      %v1313 = vmul.f32 %v1301, 1.442695
      %v1314 = vpow.pop %v1313
      %v1315 = vmul.f32 %v1302, 1.442695
      %v1316 = vpow.pop %v1315
      %v1317 = vmul.f32 %v1303, 1.442695
      %v1318 = vpow.pop %v1317
      %v1319 = vmul.f32 %v1304, 1.442695
      %v1320 = vpow.pop %v1319
      %v1321 = vsel %vm1272, %v1306, 0.0
      %1322 = vadd.xlane.f32.xlu0 %v1321
      %v1323 = vpop.xlane.xlu0 %1322
      %v1324 = vsel %vm1272, %v1308, 0.0
      %1325 = vadd.xlane.f32.xlu0 %v1324
      %v1326 = vpop.xlane.xlu0 %1325
      %v1327 = vsel %vm1272, %v1310, 0.0
      %1328 = vadd.xlane.f32.xlu0 %v1327
      %v1329 = vpop.xlane.xlu0 %1328
      %v1330 = vsel %vm1272, %v1312, 0.0
      %1331 = vadd.xlane.f32.xlu0 %v1330
      %v1332 = vpop.xlane.xlu0 %1331
      %v1333 = vsel %vm1272, %v1314, 0.0
      %1334 = vadd.xlane.f32.xlu0 %v1333
      %v1335 = vpop.xlane.xlu0 %1334
      %v1336 = vsel %vm1272, %v1316, 0.0
      %1337 = vadd.xlane.f32.xlu0 %v1336
      %v1338 = vpop.xlane.xlu0 %1337
      %v1339 = vsel %vm1272, %v1318, 0.0
      %1340 = vadd.xlane.f32.xlu0 %v1339
      %v1341 = vpop.xlane.xlu0 %1340
      %v1342 = vsel %vm1272, %v1320, 0.0
      %1343 = vadd.xlane.f32.xlu0 %v1342
      %v1344 = vpop.xlane.xlu0 %1343
      %v1345 = vrcp.pop %v1323
      %v1346 = vrcp.pop %v1326
      %v1347 = vrcp.pop %v1329
      %v1348 = vrcp.pop %v1332
      %v1349 = vrcp.pop %v1335
      %v1350 = vrcp.pop %v1338
      %v1351 = vrcp.pop %v1341
      %v1352 = vrcp.pop %v1344
      %v1353 = vmul.f32 %v1306, %v1345
      %v1354 = vmul.f32 %v1308, %v1346
      %v1355 = vmul.f32 %v1310, %v1347
      %v1356 = vmul.f32 %v1312, %v1348
      %v1357 = vmul.f32 %v1314, %v1349
      %v1358 = vmul.f32 %v1316, %v1350
      %v1359 = vmul.f32 %v1318, %v1351
      %v1360 = vmul.f32 %v1320, %v1352
      %v1361 = vpack.c.bf16 %v1354, %v1353
      %v1362 = vpack.c.bf16 %v1356, %v1355
      %v1363 = vpack.c.bf16 %v1358, %v1357
      %v1364 = vpack.c.bf16 %v1360, %v1359
      %v1365 = vpack.c.bf16 %v1037, %v969
      %v1366 = vpack.c.bf16 %v1038, %v970
      %v1367 = vpack.c.bf16 %v1039, %v971
      %v1368 = vpack.c.bf16 %v1040, %v972
      %v1370 = vsel %vm1272, %v1361, 0
      %1372 = vmatprep.subr.bf16.mxu0 0
      %1373 = vmatpush1.bf16.msra.mxu0 %v1365
      %1374 = vmatprep.subr.bf16.mxu0 0
      %1375 = vmatpush1.bf16.msra.mxu0 0
      %1376 = vmatprep.subr.bf16.mxu0 0
      %1377 = vmatpush1.bf16.msra.mxu0 0
      %1378 = vmatprep.subr.bf16.mxu0 0
      %1379 = vmatpush1.bf16.msra.mxu0 0
      %1380 = vmatprep.subr.bf16.mxu0 0
      %1381 = vmatpush1.bf16.msra.mxu0 0
      %1382 = vmatprep.subr.bf16.mxu0 0
      %1383 = vmatpush1.bf16.msra.mxu0 0
      %1384 = vmatprep.subr.bf16.mxu0 0
      %1385 = vmatpush1.bf16.msra.mxu0 0
      %1386 = vmatprep.subr.bf16.mxu0 0
      %1387 = vmatpush1.bf16.msra.mxu0 0
      %1388 = vmatprep.subr.bf16.mxu0 0
      %1389 = vmatpush1.bf16.msra.mxu0 0
      %1390 = vmatprep.subr.bf16.mxu0 0
      %1391 = vmatpush1.bf16.msra.mxu0 0
      %1392 = vmatprep.subr.bf16.mxu0 0
      %1393 = vmatpush1.bf16.msra.mxu0 0
      %1394 = vmatprep.subr.bf16.mxu0 0
      %1395 = vmatpush1.bf16.msra.mxu0 0
      %1396 = vmatprep.subr.bf16.mxu0 0
      %1397 = vmatpush1.bf16.msra.mxu0 0
      %1398 = vmatprep.subr.bf16.mxu0 0
      %1399 = vmatpush1.bf16.msra.mxu0 0
      %1400 = vmatprep.subr.bf16.mxu0 0
      %1401 = vmatpush1.bf16.msra.mxu0 0
      %1402 = vmatprep.subr.bf16.mxu0 0
      %1403 = vmatpush1.bf16.msra.mxu0 0
      %1404 = vmatprep.mubr.bf16.mxu0 0
      %1405 = vmatmul.mubr.bf16.gmra.mrb[0].mxu0 %v1370
      %v1406 = vpop.f32.mrb[0].mxu0
      %v1407 = vadd.f32 0.0, %v1406
      %v1408 = vpop.f32.mrb[0].mxu0
      %v1409 = vpop.f32.mrb[0].mxu0
      %v1410 = vadd.f32 0.0, %v1409
      %v1411 = vpop.f32.mrb[0].mxu0
      %1412 = vdwg.mxu0
      %v1414 = vsel %vm1272, %v1362, 0
      %1416 = vmatprep.subr.bf16.mxu0 0
      %1417 = vmatpush1.bf16.msra.mxu0 %v1366
      %1418 = vmatprep.subr.bf16.mxu0 0
      %1419 = vmatpush1.bf16.msra.mxu0 0
      %1420 = vmatprep.subr.bf16.mxu0 0
      %1421 = vmatpush1.bf16.msra.mxu0 0
      %1422 = vmatprep.subr.bf16.mxu0 0
      %1423 = vmatpush1.bf16.msra.mxu0 0
      %1424 = vmatprep.subr.bf16.mxu0 0
      %1425 = vmatpush1.bf16.msra.mxu0 0
      %1426 = vmatprep.subr.bf16.mxu0 0
      %1427 = vmatpush1.bf16.msra.mxu0 0
      %1428 = vmatprep.subr.bf16.mxu0 0
      %1429 = vmatpush1.bf16.msra.mxu0 0
      %1430 = vmatprep.subr.bf16.mxu0 0
      %1431 = vmatpush1.bf16.msra.mxu0 0
      %1432 = vmatprep.subr.bf16.mxu0 0
      %1433 = vmatpush1.bf16.msra.mxu0 0
      %1434 = vmatprep.subr.bf16.mxu0 0
      %1435 = vmatpush1.bf16.msra.mxu0 0
      %1436 = vmatprep.subr.bf16.mxu0 0
      %1437 = vmatpush1.bf16.msra.mxu0 0
      %1438 = vmatprep.subr.bf16.mxu0 0
      %1439 = vmatpush1.bf16.msra.mxu0 0
      %1440 = vmatprep.subr.bf16.mxu0 0
      %1441 = vmatpush1.bf16.msra.mxu0 0
      %1442 = vmatprep.subr.bf16.mxu0 0
      %1443 = vmatpush1.bf16.msra.mxu0 0
      %1444 = vmatprep.subr.bf16.mxu0 0
      %1445 = vmatpush1.bf16.msra.mxu0 0
      %1446 = vmatprep.subr.bf16.mxu0 0
      %1447 = vmatpush1.bf16.msra.mxu0 0
      %1448 = vmatprep.mubr.bf16.mxu0 0
      %1449 = vmatmul.mubr.bf16.gmra.mrb[0].mxu0 %v1414
      %v1450 = vpop.f32.mrb[0].mxu0
      %v1451 = vadd.f32 0.0, %v1450
      %v1452 = vpop.f32.mrb[0].mxu0
      %v1453 = vpop.f32.mrb[0].mxu0
      %v1454 = vadd.f32 0.0, %v1453
      %v1455 = vpop.f32.mrb[0].mxu0
      %1456 = vdwg.mxu0
      %v1458 = vsel %vm1272, %v1363, 0
      %1460 = vmatprep.subr.bf16.mxu0 0
      %1461 = vmatpush1.bf16.msra.mxu0 %v1367
      %1462 = vmatprep.subr.bf16.mxu0 0
      %1463 = vmatpush1.bf16.msra.mxu0 0
      %1464 = vmatprep.subr.bf16.mxu0 0
      %1465 = vmatpush1.bf16.msra.mxu0 0
      %1466 = vmatprep.subr.bf16.mxu0 0
      %1467 = vmatpush1.bf16.msra.mxu0 0
      %1468 = vmatprep.subr.bf16.mxu0 0
      %1469 = vmatpush1.bf16.msra.mxu0 0
      %1470 = vmatprep.subr.bf16.mxu0 0
      %1471 = vmatpush1.bf16.msra.mxu0 0
      %1472 = vmatprep.subr.bf16.mxu0 0
      %1473 = vmatpush1.bf16.msra.mxu0 0
      %1474 = vmatprep.subr.bf16.mxu0 0
      %1475 = vmatpush1.bf16.msra.mxu0 0
      %1476 = vmatprep.subr.bf16.mxu0 0
      %1477 = vmatpush1.bf16.msra.mxu0 0
      %1478 = vmatprep.subr.bf16.mxu0 0
      %1479 = vmatpush1.bf16.msra.mxu0 0
      %1480 = vmatprep.subr.bf16.mxu0 0
      %1481 = vmatpush1.bf16.msra.mxu0 0
      %1482 = vmatprep.subr.bf16.mxu0 0
      %1483 = vmatpush1.bf16.msra.mxu0 0
      %1484 = vmatprep.subr.bf16.mxu0 0
      %1485 = vmatpush1.bf16.msra.mxu0 0
      %1486 = vmatprep.subr.bf16.mxu0 0
      %1487 = vmatpush1.bf16.msra.mxu0 0
      %1488 = vmatprep.subr.bf16.mxu0 0
      %1489 = vmatpush1.bf16.msra.mxu0 0
      %1490 = vmatprep.subr.bf16.mxu0 0
      %1491 = vmatpush1.bf16.msra.mxu0 0
      %1492 = vmatprep.mubr.bf16.mxu0 0
      %1493 = vmatmul.mubr.bf16.gmra.mrb[0].mxu0 %v1458
      %v1494 = vpop.f32.mrb[0].mxu0
      %v1495 = vadd.f32 0.0, %v1494
      %v1496 = vpop.f32.mrb[0].mxu0
      %v1497 = vpop.f32.mrb[0].mxu0
      %v1498 = vadd.f32 0.0, %v1497
      %v1499 = vpop.f32.mrb[0].mxu0
      %1500 = vdwg.mxu0
      %v1502 = vsel %vm1272, %v1364, 0
      %1504 = vmatprep.subr.bf16.mxu0 0
      %1505 = vmatpush1.bf16.msra.mxu0 %v1368
      %1506 = vmatprep.subr.bf16.mxu0 0
      %1507 = vmatpush1.bf16.msra.mxu0 0
      %1508 = vmatprep.subr.bf16.mxu0 0
      %1509 = vmatpush1.bf16.msra.mxu0 0
      %1510 = vmatprep.subr.bf16.mxu0 0
      %1511 = vmatpush1.bf16.msra.mxu0 0
      %1512 = vmatprep.subr.bf16.mxu0 0
      %1513 = vmatpush1.bf16.msra.mxu0 0
      %1514 = vmatprep.subr.bf16.mxu0 0
      %1515 = vmatpush1.bf16.msra.mxu0 0
      %1516 = vmatprep.subr.bf16.mxu0 0
      %1517 = vmatpush1.bf16.msra.mxu0 0
      %1518 = vmatprep.subr.bf16.mxu0 0
      %1519 = vmatpush1.bf16.msra.mxu0 0
      %1520 = vmatprep.subr.bf16.mxu0 0
      %1521 = vmatpush1.bf16.msra.mxu0 0
      %1522 = vmatprep.subr.bf16.mxu0 0
      %1523 = vmatpush1.bf16.msra.mxu0 0
      %1524 = vmatprep.subr.bf16.mxu0 0
      %1525 = vmatpush1.bf16.msra.mxu0 0
      %1526 = vmatprep.subr.bf16.mxu0 0
      %1527 = vmatpush1.bf16.msra.mxu0 0
      %1528 = vmatprep.subr.bf16.mxu0 0
      %1529 = vmatpush1.bf16.msra.mxu0 0
      %1530 = vmatprep.subr.bf16.mxu0 0
      %1531 = vmatpush1.bf16.msra.mxu0 0
      %1532 = vmatprep.subr.bf16.mxu0 0
      %1533 = vmatpush1.bf16.msra.mxu0 0
      %1534 = vmatprep.subr.bf16.mxu0 0
      %1535 = vmatpush1.bf16.msra.mxu0 0
      %1536 = vmatprep.mubr.bf16.mxu0 0
      %1537 = vmatmul.mubr.bf16.gmra.mrb[0].mxu0 %v1502
      %v1538 = vpop.f32.mrb[0].mxu0
      %v1539 = vadd.f32 0.0, %v1538
      %v1540 = vpop.f32.mrb[0].mxu0
      %v1541 = vpop.f32.mrb[0].mxu0
      %v1542 = vadd.f32 0.0, %v1541
      %v1543 = vpop.f32.mrb[0].mxu0
      %1544 = vdwg.mxu0
      %v1545 = vcombine.low %v1407, %v1495
      %v1546 = vcombine.high %v1407, %v1495
      %v1548 = vunpack.c.l.s4 1983009808
      %v1549 = vunpack.c.0.s8 %v1548
      %v1550 = vlaneseq
      %v1551 = vshrl.u32 %v1550, 7
      %v1552 = vsub.s32 %v1549, %v1551
      %v1553 = vrot.slane %v1545, %v1552
      %v1555 = vunpack.c.l.s4 1983009808
      %v1556 = vunpack.c.0.s8 %v1555
      %v1557 = vlaneseq
      %v1558 = vshrl.u32 %v1557, 7
      %v1559 = vsub.s32 %v1556, %v1558
      %v1560 = vrot.slane %v1546, %v1559
      %v1561 = vcombine.low %v1451, %v1539
      %v1562 = vcombine.high %v1451, %v1539
      %v1564 = vunpack.c.l.s4 1983009808
      %v1565 = vunpack.c.0.s8 %v1564
      %v1566 = vlaneseq
      %v1567 = vshrl.u32 %v1566, 7
      %v1568 = vsub.s32 %v1565, %v1567
      %v1569 = vrot.slane %v1561, %v1568
      %v1571 = vunpack.c.l.s4 1983009808
      %v1572 = vunpack.c.0.s8 %v1571
      %v1573 = vlaneseq
      %v1574 = vshrl.u32 %v1573, 7
      %v1575 = vsub.s32 %v1572, %v1574
      %v1576 = vrot.slane %v1562, %v1575
      %v1577 = vcombine.low %v1553, %v1569
      %v1578 = vcombine.high %v1553, %v1569
      %v1580 = vunpack.c.l.s4 1934713408
      %v1581 = vunpack.c.0.s8 %v1580
      %v1582 = vlaneseq
      %v1583 = vshrl.u32 %v1582, 7
      %v1584 = vsub.s32 %v1581, %v1583
      %v1585 = vrot.slane %v1577, %v1584
      %v1587 = vunpack.c.l.s4 1934713408
      %v1588 = vunpack.c.0.s8 %v1587
      %v1589 = vlaneseq
      %v1590 = vshrl.u32 %v1589, 7
      %v1591 = vsub.s32 %v1588, %v1590
      %v1592 = vrot.slane %v1578, %v1591
      %v1593 = vcombine.low %v1560, %v1576
      %v1594 = vcombine.high %v1560, %v1576
      %v1596 = vunpack.c.l.s4 1934713408
      %v1597 = vunpack.c.0.s8 %v1596
      %v1598 = vlaneseq
      %v1599 = vshrl.u32 %v1598, 7
      %v1600 = vsub.s32 %v1597, %v1599
      %v1601 = vrot.slane %v1593, %v1600
      %v1603 = vunpack.c.l.s4 1934713408
      %v1604 = vunpack.c.0.s8 %v1603
      %v1605 = vlaneseq
      %v1606 = vshrl.u32 %v1605, 7
      %v1607 = vsub.s32 %v1604, %v1606
      %v1608 = vrot.slane %v1594, %v1607
      %v1609 = vcombine.high %v1585, 0.0
      %v1610 = vcombine.high %v1592, 0.0
      %v1611 = vcombine.high %v1601, 0.0
      %v1612 = vcombine.high %v1608, 0.0
      %v1613 = vcombine.low %v1410, %v1498
      %v1614 = vcombine.high %v1410, %v1498
      %v1616 = vunpack.c.l.s4 1983009808
      %v1617 = vunpack.c.0.s8 %v1616
      %v1618 = vlaneseq
      %v1619 = vshrl.u32 %v1618, 7
      %v1620 = vsub.s32 %v1617, %v1619
      %v1621 = vrot.slane %v1613, %v1620
      %v1623 = vunpack.c.l.s4 1983009808
      %v1624 = vunpack.c.0.s8 %v1623
      %v1625 = vlaneseq
      %v1626 = vshrl.u32 %v1625, 7
      %v1627 = vsub.s32 %v1624, %v1626
      %v1628 = vrot.slane %v1614, %v1627
      %v1629 = vcombine.low %v1454, %v1542
      %v1630 = vcombine.high %v1454, %v1542
      %v1632 = vunpack.c.l.s4 1983009808
      %v1633 = vunpack.c.0.s8 %v1632
      %v1634 = vlaneseq
      %v1635 = vshrl.u32 %v1634, 7
      %v1636 = vsub.s32 %v1633, %v1635
      %v1637 = vrot.slane %v1629, %v1636
      %v1639 = vunpack.c.l.s4 1983009808
      %v1640 = vunpack.c.0.s8 %v1639
      %v1641 = vlaneseq
      %v1642 = vshrl.u32 %v1641, 7
      %v1643 = vsub.s32 %v1640, %v1642
      %v1644 = vrot.slane %v1630, %v1643
      %v1645 = vcombine.low %v1621, %v1637
      %v1646 = vcombine.high %v1621, %v1637
      %v1648 = vunpack.c.l.s4 1934713408
      %v1649 = vunpack.c.0.s8 %v1648
      %v1650 = vlaneseq
      %v1651 = vshrl.u32 %v1650, 7
      %v1652 = vsub.s32 %v1649, %v1651
      %v1653 = vrot.slane %v1645, %v1652
      %v1655 = vunpack.c.l.s4 1934713408
      %v1656 = vunpack.c.0.s8 %v1655
      %v1657 = vlaneseq
      %v1658 = vshrl.u32 %v1657, 7
      %v1659 = vsub.s32 %v1656, %v1658
      %v1660 = vrot.slane %v1646, %v1659
      %v1661 = vcombine.low %v1628, %v1644
      %v1662 = vcombine.high %v1628, %v1644
      %v1664 = vunpack.c.l.s4 1934713408
      %v1665 = vunpack.c.0.s8 %v1664
      %v1666 = vlaneseq
      %v1667 = vshrl.u32 %v1666, 7
      %v1668 = vsub.s32 %v1665, %v1667
      %v1669 = vrot.slane %v1661, %v1668
      %v1671 = vunpack.c.l.s4 1934713408
      %v1672 = vunpack.c.0.s8 %v1671
      %v1673 = vlaneseq
      %v1674 = vshrl.u32 %v1673, 7
      %v1675 = vsub.s32 %v1672, %v1674
      %v1676 = vrot.slane %v1662, %v1675
      %v1677 = vcombine.high %v1653, 0.0
      %v1678 = vcombine.high %v1660, 0.0
      %v1679 = vcombine.high %v1669, 0.0
      %v1680 = vcombine.high %v1676, 0.0
      %v1681 = vcombine.low %v1585, %v1592
      %v1683 = vunpack.c.l.s4 1983009808
      %v1684 = vunpack.c.0.s8 %v1683
      %v1685 = vlaneseq
      %v1686 = vshrl.u32 %v1685, 7
      %v1687 = vsub.s32 %v1684, %v1686
      %v1688 = vrot.slane %v1681, %v1687
      %v1689 = vcombine.low %v1609, %v1610
      %v1691 = vunpack.c.l.s4 1983009808
      %v1692 = vunpack.c.0.s8 %v1691
      %v1693 = vlaneseq
      %v1694 = vshrl.u32 %v1693, 7
      %v1695 = vsub.s32 %v1692, %v1694
      %v1696 = vrot.slane %v1689, %v1695
      %v1697 = vcombine.low %v1601, %v1608
      %v1699 = vunpack.c.l.s4 1983009808
      %v1700 = vunpack.c.0.s8 %v1699
      %v1701 = vlaneseq
      %v1702 = vshrl.u32 %v1701, 7
      %v1703 = vsub.s32 %v1700, %v1702
      %v1704 = vrot.slane %v1697, %v1703
      %v1705 = vcombine.low %v1611, %v1612
      %v1707 = vunpack.c.l.s4 1983009808
      %v1708 = vunpack.c.0.s8 %v1707
      %v1709 = vlaneseq
      %v1710 = vshrl.u32 %v1709, 7
      %v1711 = vsub.s32 %v1708, %v1710
      %v1712 = vrot.slane %v1705, %v1711
      %v1713 = vcombine.low %v1688, %v1696
      %v1714 = vcombine.high %v1688, %v1696
      %v1716 = vunpack.c.l.s4 1934713408
      %v1717 = vunpack.c.0.s8 %v1716
      %v1718 = vlaneseq
      %v1719 = vshrl.u32 %v1718, 7
      %v1720 = vsub.s32 %v1717, %v1719
      %v1721 = vrot.slane %v1713, %v1720
      %v1723 = vunpack.c.l.s4 1934713408
      %v1724 = vunpack.c.0.s8 %v1723
      %v1725 = vlaneseq
      %v1726 = vshrl.u32 %v1725, 7
      %v1727 = vsub.s32 %v1724, %v1726
      %v1728 = vrot.slane %v1714, %v1727
      %v1729 = vcombine.low %v1704, %v1712
      %v1730 = vcombine.high %v1704, %v1712
      %v1732 = vunpack.c.l.s4 1934713408
      %v1733 = vunpack.c.0.s8 %v1732
      %v1734 = vlaneseq
      %v1735 = vshrl.u32 %v1734, 7
      %v1736 = vsub.s32 %v1733, %v1735
      %v1737 = vrot.slane %v1729, %v1736
      %v1739 = vunpack.c.l.s4 1934713408
      %v1740 = vunpack.c.0.s8 %v1739
      %v1741 = vlaneseq
      %v1742 = vshrl.u32 %v1741, 7
      %v1743 = vsub.s32 %v1740, %v1742
      %v1744 = vrot.slane %v1730, %v1743
      %v1745 = vcombine.low %v1721, %v1737
      %v1746 = vcombine.high %v1721, %v1737
      %v1747 = vcombine.low %v1728, %v1744
      %v1748 = vcombine.high %v1728, %v1744
      %v1749 = vcombine.low %v1653, %v1660
      %v1751 = vunpack.c.l.s4 1983009808
      %v1752 = vunpack.c.0.s8 %v1751
      %v1753 = vlaneseq
      %v1754 = vshrl.u32 %v1753, 7
      %v1755 = vsub.s32 %v1752, %v1754
      %v1756 = vrot.slane %v1749, %v1755
      %v1757 = vcombine.low %v1677, %v1678
      %v1759 = vunpack.c.l.s4 1983009808
      %v1760 = vunpack.c.0.s8 %v1759
      %v1761 = vlaneseq
      %v1762 = vshrl.u32 %v1761, 7
      %v1763 = vsub.s32 %v1760, %v1762
      %v1764 = vrot.slane %v1757, %v1763
      %v1765 = vcombine.low %v1669, %v1676
      %v1767 = vunpack.c.l.s4 1983009808
      %v1768 = vunpack.c.0.s8 %v1767
      %v1769 = vlaneseq
      %v1770 = vshrl.u32 %v1769, 7
      %v1771 = vsub.s32 %v1768, %v1770
      %v1772 = vrot.slane %v1765, %v1771
      %v1773 = vcombine.low %v1679, %v1680
      %v1775 = vunpack.c.l.s4 1983009808
      %v1776 = vunpack.c.0.s8 %v1775
      %v1777 = vlaneseq
      %v1778 = vshrl.u32 %v1777, 7
      %v1779 = vsub.s32 %v1776, %v1778
      %v1780 = vrot.slane %v1773, %v1779
      %v1781 = vcombine.low %v1756, %v1764
      %v1782 = vcombine.high %v1756, %v1764
      %v1784 = vunpack.c.l.s4 1934713408
      %v1785 = vunpack.c.0.s8 %v1784
      %v1786 = vlaneseq
      %v1787 = vshrl.u32 %v1786, 7
      %v1788 = vsub.s32 %v1785, %v1787
      %v1789 = vrot.slane %v1781, %v1788
      %v1791 = vunpack.c.l.s4 1934713408
      %v1792 = vunpack.c.0.s8 %v1791
      %v1793 = vlaneseq
      %v1794 = vshrl.u32 %v1793, 7
      %v1795 = vsub.s32 %v1792, %v1794
      %v1796 = vrot.slane %v1782, %v1795
      %v1797 = vcombine.low %v1772, %v1780
      %v1798 = vcombine.high %v1772, %v1780
      %v1800 = vunpack.c.l.s4 1934713408
      %v1801 = vunpack.c.0.s8 %v1800
      %v1802 = vlaneseq
      %v1803 = vshrl.u32 %v1802, 7
      %v1804 = vsub.s32 %v1801, %v1803
      %v1805 = vrot.slane %v1797, %v1804
      %v1807 = vunpack.c.l.s4 1934713408
      %v1808 = vunpack.c.0.s8 %v1807
      %v1809 = vlaneseq
      %v1810 = vshrl.u32 %v1809, 7
      %v1811 = vsub.s32 %v1808, %v1810
      %v1812 = vrot.slane %v1798, %v1811
      %v1813 = vcombine.low %v1789, %v1805
      %v1814 = vcombine.high %v1789, %v1805
      %v1815 = vcombine.low %v1796, %v1812
      %v1816 = vcombine.high %v1796, %v1812
      %1819 = vrot.lane.b32.xlu0 %v1746, 32
      %v1820 = vpop.permute.xlu0 %1819
      %1821 = vrot.lane.b32.xlu0 %v1814, 32
      %v1822 = vpop.permute.xlu0 %1821
      %1827 = vrot.lane.b32.xlu0 %v1747, 64
      %v1828 = vpop.permute.xlu0 %1827
      %1829 = vrot.lane.b32.xlu0 %v1815, 64
      %v1830 = vpop.permute.xlu0 %1829
      %1835 = vrot.lane.b32.xlu0 %v1748, 96
      %v1836 = vpop.permute.xlu0 %1835
      %1837 = vrot.lane.b32.xlu0 %v1816, 96
      %v1838 = vpop.permute.xlu0 %1837
      %v1841 = vsel %vm1049, %v1745, %v1820
      %v1842 = vsel %vm1049, %v1813, %v1822
      %vm1843 = vcmask 523264
      %v1844 = vsel %vm1843, %v1841, %v1828
      %v1845 = vsel %vm1843, %v1842, %v1830
      %vm1846 = vcmask 785408
      %v1847 = vsel %vm1846, %v1844, %v1836
      %v1848 = vsel %vm1846, %v1845, %v1838
      %1849 = vst [vmem:[%s157] sm:$0xff] %v1847
      %1850 = vst [vmem:[%s157 + $0x8] sm:$0xff] %v1848
      %p1851 = scmp.lt.s32.totalorder %s13, 1
      %s1852 = scalar_select %p1851, %s13, 1
      %s1853 = smul.addr %s1852, 2
      %s1854 = smul.addr %s1853, 8
      %s1855 = scalar_lea.vmem %s2, %s1854
      // Predicated region
      $region29: #{sft_forward.12} parent=27 // pred_check
        %p1856 = pneg %p83
      $region30: #{sft_forward.12} parent=27 // pred_check_branch
        %1858 = sbr.rel (%p1856) target = $region32
      $region31: #{sft_forward.12} parent=27 // pred_region
        _
      $region32: #{sft_forward.12} parent=27 // pred_fallthru
        _
    $region28: #{sft_forward.12} parent=5 // pred_fallthru
      _
    %p1859 = scmp.le.s32.totalorder 2, %s8
    // Predicated region
    $region33: #{sft_forward.12} parent=5 // pred_check
      %p1860 = pneg %p1859
    $region34: #{sft_forward.12} parent=5 // pred_check_branch
      %1862 = sbr.rel (%p1860) target = $region36
    $region35: #{sft_forward.12} parent=5 // pred_region
      %s1863 = ssub.s32 %s8, 2
      // Predicated region
      $region37: #{sft_forward.12} parent=35 // pred_check
        %p1864 = pneg %p89
      $region38: #{sft_forward.12} parent=35 // pred_check_branch
        %1866 = sbr.rel (%p1864) target = $region40
      $region39: #{sft_forward.12} parent=35 // pred_region
        %p1867 = scmp.lt.s32.totalorder %s14, 1
        %s1868 = scalar_select %p1867, %s14, 1
        %s1869 = smul.addr %s1868, 2
        %s1870 = smul.addr %s1869, 8
        %s1871 = scalar_lea.vmem %s2, %s1870
      $region40: #{sft_forward.12} parent=35 // pred_fallthru
        _
    $region36: #{sft_forward.12} parent=5 // pred_fallthru
      _
  $region6: #{sft_forward.12} parent=0 // loop_footer
    %s12 = sadd.s32 1, %s8
  $region7: #{sft_forward.12} parent=0 // loop_footer_branch
    %7 = sbr.rel target = $region3
  $region8: #{sft_forward.12} parent=0 // loop_exit
    _

// kernel: sft_forward.15
$region0: #{sft_forward.15}
  #allocation0 [shape = 'u32[]', space=smem, size = 0x4, offset = 0x4, fixed_abs, tag = 'smem constant byte address 0x4 - core index']
  #allocation1 [shape = 'u32[144,128]{1,0:T(1,128)}', space=vmem, size = 0x12000, scoped, tag = 'internal scratch']
  #allocation2 [shape = 'f32[32,128]{1,0:T(8,128)}', space=vmem, size = 0x4000, scoped, tag = 'scratch operand']
  %s0 = inlined_call_operand.vmem [shape: f32[32,256], index: 0, kind: input, shape index: {}]
  %s1 = inlined_call_operand.vmem [shape: bf16[256,128], index: 1, kind: input, shape index: {}]
  %s2 = inlined_call_operand.vmem [shape: f32[1,128], index: 2, kind: input, shape index: {}]
  %s3 = inlined_call_operand.vmem [shape: f32[32,128], index: 3, kind: input, shape index: {}]
  %s4 = inlined_call_operand.vmem [shape: f32[32,128], index: 4, kind: output, shape index: {}]
  %s5 = sld [smem:[#allocation0]]
  $region34: #{sft_forward.15} parent=0
    _
  %s7 = ssub.s32 1, %s5
  %s8 = scalar_select 0, %s7, %s5
  // Predicated region
  $region2: #{sft_forward.15} parent=0 // pred_check
    _
  $region3: #{sft_forward.15} parent=0 // pred_check_branch
    %10 = sbr.rel (0) target = $region5
  $region4: #{sft_forward.15} parent=0 // pred_region
    _
  $region5: #{sft_forward.15} parent=0 // pred_fallthru
    _
  // Predicated region
  $region6: #{sft_forward.15} parent=0 // pred_check
    _
  $region7: #{sft_forward.15} parent=0 // pred_check_branch
    %12 = sbr.rel (0) target = $region9
  $region8: #{sft_forward.15} parent=0 // pred_region
    _
  $region9: #{sft_forward.15} parent=0 // pred_fallthru
    _
  // Predicated region
  $region10: #{sft_forward.15} parent=0 // pred_check
    _
  $region11: #{sft_forward.15} parent=0 // pred_check_branch
    %14 = sbr.rel (0) target = $region13
  $region12: #{sft_forward.15} parent=0 // pred_region
    _
  $region13: #{sft_forward.15} parent=0 // pred_fallthru
    _
  // Predicated region
  $region14: #{sft_forward.15} parent=0 // pred_check
    _
  $region15: #{sft_forward.15} parent=0 // pred_check_branch
    %16 = sbr.rel (0) target = $region17
  $region16: #{sft_forward.15} parent=0 // pred_region
    _
  $region17: #{sft_forward.15} parent=0 // pred_fallthru
    _
  %p18 = scmp.eq.s32.totalorder 0, 0
  // Predicated region
  $region18: #{sft_forward.15} parent=0 // pred_check
    %p19 = pneg %p18
  $region19: #{sft_forward.15} parent=0 // pred_check_branch
    %21 = sbr.rel (%p19) target = $region21
  $region20: #{sft_forward.15} parent=0 // pred_region
    %22 = vst [vmem:[#allocation2] sm:$0xff] 0.0
    %23 = vst [vmem:[#allocation2 + $0x8] sm:$0xff] 0.0
    %24 = vst [vmem:[#allocation2 + $0x10] sm:$0xff] 0.0
    %25 = vst [vmem:[#allocation2 + $0x18] sm:$0xff] 0.0
  $region21: #{sft_forward.15} parent=0 // pred_fallthru
    _
  %v26 = vld [vmem:[#allocation2] sm:$0xff]
  %v27 = vld [vmem:[#allocation2 + $0x8] sm:$0xff]
  %v28 = vld [vmem:[#allocation2 + $0x10] sm:$0xff]
  %v29 = vld [vmem:[#allocation2 + $0x18] sm:$0xff]
  %v30 = vld [vmem:[%s0] sm:$0xff]
  %v31 = vld [vmem:[%s0 + $0x8] sm:$0xff]
  %v32 = vld [vmem:[%s0 + $0x10] sm:$0xff]
  %v33 = vld [vmem:[%s0 + $0x18] sm:$0xff]
  %v34 = vld [vmem:[%s0 + $0x20] sm:$0xff]
  %v35 = vld [vmem:[%s0 + $0x28] sm:$0xff]
  %v36 = vld [vmem:[%s0 + $0x30] sm:$0xff]
  %v37 = vld [vmem:[%s0 + $0x38] sm:$0xff]
  %v38 = vpack.c.bf16 %v32, %v30
  %v39 = vpack.c.bf16 %v33, %v31
  %v40 = vpack.c.bf16 %v36, %v34
  %v41 = vpack.c.bf16 %v37, %v35
  %v42 = vld [vmem:[%s1] sm:$0xf]
  %v43 = vld [vmem:[%s1 + $0x4] sm:$0xf]
  %v44 = vld [vmem:[%s1 + $0x8] sm:$0xf]
  %v45 = vld [vmem:[%s1 + $0xc] sm:$0xf]
  %v46 = vld [vmem:[%s1 + $0x10] sm:$0xf]
  %v47 = vld [vmem:[%s1 + $0x14] sm:$0xf]
  %v48 = vld [vmem:[%s1 + $0x18] sm:$0xf]
  %v49 = vld [vmem:[%s1 + $0x1c] sm:$0xf]
  %v50 = vld [vmem:[%s1 + $0x20] sm:$0xf]
  %v51 = vld [vmem:[%s1 + $0x24] sm:$0xf]
  %v52 = vld [vmem:[%s1 + $0x28] sm:$0xf]
  %v53 = vld [vmem:[%s1 + $0x2c] sm:$0xf]
  %v54 = vld [vmem:[%s1 + $0x30] sm:$0xf]
  %v55 = vld [vmem:[%s1 + $0x34] sm:$0xf]
  %v56 = vld [vmem:[%s1 + $0x38] sm:$0xf]
  %v57 = vld [vmem:[%s1 + $0x3c] sm:$0xf]
  %v58 = vld [vmem:[%s1 + $0x40] sm:$0xf]
  %v59 = vld [vmem:[%s1 + $0x44] sm:$0xf]
  %v60 = vld [vmem:[%s1 + $0x48] sm:$0xf]
  %v61 = vld [vmem:[%s1 + $0x4c] sm:$0xf]
  %v62 = vld [vmem:[%s1 + $0x50] sm:$0xf]
  %v63 = vld [vmem:[%s1 + $0x54] sm:$0xf]
  %v64 = vld [vmem:[%s1 + $0x58] sm:$0xf]
  %v65 = vld [vmem:[%s1 + $0x5c] sm:$0xf]
  %v66 = vld [vmem:[%s1 + $0x60] sm:$0xf]
  %v67 = vld [vmem:[%s1 + $0x64] sm:$0xf]
  %v68 = vld [vmem:[%s1 + $0x68] sm:$0xf]
  %v69 = vld [vmem:[%s1 + $0x6c] sm:$0xf]
  %v70 = vld [vmem:[%s1 + $0x70] sm:$0xf]
  %v71 = vld [vmem:[%s1 + $0x74] sm:$0xf]
  %v72 = vld [vmem:[%s1 + $0x78] sm:$0xf]
  %v73 = vld [vmem:[%s1 + $0x7c] sm:$0xf]
  %v106 = vunpack.c.l.b16 %v42
  %v107 = vunpack.c.l.b16 %v43
  %v108 = vunpack.c.l.b16 %v44
  %v109 = vunpack.c.l.b16 %v45
  %v110 = vunpack.c.l.b16 %v46
  %v111 = vunpack.c.l.b16 %v47
  %v112 = vunpack.c.l.b16 %v48
  %v113 = vunpack.c.l.b16 %v49
  %v114 = vunpack.c.l.b16 %v50
  %v115 = vunpack.c.l.b16 %v51
  %v116 = vunpack.c.l.b16 %v52
  %v117 = vunpack.c.l.b16 %v53
  %v118 = vunpack.c.l.b16 %v54
  %v119 = vunpack.c.l.b16 %v55
  %v120 = vunpack.c.l.b16 %v56
  %v121 = vunpack.c.l.b16 %v57
  %v122 = vunpack.c.l.b16 %v58
  %v123 = vunpack.c.l.b16 %v59
  %v124 = vunpack.c.l.b16 %v60
  %v125 = vunpack.c.l.b16 %v61
  %v126 = vunpack.c.l.b16 %v62
  %v127 = vunpack.c.l.b16 %v63
  %v128 = vunpack.c.l.b16 %v64
  %v129 = vunpack.c.l.b16 %v65
  %v130 = vunpack.c.l.b16 %v66
  %v131 = vunpack.c.l.b16 %v67
  %v132 = vunpack.c.l.b16 %v68
  %v133 = vunpack.c.l.b16 %v69
  %v134 = vunpack.c.l.b16 %v70
  %v135 = vunpack.c.l.b16 %v71
  %v136 = vunpack.c.l.b16 %v72
  %v137 = vunpack.c.l.b16 %v73
  %v138 = vpack.c.b16 %v107, %v106
  %v139 = vpack.c.b16 %v109, %v108
  %v140 = vpack.c.b16 %v111, %v110
  %v141 = vpack.c.b16 %v113, %v112
  %v142 = vpack.c.b16 %v115, %v114
  %v143 = vpack.c.b16 %v117, %v116
  %v144 = vpack.c.b16 %v119, %v118
  %v145 = vpack.c.b16 %v121, %v120
  %v146 = vpack.c.b16 %v123, %v122
  %v147 = vpack.c.b16 %v125, %v124
  %v148 = vpack.c.b16 %v127, %v126
  %v149 = vpack.c.b16 %v129, %v128
  %v150 = vpack.c.b16 %v131, %v130
  %v151 = vpack.c.b16 %v133, %v132
  %v152 = vpack.c.b16 %v135, %v134
  %v153 = vpack.c.b16 %v137, %v136
  %170 = vmatprep.subr.bf16.mxu0 0
  %171 = vmatpush1.bf16.msra.mxu0 %v138
  %172 = vmatprep.subr.bf16.mxu0 0
  %173 = vmatpush1.bf16.msra.mxu0 %v139
  %174 = vmatprep.subr.bf16.mxu0 0
  %175 = vmatpush1.bf16.msra.mxu0 %v140
  %176 = vmatprep.subr.bf16.mxu0 0
  %177 = vmatpush1.bf16.msra.mxu0 %v141
  %178 = vmatprep.subr.bf16.mxu0 0
  %179 = vmatpush1.bf16.msra.mxu0 %v142
  %180 = vmatprep.subr.bf16.mxu0 0
  %181 = vmatpush1.bf16.msra.mxu0 %v143
  %182 = vmatprep.subr.bf16.mxu0 0
  %183 = vmatpush1.bf16.msra.mxu0 %v144
  %184 = vmatprep.subr.bf16.mxu0 0
  %185 = vmatpush1.bf16.msra.mxu0 %v145
  %186 = vmatprep.subr.bf16.mxu0 0
  %187 = vmatpush1.bf16.msra.mxu0 %v146
  %188 = vmatprep.subr.bf16.mxu0 0
  %189 = vmatpush1.bf16.msra.mxu0 %v147
  %190 = vmatprep.subr.bf16.mxu0 0
  %191 = vmatpush1.bf16.msra.mxu0 %v148
  %192 = vmatprep.subr.bf16.mxu0 0
  %193 = vmatpush1.bf16.msra.mxu0 %v149
  %194 = vmatprep.subr.bf16.mxu0 0
  %195 = vmatpush1.bf16.msra.mxu0 %v150
  %196 = vmatprep.subr.bf16.mxu0 0
  %197 = vmatpush1.bf16.msra.mxu0 %v151
  %198 = vmatprep.subr.bf16.mxu0 0
  %199 = vmatpush1.bf16.msra.mxu0 %v152
  %200 = vmatprep.subr.bf16.mxu0 0
  %201 = vmatpush1.bf16.msra.mxu0 %v153
  %202 = vmatprep.mubr.bf16.mxu0 %v39
  %203 = vmatmul.mubr.bf16.gmra.mrb[0].mxu0 %v38
  %v204 = vpop.f32.mrb[0].mxu0
  %v205 = vadd.f32 0.0, %v204
  %v206 = vpop.f32.mrb[0].mxu0
  %v207 = vpop.f32.mrb[0].mxu0
  %v208 = vadd.f32 0.0, %v207
  %v209 = vpop.f32.mrb[0].mxu0
  %210 = vmatprep.mubr.bf16.mxu0 %v41
  %211 = vmatmul.mubr.bf16.gmra.mrb[0].mxu0 %v40
  %v212 = vpop.f32.mrb[0].mxu0
  %v213 = vadd.f32 0.0, %v212
  %v214 = vpop.f32.mrb[0].mxu0
  %v215 = vpop.f32.mrb[0].mxu0
  %v216 = vadd.f32 0.0, %v215
  %v217 = vpop.f32.mrb[0].mxu0
  %218 = vdwg.mxu0
  %v219 = vadd.f32 %v26, %v205
  %v220 = vadd.f32 %v27, %v208
  %v221 = vadd.f32 %v28, %v213
  %v222 = vadd.f32 %v29, %v216
  %223 = vst [vmem:[#allocation2] sm:$0xff] %v219
  %224 = vst [vmem:[#allocation2 + $0x8] sm:$0xff] %v220
  %225 = vst [vmem:[#allocation2 + $0x10] sm:$0xff] %v221
  %226 = vst [vmem:[#allocation2 + $0x18] sm:$0xff] %v222
  // Predicated region
  $region22: #{sft_forward.15} parent=0 // pred_check
    %p227 = pneg %p18
  $region23: #{sft_forward.15} parent=0 // pred_check_branch
    %229 = sbr.rel (%p227) target = $region25
  $region24: #{sft_forward.15} parent=0 // pred_region
    %v230 = vld [vmem:[#allocation2] sm:$0xff]
    %v231 = vld [vmem:[#allocation2 + $0x8] sm:$0xff]
    %v232 = vld [vmem:[#allocation2 + $0x10] sm:$0xff]
    %v233 = vld [vmem:[#allocation2 + $0x18] sm:$0xff]
    %v234 = vld [vmem:[%s2] sm:$0x1]
    %v236 = vlaneseq
    %v237 = vshrl.u32 %v236, 7
    %v238 = vsub.s32 0, %v237
    %v239 = vrot.slane %v234, %v238
    %v241 = vadd.f32 %v230, %v239
    %v242 = vadd.f32 %v231, %v239
    %v243 = vadd.f32 %v232, %v239
    %v244 = vadd.f32 %v233, %v239
    %v245 = vld [vmem:[%s3] sm:$0xff]
    %v246 = vld [vmem:[%s3 + $0x8] sm:$0xff]
    %v247 = vld [vmem:[%s3 + $0x10] sm:$0xff]
    %v248 = vld [vmem:[%s3 + $0x18] sm:$0xff]
    %v249 = vadd.f32 %v241, %v245
    %v250 = vadd.f32 %v242, %v246
    %v251 = vadd.f32 %v243, %v247
    %v252 = vadd.f32 %v244, %v248
    %253 = vst [vmem:[%s4] sm:$0xff] %v249
    %254 = vst [vmem:[%s4 + $0x8] sm:$0xff] %v250
    %255 = vst [vmem:[%s4 + $0x10] sm:$0xff] %v251
    %256 = vst [vmem:[%s4 + $0x18] sm:$0xff] %v252
  $region25: #{sft_forward.15} parent=0 // pred_fallthru
    _
  // Predicated region
  $region26: #{sft_forward.15} parent=0 // pred_check
    _
  $region27: #{sft_forward.15} parent=0 // pred_check_branch
    %258 = sbr.rel (0) target = $region29
  $region28: #{sft_forward.15} parent=0 // pred_region
    _
  $region29: #{sft_forward.15} parent=0 // pred_fallthru
    _
  // Predicated region
  $region30: #{sft_forward.15} parent=0 // pred_check
    _
  $region31: #{sft_forward.15} parent=0 // pred_check_branch
    %260 = sbr.rel (0) target = $region33
  $region32: #{sft_forward.15} parent=0 // pred_region
    _
  $region33: #{sft_forward.15} parent=0 // pred_fallthru
    _

// kernel: sft_forward.21
$region0: #{sft_forward.21}
  #allocation0 [shape = 'u32[]', space=smem, size = 0x4, offset = 0x4, fixed_abs, tag = 'smem constant byte address 0x4 - core index']
  #allocation1 [shape = 'u32[144,128]{1,0:T(1,128)}', space=vmem, size = 0x12000, scoped, tag = 'internal scratch']
  #allocation2 [shape = 'f32[32,1]{1,0:T(8,128)}', space=vmem, size = 0x4000, scoped, tag = 'scratch operand']
  #allocation3 [shape = 'f32[32,1]{1,0:T(8,128)}', space=vmem, size = 0x4000, scoped, tag = 'scratch operand']
  #allocation4 [shape = 'f32[32,1]{1,0:T(8,128)}', space=vmem, size = 0x4000, scoped, tag = 'scratch operand']
  %s0 = inlined_call_operand.vmem [shape: f32[32,128], index: 0, kind: input, shape index: {}]
  %s1 = inlined_call_operand.vmem [shape: f32[1,128], index: 1, kind: input, shape index: {}]
  %s2 = inlined_call_operand.vmem [shape: f32[1,128], index: 2, kind: input, shape index: {}]
  %s3 = inlined_call_operand.vmem [shape: bf16[128,256], index: 3, kind: input, shape index: {}]
  %s4 = inlined_call_operand.vmem [shape: f32[1,256], index: 4, kind: input, shape index: {}]
  %s5 = inlined_call_operand.vmem [shape: s32[32,1], index: 5, kind: input, shape index: {}]
  %s6 = inlined_call_operand.hbm [shape: f32[32,256], index: 6, kind: output, shape index: {0}]
  %s7 = inlined_call_operand.vmem [shape: f32[32,1], index: 7, kind: output, shape index: {1}]
  %8 = xla_tuple %s6, %s7
  %s9 = sld [smem:[#allocation0]]
  $region50: #{sft_forward.21} parent=0
    _
  %s11 = ssub.s32 1, %s9
  %s12 = scalar_select 0, %s11, %s9
  $region1: #{sft_forward.21} parent=0
    #allocation5 [shape = 'u8[32768]{0}', space=vmem, size = 0x8000, scoped, tag = 'output window, operand 0, single buffered']
    #allocation6 [shape = 's32[1]{0}', space=sflag, size = 0x4, scoped, tag = 'scoped memory for sft_forward.21']
    %13 = vsyncpa [#allocation6], 0
    // Predicated region
    $region2: #{sft_forward.21} parent=1 // pred_check
      _
    $region3: #{sft_forward.21} parent=1 // pred_check_branch
      %15 = sbr.rel (0) target = $region5
    $region4: #{sft_forward.21} parent=1 // pred_region
      _
    $region5: #{sft_forward.21} parent=1 // pred_fallthru
      _
    // Predicated region
    $region6: #{sft_forward.21} parent=1 // pred_check
      _
    $region7: #{sft_forward.21} parent=1 // pred_check_branch
      %17 = sbr.rel (0) target = $region9
    $region8: #{sft_forward.21} parent=1 // pred_region
      _
    $region9: #{sft_forward.21} parent=1 // pred_fallthru
      _
    // Predicated region
    $region10: #{sft_forward.21} parent=1 // pred_check
      _
    $region11: #{sft_forward.21} parent=1 // pred_check_branch
      %19 = sbr.rel (0) target = $region13
    $region12: #{sft_forward.21} parent=1 // pred_region
      _
    $region13: #{sft_forward.21} parent=1 // pred_fallthru
      _
    // Predicated region
    $region14: #{sft_forward.21} parent=1 // pred_check
      _
    $region15: #{sft_forward.21} parent=1 // pred_check_branch
      %21 = sbr.rel (0) target = $region17
    $region16: #{sft_forward.21} parent=1 // pred_region
      _
    $region17: #{sft_forward.21} parent=1 // pred_fallthru
      _
    // Predicated region
    $region18: #{sft_forward.21} parent=1 // pred_check
      _
    $region19: #{sft_forward.21} parent=1 // pred_check_branch
      %23 = sbr.rel (0) target = $region21
    $region20: #{sft_forward.21} parent=1 // pred_region
      _
    $region21: #{sft_forward.21} parent=1 // pred_fallthru
      _
    // Predicated region
    $region22: #{sft_forward.21} parent=1 // pred_check
      _
    $region23: #{sft_forward.21} parent=1 // pred_check_branch
      %25 = sbr.rel (0) target = $region25
    $region24: #{sft_forward.21} parent=1 // pred_region
      _
    $region25: #{sft_forward.21} parent=1 // pred_fallthru
      _
    %p27 = scmp.eq.s32.totalorder 0, 0
    // Predicated region
    $region26: #{sft_forward.21} parent=1 // pred_check
      %p28 = pneg %p27
    $region27: #{sft_forward.21} parent=1 // pred_check_branch
      %30 = sbr.rel (%p28) target = $region29
    $region28: #{sft_forward.21} parent=1 // pred_region
      %vm31 = vcmask 7168
      %32 = vst.msk [vmem:[#allocation2] sm:$0xff] %vm31, -inf
      %33 = vst.msk [vmem:[#allocation2 + $0x8] sm:$0xff] %vm31, -inf
      %34 = vst.msk [vmem:[#allocation2 + $0x10] sm:$0xff] %vm31, -inf
      %35 = vst.msk [vmem:[#allocation2 + $0x18] sm:$0xff] %vm31, -inf
      %36 = vst.msk [vmem:[#allocation3] sm:$0xff] %vm31, 0.0
      %37 = vst.msk [vmem:[#allocation3 + $0x8] sm:$0xff] %vm31, 0.0
      %38 = vst.msk [vmem:[#allocation3 + $0x10] sm:$0xff] %vm31, 0.0
      %39 = vst.msk [vmem:[#allocation3 + $0x18] sm:$0xff] %vm31, 0.0
      %40 = vst.msk [vmem:[#allocation4] sm:$0xff] %vm31, 0.0
      %41 = vst.msk [vmem:[#allocation4 + $0x8] sm:$0xff] %vm31, 0.0
      %42 = vst.msk [vmem:[#allocation4 + $0x10] sm:$0xff] %vm31, 0.0
      %43 = vst.msk [vmem:[#allocation4 + $0x18] sm:$0xff] %vm31, 0.0
    $region29: #{sft_forward.21} parent=1 // pred_fallthru
      _
    %v44 = vld [vmem:[%s0] sm:$0xff]
    %v45 = vld [vmem:[%s0 + $0x8] sm:$0xff]
    %v46 = vld [vmem:[%s0 + $0x10] sm:$0xff]
    %v47 = vld [vmem:[%s0 + $0x18] sm:$0xff]
    %48 = vadd.xlane.f32.xlu0 %v44
    %v49 = vpop.xlane.xlu0 %48
    %50 = vadd.xlane.f32.xlu0 %v45
    %v51 = vpop.xlane.xlu0 %50
    %52 = vadd.xlane.f32.xlu0 %v46
    %v53 = vpop.xlane.xlu0 %52
    %54 = vadd.xlane.f32.xlu0 %v47
    %v55 = vpop.xlane.xlu0 %54
    %v56 = vrcp.pop 128.0
    %v57 = vmul.f32 %v49, %v56
    %v58 = vmul.f32 %v51, %v56
    %v59 = vmul.f32 %v53, %v56
    %v60 = vmul.f32 %v55, %v56
    %v61 = vsub.f32 %v44, %v57
    %v62 = vsub.f32 %v45, %v58
    %v63 = vsub.f32 %v46, %v59
    %v64 = vsub.f32 %v47, %v60
    %v65 = vmul.f32 %v61, %v61
    %v66 = vmul.f32 %v62, %v62
    %v67 = vmul.f32 %v63, %v63
    %v68 = vmul.f32 %v64, %v64
    %69 = vadd.xlane.f32.xlu0 %v65
    %v70 = vpop.xlane.xlu0 %69
    %71 = vadd.xlane.f32.xlu0 %v66
    %v72 = vpop.xlane.xlu0 %71
    %73 = vadd.xlane.f32.xlu0 %v67
    %v74 = vpop.xlane.xlu0 %73
    %75 = vadd.xlane.f32.xlu0 %v68
    %v76 = vpop.xlane.xlu0 %75
    %v77 = vmul.f32 %v70, %v56
    %v78 = vmul.f32 %v72, %v56
    %v79 = vmul.f32 %v74, %v56
    %v80 = vmul.f32 %v76, %v56
    %v81 = vadd.f32 %v77, 1e-05
    %v82 = vadd.f32 %v78, 1e-05
    %v83 = vadd.f32 %v79, 1e-05
    %v84 = vadd.f32 %v80, 1e-05
    %v85 = vrsqrt.pop %v81
    %v86 = vrsqrt.pop %v82
    %v87 = vrsqrt.pop %v83
    %v88 = vrsqrt.pop %v84
    %v89 = vmul.f32 %v61, %v85
    %v90 = vmul.f32 %v62, %v86
    %v91 = vmul.f32 %v63, %v87
    %v92 = vmul.f32 %v64, %v88
    %v93 = vld [vmem:[%s1] sm:$0x1]
    %v95 = vlaneseq
    %v96 = vshrl.u32 %v95, 7
    %v97 = vsub.s32 0, %v96
    %v98 = vrot.slane %v93, %v97
    %v100 = vmul.f32 %v89, %v98
    %v101 = vmul.f32 %v90, %v98
    %v102 = vmul.f32 %v91, %v98
    %v103 = vmul.f32 %v92, %v98
    %v104 = vld [vmem:[%s2] sm:$0x1]
    %v106 = vlaneseq
    %v107 = vshrl.u32 %v106, 7
    %v108 = vsub.s32 0, %v107
    %v109 = vrot.slane %v104, %v108
    %v111 = vadd.f32 %v100, %v109
    %v112 = vadd.f32 %v101, %v109
    %v113 = vadd.f32 %v102, %v109
    %v114 = vadd.f32 %v103, %v109
    %v115 = vpack.c.bf16 %v112, %v111
    %v116 = vpack.c.bf16 %v114, %v113
    %v117 = vld [vmem:[%s3] sm:$0xff]
    %v118 = vld [vmem:[%s3 + $0x8] sm:$0xff]
    %v119 = vld [vmem:[%s3 + $0x10] sm:$0xff]
    %v120 = vld [vmem:[%s3 + $0x18] sm:$0xff]
    %v121 = vld [vmem:[%s3 + $0x20] sm:$0xff]
    %v122 = vld [vmem:[%s3 + $0x28] sm:$0xff]
    %v123 = vld [vmem:[%s3 + $0x30] sm:$0xff]
    %v124 = vld [vmem:[%s3 + $0x38] sm:$0xff]
    %v125 = vld [vmem:[%s3 + $0x40] sm:$0xff]
    %v126 = vld [vmem:[%s3 + $0x48] sm:$0xff]
    %v127 = vld [vmem:[%s3 + $0x50] sm:$0xff]
    %v128 = vld [vmem:[%s3 + $0x58] sm:$0xff]
    %v129 = vld [vmem:[%s3 + $0x60] sm:$0xff]
    %v130 = vld [vmem:[%s3 + $0x68] sm:$0xff]
    %v131 = vld [vmem:[%s3 + $0x70] sm:$0xff]
    %v132 = vld [vmem:[%s3 + $0x78] sm:$0xff]
    %v133 = vld [vmem:[%s4] sm:$0x3]
    %v135 = vlaneseq
    %v136 = vshrl.u32 %v135, 7
    %v137 = vsub.s32 0, %v136
    %v138 = vrot.slane %v133, %v137
    %v139 = vlaneseq
    %v140 = vshrl.u32 %v139, 7
    %v141 = vsub.s32 1, %v140
    %v142 = vrot.slane %v133, %v141
    %v161 = vunpack.c.l.b16 %v117
    %v162 = vunpack.c.h.b16 %v117
    %v163 = vunpack.c.l.b16 %v118
    %v164 = vunpack.c.h.b16 %v118
    %v165 = vunpack.c.l.b16 %v119
    %v166 = vunpack.c.h.b16 %v119
    %v167 = vunpack.c.l.b16 %v120
    %v168 = vunpack.c.h.b16 %v120
    %v169 = vunpack.c.l.b16 %v121
    %v170 = vunpack.c.h.b16 %v121
    %v171 = vunpack.c.l.b16 %v122
    %v172 = vunpack.c.h.b16 %v122
    %v173 = vunpack.c.l.b16 %v123
    %v174 = vunpack.c.h.b16 %v123
    %v175 = vunpack.c.l.b16 %v124
    %v176 = vunpack.c.h.b16 %v124
    %v177 = vunpack.c.l.b16 %v125
    %v178 = vunpack.c.h.b16 %v125
    %v179 = vunpack.c.l.b16 %v126
    %v180 = vunpack.c.h.b16 %v126
    %v181 = vunpack.c.l.b16 %v127
    %v182 = vunpack.c.h.b16 %v127
    %v183 = vunpack.c.l.b16 %v128
    %v184 = vunpack.c.h.b16 %v128
    %v185 = vunpack.c.l.b16 %v129
    %v186 = vunpack.c.h.b16 %v129
    %v187 = vunpack.c.l.b16 %v130
    %v188 = vunpack.c.h.b16 %v130
    %v189 = vunpack.c.l.b16 %v131
    %v190 = vunpack.c.h.b16 %v131
    %v191 = vunpack.c.l.b16 %v132
    %v192 = vunpack.c.h.b16 %v132
    %v193 = vpack.c.b16 %v163, %v161
    %v194 = vpack.c.b16 %v164, %v162
    %v195 = vpack.c.b16 %v167, %v165
    %v196 = vpack.c.b16 %v168, %v166
    %v197 = vpack.c.b16 %v171, %v169
    %v198 = vpack.c.b16 %v172, %v170
    %v199 = vpack.c.b16 %v175, %v173
    %v200 = vpack.c.b16 %v176, %v174
    %v201 = vpack.c.b16 %v179, %v177
    %v202 = vpack.c.b16 %v180, %v178
    %v203 = vpack.c.b16 %v183, %v181
    %v204 = vpack.c.b16 %v184, %v182
    %v205 = vpack.c.b16 %v187, %v185
    %v206 = vpack.c.b16 %v188, %v186
    %v207 = vpack.c.b16 %v191, %v189
    %v208 = vpack.c.b16 %v192, %v190
    %225 = vmatprep.subr.bf16.mxu0 %v194
    %226 = vmatpush1.bf16.msra.mxu0 %v193
    %227 = vmatprep.subr.bf16.mxu0 %v196
    %228 = vmatpush1.bf16.msra.mxu0 %v195
    %229 = vmatprep.subr.bf16.mxu0 %v198
    %230 = vmatpush1.bf16.msra.mxu0 %v197
    %231 = vmatprep.subr.bf16.mxu0 %v200
    %232 = vmatpush1.bf16.msra.mxu0 %v199
    %233 = vmatprep.subr.bf16.mxu0 %v202
    %234 = vmatpush1.bf16.msra.mxu0 %v201
    %235 = vmatprep.subr.bf16.mxu0 %v204
    %236 = vmatpush1.bf16.msra.mxu0 %v203
    %237 = vmatprep.subr.bf16.mxu0 %v206
    %238 = vmatpush1.bf16.msra.mxu0 %v205
    %239 = vmatprep.subr.bf16.mxu0 %v208
    %240 = vmatpush1.bf16.msra.mxu0 %v207
    %241 = vmatprep.subr.bf16.mxu0 0
    %242 = vmatpush1.bf16.msra.mxu0 0
    %243 = vmatprep.subr.bf16.mxu0 0
    %244 = vmatpush1.bf16.msra.mxu0 0
    %245 = vmatprep.subr.bf16.mxu0 0
    %246 = vmatpush1.bf16.msra.mxu0 0
    %247 = vmatprep.subr.bf16.mxu0 0
    %248 = vmatpush1.bf16.msra.mxu0 0
    %249 = vmatprep.subr.bf16.mxu0 0
    %250 = vmatpush1.bf16.msra.mxu0 0
    %251 = vmatprep.subr.bf16.mxu0 0
    %252 = vmatpush1.bf16.msra.mxu0 0
    %253 = vmatprep.subr.bf16.mxu0 0
    %254 = vmatpush1.bf16.msra.mxu0 0
    %255 = vmatprep.subr.bf16.mxu0 0
    %256 = vmatpush1.bf16.msra.mxu0 0
    %257 = vmatprep.mubr.bf16.mxu0 0
    %258 = vmatmul.mubr.bf16.gmra.mrb[0].mxu0 %v115
    %v259 = vpop.f32.mrb[0].mxu0
    %v260 = vadd.f32 %v138, %v259
    %v261 = vpop.f32.mrb[0].mxu0
    %v262 = vadd.f32 %v142, %v261
    %v263 = vpop.f32.mrb[0].mxu0
    %v264 = vadd.f32 %v138, %v263
    %v265 = vpop.f32.mrb[0].mxu0
    %v266 = vadd.f32 %v142, %v265
    %267 = vmatprep.mubr.bf16.mxu0 0
    %268 = vmatmul.mubr.bf16.gmra.mrb[0].mxu0 %v116
    %v269 = vpop.f32.mrb[0].mxu0
    %v270 = vadd.f32 %v138, %v269
    %v271 = vpop.f32.mrb[0].mxu0
    %v272 = vadd.f32 %v142, %v271
    %v273 = vpop.f32.mrb[0].mxu0
    %v274 = vadd.f32 %v138, %v273
    %v275 = vpop.f32.mrb[0].mxu0
    %v276 = vadd.f32 %v142, %v275
    %277 = vdwg.mxu0
    %278 = vst [vmem:[#allocation5] sm:$0xff] %v260
    %279 = vst [vmem:[#allocation5 + $0x8] sm:$0xff] %v262
    %280 = vst [vmem:[#allocation5 + $0x10] sm:$0xff] %v264
    %281 = vst [vmem:[#allocation5 + $0x18] sm:$0xff] %v266
    %282 = vst [vmem:[#allocation5 + $0x20] sm:$0xff] %v270
    %283 = vst [vmem:[#allocation5 + $0x28] sm:$0xff] %v272
    %284 = vst [vmem:[#allocation5 + $0x30] sm:$0xff] %v274
    %285 = vst [vmem:[#allocation5 + $0x38] sm:$0xff] %v276
    %v286 = vld [vmem:[#allocation2] sm:$0xff]
    %v287 = vld [vmem:[#allocation2 + $0x8] sm:$0xff]
    %v288 = vld [vmem:[#allocation2 + $0x10] sm:$0xff]
    %v289 = vld [vmem:[#allocation2 + $0x18] sm:$0xff]
    %v290 = vmax.f32 %v260, %v262
    %291 = vmax.xlane.f32.xlu0 %v290
    %v292 = vpop.xlane.xlu0 %291
    %v293 = vmax.f32 %v264, %v266
    %294 = vmax.xlane.f32.xlu0 %v293
    %v295 = vpop.xlane.xlu0 %294
    %v296 = vmax.f32 %v270, %v272
    %297 = vmax.xlane.f32.xlu0 %v296
    %v298 = vpop.xlane.xlu0 %297
    %v299 = vmax.f32 %v274, %v276
    %300 = vmax.xlane.f32.xlu0 %v299
    %v301 = vpop.xlane.xlu0 %300
    %v302 = vmax.f32 %v286, %v292
    %v303 = vmax.f32 %v287, %v295
    %v304 = vmax.f32 %v288, %v298
    %v305 = vmax.f32 %v289, %v301
    %v306 = vsub.f32 %v286, %v302
    %v307 = vsub.f32 %v287, %v303
    %v308 = vsub.f32 %v288, %v304
    %v309 = vsub.f32 %v289, %v305
    %v310 = vmul.f32 %v306, 1.442695
    %v311 = vpow.pop %v310
    %v312 = vmul.f32 %v307, 1.442695
    %v313 = vpow.pop %v312
    %v314 = vmul.f32 %v308, 1.442695
    %v315 = vpow.pop %v314
    %v316 = vmul.f32 %v309, 1.442695
    %v317 = vpow.pop %v316
    %v318 = vld [vmem:[#allocation3] sm:$0xff]
    %v319 = vld [vmem:[#allocation3 + $0x8] sm:$0xff]
    %v320 = vld [vmem:[#allocation3 + $0x10] sm:$0xff]
    %v321 = vld [vmem:[#allocation3 + $0x18] sm:$0xff]
    %v322 = vmul.f32 %v311, %v318
    %v323 = vmul.f32 %v313, %v319
    %v324 = vmul.f32 %v315, %v320
    %v325 = vmul.f32 %v317, %v321
    %327 = vset.pattern.permute.xlu0 0
    %328 = vperm.xlu0 %327, %v302
    %v329 = vpop.permute.xlu0 %328
    %332 = vset.pattern.permute.xlu0 0
    %333 = vperm.xlu0 %332, %v303
    %v334 = vpop.permute.xlu0 %333
    %337 = vset.pattern.permute.xlu0 0
    %338 = vperm.xlu0 %337, %v304
    %v339 = vpop.permute.xlu0 %338
    %342 = vset.pattern.permute.xlu0 0
    %343 = vperm.xlu0 %342, %v305
    %v344 = vpop.permute.xlu0 %343
    %v346 = vsub.f32 %v260, %v329
    %v347 = vsub.f32 %v262, %v329
    %v348 = vsub.f32 %v264, %v334
    %v349 = vsub.f32 %v266, %v334
    %v350 = vsub.f32 %v270, %v339
    %v351 = vsub.f32 %v272, %v339
    %v352 = vsub.f32 %v274, %v344
    %v353 = vsub.f32 %v276, %v344
    %v354 = vmul.f32 %v346, 1.442695
    %v355 = vpow.pop %v354
    %v356 = vmul.f32 %v347, 1.442695
    %v357 = vpow.pop %v356
    %v358 = vmul.f32 %v348, 1.442695
    %v359 = vpow.pop %v358
    %v360 = vmul.f32 %v349, 1.442695
    %v361 = vpow.pop %v360
    %v362 = vmul.f32 %v350, 1.442695
    %v363 = vpow.pop %v362
    %v364 = vmul.f32 %v351, 1.442695
    %v365 = vpow.pop %v364
    %v366 = vmul.f32 %v352, 1.442695
    %v367 = vpow.pop %v366
    %v368 = vmul.f32 %v353, 1.442695
    %v369 = vpow.pop %v368
    %v370 = vadd.f32 %v355, %v357
    %371 = vadd.xlane.f32.xlu0 %v370
    %v372 = vpop.xlane.xlu0 %371
    %v373 = vadd.f32 %v359, %v361
    %374 = vadd.xlane.f32.xlu0 %v373
    %v375 = vpop.xlane.xlu0 %374
    %v376 = vadd.f32 %v363, %v365
    %377 = vadd.xlane.f32.xlu0 %v376
    %v378 = vpop.xlane.xlu0 %377
    %v379 = vadd.f32 %v367, %v369
    %380 = vadd.xlane.f32.xlu0 %v379
    %v381 = vpop.xlane.xlu0 %380
    %v382 = vadd.f32 %v322, %v372
    %v383 = vadd.f32 %v323, %v375
    %v384 = vadd.f32 %v324, %v378
    %v385 = vadd.f32 %v325, %v381
    %vm386 = vcmask 7168
    %387 = vst.msk [vmem:[#allocation3] sm:$0xff] %vm386, %v382
    %388 = vst.msk [vmem:[#allocation3 + $0x8] sm:$0xff] %vm386, %v383
    %389 = vst.msk [vmem:[#allocation3 + $0x10] sm:$0xff] %vm386, %v384
    %390 = vst.msk [vmem:[#allocation3 + $0x18] sm:$0xff] %vm386, %v385
    %391 = vst.msk [vmem:[#allocation2] sm:$0xff] %vm386, %v302
    %392 = vst.msk [vmem:[#allocation2 + $0x8] sm:$0xff] %vm386, %v303
    %393 = vst.msk [vmem:[#allocation2 + $0x10] sm:$0xff] %vm386, %v304
    %394 = vst.msk [vmem:[#allocation2 + $0x18] sm:$0xff] %vm386, %v305
    %v395 = vlaneseq
    %v396 = vand.u32 %v395, 127
    %v397 = vadd.s32 %v396, 128
    %s398 = smul.u32 0, 256
    %v399 = vstv %s398
    %v400 = vadd.s32 %v396, %v399
    %v401 = vadd.s32 %v397, %v399
    %v402 = vld [vmem:[#allocation4] sm:$0xff]
    %v403 = vld [vmem:[#allocation4 + $0x8] sm:$0xff]
    %v404 = vld [vmem:[#allocation4 + $0x10] sm:$0xff]
    %v405 = vld [vmem:[#allocation4 + $0x18] sm:$0xff]
    %v406 = vld [vmem:[%s5] sm:$0xff]
    %v407 = vld [vmem:[%s5 + $0x8] sm:$0xff]
    %v408 = vld [vmem:[%s5 + $0x10] sm:$0xff]
    %v409 = vld [vmem:[%s5 + $0x18] sm:$0xff]
    %410 = vset.pattern.permute.xlu0 0
    %411 = vperm.xlu0 %410, %v406
    %v412 = vpop.permute.xlu0 %411
    %413 = vset.pattern.permute.xlu0 0
    %414 = vperm.xlu0 %413, %v407
    %v415 = vpop.permute.xlu0 %414
    %416 = vset.pattern.permute.xlu0 0
    %417 = vperm.xlu0 %416, %v408
    %v418 = vpop.permute.xlu0 %417
    %419 = vset.pattern.permute.xlu0 0
    %420 = vperm.xlu0 %419, %v409
    %v421 = vpop.permute.xlu0 %420
    %vm422 = vcmp.eq.s32.totalorder %v400, %v412
    %vm423 = vcmp.eq.s32.totalorder %v401, %v412
    %vm424 = vcmp.eq.s32.totalorder %v400, %v415
    %vm425 = vcmp.eq.s32.totalorder %v401, %v415
    %vm426 = vcmp.eq.s32.totalorder %v400, %v418
    %vm427 = vcmp.eq.s32.totalorder %v401, %v418
    %vm428 = vcmp.eq.s32.totalorder %v400, %v421
    %vm429 = vcmp.eq.s32.totalorder %v401, %v421
    %v430 = vsel %vm422, %v260, 0.0
    %v431 = vsel %vm423, %v262, 0.0
    %v432 = vsel %vm424, %v264, 0.0
    %v433 = vsel %vm425, %v266, 0.0
    %v434 = vsel %vm426, %v270, 0.0
    %v435 = vsel %vm427, %v272, 0.0
    %v436 = vsel %vm428, %v274, 0.0
    %v437 = vsel %vm429, %v276, 0.0
    %v438 = vadd.f32 %v430, %v431
    %439 = vadd.xlane.f32.xlu0 %v438
    %v440 = vpop.xlane.xlu0 %439
    %v441 = vadd.f32 %v432, %v433
    %442 = vadd.xlane.f32.xlu0 %v441
    %v443 = vpop.xlane.xlu0 %442
    %v444 = vadd.f32 %v434, %v435
    %445 = vadd.xlane.f32.xlu0 %v444
    %v446 = vpop.xlane.xlu0 %445
    %v447 = vadd.f32 %v436, %v437
    %448 = vadd.xlane.f32.xlu0 %v447
    %v449 = vpop.xlane.xlu0 %448
    %v450 = vadd.f32 %v402, %v440
    %v451 = vadd.f32 %v403, %v443
    %v452 = vadd.f32 %v404, %v446
    %v453 = vadd.f32 %v405, %v449
    %454 = vst.msk [vmem:[#allocation4] sm:$0xff] %vm386, %v450
    %455 = vst.msk [vmem:[#allocation4 + $0x8] sm:$0xff] %vm386, %v451
    %456 = vst.msk [vmem:[#allocation4 + $0x10] sm:$0xff] %vm386, %v452
    %457 = vst.msk [vmem:[#allocation4 + $0x18] sm:$0xff] %vm386, %v453
    // Predicated region
    $region30: #{sft_forward.21} parent=1 // pred_check
      %p458 = pneg %p27
    $region31: #{sft_forward.21} parent=1 // pred_check_branch
      %460 = sbr.rel (%p458) target = $region33
    $region32: #{sft_forward.21} parent=1 // pred_region
      %v461 = vld [vmem:[#allocation2] sm:$0xff]
      %v462 = vld [vmem:[#allocation2 + $0x8] sm:$0xff]
      %v463 = vld [vmem:[#allocation2 + $0x10] sm:$0xff]
      %v464 = vld [vmem:[#allocation2 + $0x18] sm:$0xff]
      %v465 = vld [vmem:[#allocation3] sm:$0xff]
      %v466 = vld [vmem:[#allocation3 + $0x8] sm:$0xff]
      %v467 = vld [vmem:[#allocation3 + $0x10] sm:$0xff]
      %v468 = vld [vmem:[#allocation3 + $0x18] sm:$0xff]
      %v469 = vlog2.pop %v465
      %v470 = vmul.f32 %v469, 0.6931472
      %v471 = vlog2.pop %v466
      %v472 = vmul.f32 %v471, 0.6931472
      %v473 = vlog2.pop %v467
      %v474 = vmul.f32 %v473, 0.6931472
      %v475 = vlog2.pop %v468
      %v476 = vmul.f32 %v475, 0.6931472
      %v477 = vadd.f32 %v461, %v470
      %v478 = vadd.f32 %v462, %v472
      %v479 = vadd.f32 %v463, %v474
      %v480 = vadd.f32 %v464, %v476
      %v481 = vld [vmem:[#allocation4] sm:$0xff]
      %v482 = vld [vmem:[#allocation4 + $0x8] sm:$0xff]
      %v483 = vld [vmem:[#allocation4 + $0x10] sm:$0xff]
      %v484 = vld [vmem:[#allocation4 + $0x18] sm:$0xff]
      %v485 = vsub.f32 %v477, %v481
      %v486 = vsub.f32 %v478, %v482
      %v487 = vsub.f32 %v479, %v483
      %v488 = vsub.f32 %v480, %v484
      %489 = vst.msk [vmem:[%s7] sm:$0xff] %vm386, %v485
      %490 = vst.msk [vmem:[%s7 + $0x8] sm:$0xff] %vm386, %v486
      %491 = vst.msk [vmem:[%s7 + $0x10] sm:$0xff] %vm386, %v487
      %492 = vst.msk [vmem:[%s7 + $0x18] sm:$0xff] %vm386, %v488
    $region33: #{sft_forward.21} parent=1 // pred_fallthru
      _
    // Predicated region
    $region34: #{sft_forward.21} parent=1 // pred_check
      _
    $region35: #{sft_forward.21} parent=1 // pred_check_branch
      %494 = sbr.rel (0) target = $region37
    $region36: #{sft_forward.21} parent=1 // pred_region
      %s496 = ssub.s32 1024, 1024
      %497 = vsyncadd [#allocation6], %s496
      %s498 = sshll.u32 [#allocation5], 4
      %s499 = int_to_ptr.vmem [resolvable:$true] %s498
      %504 = dma.vmem_to_hbm [thread:$0]  %s499, 1024, %s6, [#allocation6], 256, 256, 16
    $region37: #{sft_forward.21} parent=1 // pred_fallthru
      _
    // Predicated region
    $region38: #{sft_forward.21} parent=1 // pred_check
      _
    $region39: #{sft_forward.21} parent=1 // pred_check_branch
      %506 = sbr.rel (0) target = $region41
    $region40: #{sft_forward.21} parent=1 // pred_region
      _
    $region41: #{sft_forward.21} parent=1 // pred_fallthru
      _
    // Predicated region
    $region42: #{sft_forward.21} parent=1 // pred_check
      _
    $region43: #{sft_forward.21} parent=1 // pred_check_branch
      %508 = sbr.rel (0) target = $region45
    $region44: #{sft_forward.21} parent=1 // pred_region
      %509 = dma.done [#allocation6], 1024
    $region45: #{sft_forward.21} parent=1 // pred_fallthru
      _
    // Predicated region
    $region46: #{sft_forward.21} parent=1 // pred_check
      _
    $region47: #{sft_forward.21} parent=1 // pred_check_branch
      %511 = sbr.rel (0) target = $region49
    $region48: #{sft_forward.21} parent=1 // pred_region
      _
    $region49: #{sft_forward.21} parent=1 // pred_fallthru
      _
    %512 = vsyncpa [#allocation6], 1

</llo_original>
